<compile_context>
chip_gen: v6e
topology: v6e:2x2x1
jax: 0.10.0
libtpu: 0.0.40
codegen_flags: <defaults>
</compile_context>

<pallas_src>
from functools import partial

import numpy as np

import jax
import jax.numpy as jnp
from jax.experimental import pallas as pl
from jax.experimental.pallas import tpu as pltpu


def _round_up(x, m):
    return (x + m - 1) // m * m


def _build_slab_layout(nb_tasks, md_k, cpt):
    """Packed lane layout for all narrow outputs -> one lane-dense [B, slab_w] store."""
    k_total = nb_tasks * md_k
    c = nb_tasks * cpt
    order = [('gate_logit', k_total), ('gate_task_logit', nb_tasks),
             ('gate_cls_logit', c), ('logit_map', c), ('logit', c),
             ('final_logit', c), ('final_logit_gcl', c), ('final_logit_mix', c)]
    layout, off = {}, 0
    for name, width in order:
        layout[name] = (off, width)
        off += width
    slab_w = _round_up(max(off, 1), 128)
    return layout, slab_w


# ----------------------------------------------------------------------------
# Single fused kernel: gate backbone stand-in + expert stand-in + merged head.
# ----------------------------------------------------------------------------
def _fused_forward_kernel(
        patches_ref, w_conv_ref, w_gfc_ref, xf_ref, w_der1_ref,
        head_rhs_ref, bmap_ref, alpha_ref,
        slab_ref, gof_ref, feat_ref,
        *, B, HW, kc, nb_tasks, md_k, cpt, temperature, slab_w):
    f32 = jnp.float32
    bf16 = jnp.bfloat16
    K_total = nb_tasks * md_k
    C = nb_tasks * cpt
    BHW = B * HW
    kpad = w_conv_ref.shape[0]

    # ---- gate backbone stand-in: 3x3 conv as ONE matmul (conv weight latched once),
    #      ReLU, global-average-pool as B static row-slice sublane sums (values only).
    patches = patches_ref[...]                                   # [BHW, 9*Cin] bf16
    patches_p = jnp.concatenate(
        [patches, jnp.zeros((BHW, kpad - kc), bf16)], axis=1)    # lane-pad to 128 (VMEM only)
    conv = jnp.maximum(
        jnp.dot(patches_p, w_conv_ref[...], preferred_element_type=f32), 0.0)
    inv_hw = 1.0 / HW
    pooled = jnp.concatenate(
        [jnp.sum(conv[b * HW:(b + 1) * HW, :], axis=0, keepdims=True)
         for b in range(B)], axis=0) * inv_hw                    # [B, cmid_pad] f32

    gof = jnp.maximum(
        jnp.dot(pooled.astype(bf16), w_gfc_ref[...], preferred_element_type=f32),
        0.0)                                                     # gate_feature [B, D]
    gof_ref[...] = gof

    # ---- expert ensemble (self.der) stand-in, hidden layer
    feat = jnp.maximum(
        jnp.dot(xf_ref[...], w_der1_ref[...], preferred_element_type=f32), 0.0)
    feat_ref[...] = feat                                         # do['feature'] [B, F]

    # ---- ONE merged head dot:
    #      [gof ; feat] @ [cent^T | cls^T | (cent^T wmap^T) | w_der2]   (bf16, f32 acc)
    lhs = jnp.concatenate([gof, feat], axis=0).astype(bf16)      # [2B, D]
    res = jnp.dot(lhs, head_rhs_ref[...], preferred_element_type=f32)  # [2B, K+3C]
    gate_logit = res[:B, :K_total]                               # gof @ centroids^T
    gate_cls = res[:B, K_total:K_total + C]                      # cls_head(gof)
    logit_map = res[:B, K_total + C:K_total + 2 * C] + bmap_ref[...]
    elog = res[B:, K_total + 2 * C:K_total + 3 * C]              # do['logit']

    # Per-task maxes via static lane-slice maxes; also pre-expanded to class width so
    # repeat_interleave becomes a pure lane broadcast (no expansion matmul).
    gol_parts, gol_c_parts, gocl_c_parts = [], [], []
    for t in range(nb_tasks):
        sm = jnp.max(gate_logit[:, t * md_k:(t + 1) * md_k], axis=1, keepdims=True)
        cm = jnp.max(gate_cls[:, t * cpt:(t + 1) * cpt], axis=1, keepdims=True)
        gol_parts.append(sm)
        gol_c_parts.append(jnp.broadcast_to(sm, (B, cpt)))
        gocl_c_parts.append(jnp.broadcast_to(cm, (B, cpt)))
    gol = jnp.concatenate(gol_parts, axis=1)                     # [B, T] gate_task_logit
    gol_c = jnp.concatenate(gol_c_parts, axis=1)                 # [B, C]
    gocl_c = jnp.concatenate(gocl_c_parts, axis=1)               # [B, C]

    inv_temp = 1.0 / temperature

    def task_softmax_expanded(z):
        # z holds each task value repeated cpt times along lanes, so the softmax over the
        # expanded width equals softmax-over-tasks / cpt; rescale by cpt.
        z = z * inv_temp
        m = jnp.max(z, axis=1, keepdims=True)
        e = jnp.exp(z - m)
        s = jnp.sum(e, axis=1, keepdims=True)
        return e * pl.reciprocal(s, approx=True) * float(cpt)

    mask_mcm = task_softmax_expanded(gol_c)
    mask_gcl = task_softmax_expanded(gocl_c)
    l_mcm = elog * mask_mcm
    l_gcl = elog * mask_gcl
    a = alpha_ref[0]                                             # learnable alpha (SMEM)
    l_mix = a * l_mcm + (1.0 - a) * l_gcl

    # ---- single dense, unmasked [B, slab_w] store of all narrow results
    pieces = [gate_logit, gol, gate_cls, logit_map, elog, l_mcm, l_gcl, l_mix]
    used = K_total + nb_tasks + 6 * C
    if slab_w > used:
        pieces.append(jnp.zeros((B, slab_w - used), f32))
    slab_ref[...] = jnp.concatenate(pieces, axis=1)


# ----------------------------------------------------------------------------
# Wrapper: XLA glue (layout + im2col + bf16 cast) and a single un-gridded pallas_call.
# ----------------------------------------------------------------------------
def model_forward(x_nchw, prep, *, nb_tasks, md_k, cpt, temperature):
    B, Cin, H, W = x_nchw.shape
    HW = H * W
    kc = 9 * Cin
    kpad, cmid_pad = prep['w_conv_p'].shape
    D = prep['w_gfc_p'].shape[1]
    F = prep['w_der1'].shape[1]
    K_total = nb_tasks * md_k
    C = nb_tasks * cpt
    head_cols = prep['head_rhs'].shape[1]
    layout, slab_w = _build_slab_layout(nb_tasks, md_k, cpt)

    # im2col glue (UN-padded: 9*Cin lanes; padded to 128 inside the kernel).
    x_nhwc = jnp.transpose(x_nchw, (0, 2, 3, 1))
    xp = jnp.pad(x_nhwc, ((0, 0), (1, 1), (1, 1), (0, 0)))
    views = [xp[:, dy:dy + H, dx:dx + W, :] for dy in range(3) for dx in range(3)]
    patches = jnp.concatenate(views, axis=-1).reshape(B * HW, kc).astype(jnp.bfloat16)
    xf = x_nchw.reshape(B, Cin * H * W).astype(jnp.bfloat16)

    kernel = partial(_fused_forward_kernel, B=B, HW=HW, kc=kc, nb_tasks=nb_tasks,
                     md_k=md_k, cpt=cpt, temperature=float(temperature), slab_w=slab_w)

    out_shapes = (
        jax.ShapeDtypeStruct((B, slab_w), jnp.float32),   # packed narrow outputs
        jax.ShapeDtypeStruct((B, D), jnp.float32),        # gate_feature
        jax.ShapeDtypeStruct((B, F), jnp.float32),        # feature
    )

    def vmem():
        return pl.BlockSpec(memory_space=pltpu.MemorySpace.VMEM)

    flops = 2 * (B * HW * kpad * cmid_pad          # conv stand-in
                 + B * cmid_pad * D                # gate FC
                 + B * (Cin * H * W) * F           # expert layer 1
                 + (2 * B) * D * head_cols)        # merged head dot
    transcendentals = 2 * B * C + 2 * B
    bytes_accessed = (patches.size * 2 + prep['w_conv_p'].size * 2
                      + prep['w_gfc_p'].size * 2 + xf.size * 2
                      + prep['w_der1'].size * 2 + prep['head_rhs'].size * 2
                      + prep['b_map'].size * 4 + 4
                      + B * slab_w * 4 + B * D * 4 + B * F * 4)

    slab, gof, feat = pl.pallas_call(
        kernel,
        out_shape=out_shapes,
        # No grid: single invocation, whole arrays resident in VMEM (single-buffered;
        # no double-buffer duplication).  See v7x TODO in the header for the scaled-up
        # gridded variant.
        in_specs=[
            vmem(),                                             # im2col patches (bf16)
            vmem(),                                             # conv weight [128,128] bf16
            vmem(),                                             # gate FC weight bf16
            vmem(),                                             # flattened x (bf16)
            vmem(),                                             # expert layer 1 (bf16)
            vmem(),                                             # merged head RHS (bf16)
            vmem(),                                             # logit_map bias (f32)
            pl.BlockSpec(memory_space=pltpu.MemorySpace.SMEM),  # alpha scalar
        ],
        out_specs=(vmem(), vmem(), vmem()),
        compiler_params=pltpu.CompilerParams(vmem_limit_bytes=32 * 1024 * 1024),
        cost_estimate=pl.CostEstimate(flops=int(flops),
                                      transcendentals=int(transcendentals),
                                      bytes_accessed=int(bytes_accessed)),
    )(patches, prep['w_conv_p'], prep['w_gfc_p'], xf, prep['w_der1'],
      prep['head_rhs'], prep['b_map'], prep['alpha'])

    out = {'gate_feature': gof, 'feature': feat}
    for name, (off, wd) in layout.items():
        out[name] = slab[:, off:off + wd]
    return out


# ----------------------------------------------------------------------------
# One-time parameter preparation (padding / transposes / folding / bf16 casts).
# ----------------------------------------------------------------------------
def prepare_params(params, *, Cin, Cmid, kpad=128, cmid_pad=128):
    f32 = jnp.float32
    kc = 9 * Cin
    D = params['w_gate_fc'].shape[1]
    w_conv_p = jnp.zeros((kpad, cmid_pad), f32).at[:kc, :Cmid].set(params['w_conv'])
    w_gfc_p = jnp.zeros((cmid_pad, D), f32).at[:Cmid, :].set(params['w_gate_fc'])

    # Merged head RHS: [centroids^T | cls_head^T | (centroids^T @ w_map^T) | w_der2].
    # The logit_map fold is computed in f32 and only then cast to bf16.
    cent_t = params['centroids'].T.astype(f32)             # [D, K_total]
    wcls_t = params['w_cls'].T.astype(f32)                  # [D, C]
    cent_wmap = cent_t @ params['w_map'].T.astype(f32)      # [D, C]
    w_der2 = params['w_der2'].astype(f32)                   # [F, C]
    assert w_der2.shape[0] == cent_t.shape[0], \
        "expert feature dim must equal gate feature dim for the merged head dot"
    head_rhs = jnp.concatenate([cent_t, wcls_t, cent_wmap, w_der2], axis=1)

    return {
        'w_conv_p': w_conv_p.astype(jnp.bfloat16),
        'w_gfc_p': w_gfc_p.astype(jnp.bfloat16),
        'w_der1': params['w_der1'].astype(jnp.bfloat16),
        'head_rhs': head_rhs.astype(jnp.bfloat16),
        'b_map': params['b_map'].reshape(1, -1).astype(f32),
        'alpha': params['alpha'].astype(f32),
    }


# ----------------------------------------------------------------------------
# Pure-JAX f32 reference of the whole forward (for correctness checking).
# ----------------------------------------------------------------------------
def forward_reference(x_nchw, params, *, nb_tasks, md_k, cpt, temperature):
    B, Cin, H, W = x_nchw.shape
    x_nhwc = jnp.transpose(x_nchw, (0, 2, 3, 1))
    xp = jnp.pad(x_nhwc, ((0, 0), (1, 1), (1, 1), (0, 0)))
    patches = jnp.concatenate(
        [xp[:, dy:dy + H, dx:dx + W, :] for dy in range(3) for dx in range(3)],
        axis=-1).reshape(B * H * W, 9 * Cin)
    Cmid = params['w_conv'].shape[1]
    conv = jax.nn.relu(patches @ params['w_conv'])
    pooled = conv.reshape(B, H * W, Cmid).mean(axis=1)
    gof = jax.nn.relu(pooled @ params['w_gate_fc'])
    feat = jax.nn.relu(x_nchw.reshape(B, -1) @ params['w_der1'])
    elog = feat @ params['w_der2']
    gate_logit = gof @ params['centroids'].T
    gate_cls = gof @ params['w_cls'].T
    logit_map = gate_logit @ params['w_map'].T + params['b_map']
    gol = jnp.max(gate_logit.reshape(B, nb_tasks, md_k), axis=2)
    gocl = jnp.max(gate_cls.reshape(B, nb_tasks, cpt), axis=2)
    p_mcm = jax.nn.softmax(gol / temperature, axis=1)
    p_gcl = jax.nn.softmax(gocl / temperature, axis=1)
    mask_mcm = jnp.repeat(p_mcm, cpt, axis=1)
    mask_gcl = jnp.repeat(p_gcl, cpt, axis=1)
    l_mcm = elog * mask_mcm
    l_gcl = elog * mask_gcl
    a = params['alpha'][0]
    return {
        'logit': elog, 'feature': feat, 'gate_feature': gof,
        'gate_logit': gate_logit, 'gate_task_logit': gol,
        'gate_cls_logit': gate_cls, 'logit_map': logit_map,
        'final_logit': l_mcm, 'final_logit_gcl': l_gcl,
        'final_logit_mix': a * l_mcm + (1.0 - a) * l_gcl,
    }


if __name__ == "__main__":
    # Small synthetic configuration
    B, Cin, H, W = 8, 4, 16, 16
    Cmid, D = 8, 128            # gate conv channels, gate feature dim (out_dim)
    nb_tasks, md_k, cpt = 4, 2, 4
    C = nb_tasks * cpt          # nb_seen_unique_classes
    K_total = nb_tasks * md_k   # mcm.out_dim
    F = 128                     # expert feature dim (== D, enables merged head dot)
    temperature = 5.0           # cfg.task_temperature

    key = jax.random.PRNGKey(0)
    ks = jax.random.split(key, 10)

    def init(k, shape, fan_in):
        return (jax.random.normal(k, shape, jnp.float32) /
                jnp.sqrt(jnp.float32(fan_in)))

    params = {
        'w_conv':    init(ks[0], (9 * Cin, Cmid), 9 * Cin),
        'w_gate_fc': init(ks[1], (Cmid, D), Cmid),
        'w_der1':    init(ks[2], (Cin * H * W, F), Cin * H * W),
        'w_der2':    init(ks[3], (F, C), F),
        'centroids': init(ks[4], (K_total, D), D),          # DifferMCM centroids
        'w_cls':     init(ks[5], (C, D), D),                # cls_head.weight
        'w_map':     init(ks[6], (C, K_total), K_total),    # logit_map.weight
        'b_map':     init(ks[7], (C,), 1.0) * 0.1,          # logit_map.bias
        'alpha':     jnp.array([0.5], jnp.float32),         # self.alpha
    }

    x = jax.random.normal(ks[8], (B, Cin, H, W), jnp.float32)

    prep = prepare_params(params, Cin=Cin, Cmid=Cmid)

    fwd = jax.jit(partial(model_forward, nb_tasks=nb_tasks, md_k=md_k,
                          cpt=cpt, temperature=temperature))
    out = fwd(x, prep)
    jax.block_until_ready(out)

    # Verify the fused Pallas forward against the pure-f32 JAX reference.
    # (bf16 MXU operands + folded logit_map weight + approx reciprocal => loose tol.)
    ref = forward_reference(x, params, nb_tasks=nb_tasks, md_k=md_k,
                            cpt=cpt, temperature=temperature)
    for name in ('logit', 'feature', 'gate_feature', 'gate_logit',
                 'gate_task_logit', 'gate_cls_logit', 'logit_map',
                 'final_logit', 'final_logit_gcl', 'final_logit_mix'):
        np.testing.assert_allclose(np.asarray(out[name]), np.asarray(ref[name]),
                                   rtol=2e-2, atol=2e-2)

    print("KERNEL_OK")
</pallas_src>

<mosaic_0001>
module attributes {stable_mosaic.version = 11 : i64} {
  func.func @_fused_forward_kernel(%arg0: memref<2048x36xbf16, #tpu.memory_space<vmem>>, %arg1: memref<128x128xbf16, #tpu.memory_space<vmem>>, %arg2: memref<128x128xbf16, #tpu.memory_space<vmem>>, %arg3: memref<8x1024xbf16, #tpu.memory_space<vmem>>, %arg4: memref<1024x128xbf16, #tpu.memory_space<vmem>>, %arg5: memref<128x56xbf16, #tpu.memory_space<vmem>>, %arg6: memref<1x16xf32, #tpu.memory_space<vmem>>, %arg7: memref<1xf32, #tpu.memory_space<smem>>, %arg8: memref<8x128xf32, #tpu.memory_space<vmem>>, %arg9: memref<8x128xf32, #tpu.memory_space<vmem>>, %arg10: memref<8x128xf32, #tpu.memory_space<vmem>>) attributes {dimension_semantics = [], scalar_prefetch = 0 : i64, scratch_operands = 0 : i64, tpu.core_type = #tpu.core_type<tc>} {
    %c0 = arith.constant 0 : index
    %c0_0 = arith.constant 0 : index
    %0 = vector.load %arg0[%c0, %c0_0] : memref<2048x36xbf16, #tpu.memory_space<vmem>>, vector<2048x36xbf16>
    %cst = arith.constant 0.000000e+00 : bf16
    %1 = vector.broadcast %cst : bf16 to vector<2048x92xbf16>
    %2 = tpu.concatenate %0, %1 in 1 : vector<2048x36xbf16>, vector<2048x92xbf16> -> vector<2048x128xbf16>
    %c0_1 = arith.constant 0 : index
    %c0_2 = arith.constant 0 : index
    %3 = vector.load %arg1[%c0_1, %c0_2] : memref<128x128xbf16, #tpu.memory_space<vmem>>, vector<128x128xbf16>
    %cst_3 = arith.constant dense<0.000000e+00> : vector<2048x128xf32>
    %4 = tpu.matmul %2, %3, %cst_3 {dimension_numbers = #tpu.dot_dimension_numbers<[1], [0], [0], [1], [0, 0, 1, 1], [], []>} : vector<2048x128xbf16>, vector<128x128xbf16>, vector<2048x128xf32> -> vector<2048x128xf32>
    %cst_4 = arith.constant 0.000000e+00 : f32
    %5 = vector.broadcast %cst_4 : f32 to vector<2048x128xf32>
    %6 = arith.maximumf %4, %5 : vector<2048x128xf32>
    %7 = vector.extract_strided_slice %6 {offsets = [0, 0], sizes = [256, 128], strides = [1, 1]} : vector<2048x128xf32> to vector<256x128xf32>
    %cst_5 = arith.constant dense<0.000000e+00> : vector<128xf32>
    %8 = vector.multi_reduction <add>, %7, %cst_5 [0] : vector<256x128xf32> to vector<128xf32>
    %9 = vector.shape_cast %8 : vector<128xf32> to vector<1x128xf32>
    %10 = vector.extract_strided_slice %6 {offsets = [256, 0], sizes = [256, 128], strides = [1, 1]} : vector<2048x128xf32> to vector<256x128xf32>
    %cst_6 = arith.constant dense<0.000000e+00> : vector<128xf32>
    %11 = vector.multi_reduction <add>, %10, %cst_6 [0] : vector<256x128xf32> to vector<128xf32>
    %12 = vector.shape_cast %11 : vector<128xf32> to vector<1x128xf32>
    %13 = vector.extract_strided_slice %6 {offsets = [512, 0], sizes = [256, 128], strides = [1, 1]} : vector<2048x128xf32> to vector<256x128xf32>
    %cst_7 = arith.constant dense<0.000000e+00> : vector<128xf32>
    %14 = vector.multi_reduction <add>, %13, %cst_7 [0] : vector<256x128xf32> to vector<128xf32>
    %15 = vector.shape_cast %14 : vector<128xf32> to vector<1x128xf32>
    %16 = vector.extract_strided_slice %6 {offsets = [768, 0], sizes = [256, 128], strides = [1, 1]} : vector<2048x128xf32> to vector<256x128xf32>
    %cst_8 = arith.constant dense<0.000000e+00> : vector<128xf32>
    %17 = vector.multi_reduction <add>, %16, %cst_8 [0] : vector<256x128xf32> to vector<128xf32>
    %18 = vector.shape_cast %17 : vector<128xf32> to vector<1x128xf32>
    %19 = vector.extract_strided_slice %6 {offsets = [1024, 0], sizes = [256, 128], strides = [1, 1]} : vector<2048x128xf32> to vector<256x128xf32>
    %cst_9 = arith.constant dense<0.000000e+00> : vector<128xf32>
    %20 = vector.multi_reduction <add>, %19, %cst_9 [0] : vector<256x128xf32> to vector<128xf32>
    %21 = vector.shape_cast %20 : vector<128xf32> to vector<1x128xf32>
    %22 = vector.extract_strided_slice %6 {offsets = [1280, 0], sizes = [256, 128], strides = [1, 1]} : vector<2048x128xf32> to vector<256x128xf32>
    %cst_10 = arith.constant dense<0.000000e+00> : vector<128xf32>
    %23 = vector.multi_reduction <add>, %22, %cst_10 [0] : vector<256x128xf32> to vector<128xf32>
    %24 = vector.shape_cast %23 : vector<128xf32> to vector<1x128xf32>
    %25 = vector.extract_strided_slice %6 {offsets = [1536, 0], sizes = [256, 128], strides = [1, 1]} : vector<2048x128xf32> to vector<256x128xf32>
    %cst_11 = arith.constant dense<0.000000e+00> : vector<128xf32>
    %26 = vector.multi_reduction <add>, %25, %cst_11 [0] : vector<256x128xf32> to vector<128xf32>
    %27 = vector.shape_cast %26 : vector<128xf32> to vector<1x128xf32>
    %28 = vector.extract_strided_slice %6 {offsets = [1792, 0], sizes = [256, 128], strides = [1, 1]} : vector<2048x128xf32> to vector<256x128xf32>
    %cst_12 = arith.constant dense<0.000000e+00> : vector<128xf32>
    %29 = vector.multi_reduction <add>, %28, %cst_12 [0] : vector<256x128xf32> to vector<128xf32>
    %30 = vector.shape_cast %29 : vector<128xf32> to vector<1x128xf32>
    %31 = tpu.concatenate %9, %12, %15, %18, %21, %24, %27, %30 in 0 : vector<1x128xf32>, vector<1x128xf32>, vector<1x128xf32>, vector<1x128xf32>, vector<1x128xf32>, vector<1x128xf32>, vector<1x128xf32>, vector<1x128xf32> -> vector<8x128xf32>
    %cst_13 = arith.constant 3.906250e-03 : f32
    %32 = vector.broadcast %cst_13 : f32 to vector<8x128xf32>
    %33 = arith.mulf %31, %32 : vector<8x128xf32>
    %34 = arith.truncf %33 : vector<8x128xf32> to vector<8x128xbf16>
    %c0_14 = arith.constant 0 : index
    %c0_15 = arith.constant 0 : index
    %35 = vector.load %arg2[%c0_14, %c0_15] : memref<128x128xbf16, #tpu.memory_space<vmem>>, vector<128x128xbf16>
    %cst_16 = arith.constant dense<0.000000e+00> : vector<8x128xf32>
    %36 = tpu.matmul %34, %35, %cst_16 {dimension_numbers = #tpu.dot_dimension_numbers<[1], [0], [0], [1], [0, 0, 1, 1], [], []>} : vector<8x128xbf16>, vector<128x128xbf16>, vector<8x128xf32> -> vector<8x128xf32>
    %cst_17 = arith.constant 0.000000e+00 : f32
    %37 = vector.broadcast %cst_17 : f32 to vector<8x128xf32>
    %38 = arith.maximumf %36, %37 : vector<8x128xf32>
    %c0_18 = arith.constant 0 : index
    %c0_19 = arith.constant 0 : index
    %39 = vector.load %arg9[%c0_18, %c0_19] : memref<8x128xf32, #tpu.memory_space<vmem>>, vector<8x128xf32>
    tpu.vector_store %arg9[%c0_18, %c0_19], %38 {strides = array<i32>} : memref<8x128xf32, #tpu.memory_space<vmem>>, vector<8x128xf32>,
    %c0_20 = arith.constant 0 : index
    %c0_21 = arith.constant 0 : index
    %40 = vector.load %arg3[%c0_20, %c0_21] : memref<8x1024xbf16, #tpu.memory_space<vmem>>, vector<8x1024xbf16>
    %c0_22 = arith.constant 0 : index
    %c0_23 = arith.constant 0 : index
    %41 = vector.load %arg4[%c0_22, %c0_23] : memref<1024x128xbf16, #tpu.memory_space<vmem>>, vector<1024x128xbf16>
    %cst_24 = arith.constant dense<0.000000e+00> : vector<8x128xf32>
    %42 = tpu.matmul %40, %41, %cst_24 {dimension_numbers = #tpu.dot_dimension_numbers<[1], [0], [0], [1], [0, 0, 1, 1], [], []>} : vector<8x1024xbf16>, vector<1024x128xbf16>, vector<8x128xf32> -> vector<8x128xf32>
    %cst_25 = arith.constant 0.000000e+00 : f32
    %43 = vector.broadcast %cst_25 : f32 to vector<8x128xf32>
    %44 = arith.maximumf %42, %43 : vector<8x128xf32>
    %c0_26 = arith.constant 0 : index
    %c0_27 = arith.constant 0 : index
    %45 = vector.load %arg10[%c0_26, %c0_27] : memref<8x128xf32, #tpu.memory_space<vmem>>, vector<8x128xf32>
    tpu.vector_store %arg10[%c0_26, %c0_27], %44 {strides = array<i32>} : memref<8x128xf32, #tpu.memory_space<vmem>>, vector<8x128xf32>,
    %46 = tpu.concatenate %38, %44 in 0 : vector<8x128xf32>, vector<8x128xf32> -> vector<16x128xf32>
    %47 = arith.truncf %46 : vector<16x128xf32> to vector<16x128xbf16>
    %c0_28 = arith.constant 0 : index
    %c0_29 = arith.constant 0 : index
    %48 = vector.load %arg5[%c0_28, %c0_29] : memref<128x56xbf16, #tpu.memory_space<vmem>>, vector<128x56xbf16>
    %cst_30 = arith.constant dense<0.000000e+00> : vector<16x56xf32>
    %49 = tpu.matmul %47, %48, %cst_30 {dimension_numbers = #tpu.dot_dimension_numbers<[1], [0], [0], [1], [0, 0, 1, 1], [], []>} : vector<16x128xbf16>, vector<128x56xbf16>, vector<16x56xf32> -> vector<16x56xf32>
    %50 = vector.extract_strided_slice %49 {offsets = [0, 0], sizes = [8, 8], strides = [1, 1]} : vector<16x56xf32> to vector<8x8xf32>
    %51 = vector.extract_strided_slice %49 {offsets = [0, 8], sizes = [8, 16], strides = [1, 1]} : vector<16x56xf32> to vector<8x16xf32>
    %52 = vector.extract_strided_slice %49 {offsets = [0, 24], sizes = [8, 16], strides = [1, 1]} : vector<16x56xf32> to vector<8x16xf32>
    %c0_31 = arith.constant 0 : index
    %c0_32 = arith.constant 0 : index
    %53 = vector.load %arg6[%c0_31, %c0_32] : memref<1x16xf32, #tpu.memory_space<vmem>>, vector<1x16xf32>
    %54 = vector.broadcast %53 : vector<1x16xf32> to vector<8x16xf32>
    %55 = arith.addf %52, %54 : vector<8x16xf32>
    %56 = vector.extract_strided_slice %49 {offsets = [8, 40], sizes = [8, 16], strides = [1, 1]} : vector<16x56xf32> to vector<8x16xf32>
    %57 = vector.extract_strided_slice %50 {offsets = [0, 0], sizes = [8, 2], strides = [1, 1]} : vector<8x8xf32> to vector<8x2xf32>
    %cst_33 = arith.constant dense<0xFF800000> : vector<8xf32>
    %58 = vector.multi_reduction <maximumf>, %57, %cst_33 [1] : vector<8x2xf32> to vector<8xf32>
    %59 = vector.shape_cast %58 : vector<8xf32> to vector<8x1xf32>
    %60 = vector.extract_strided_slice %51 {offsets = [0, 0], sizes = [8, 4], strides = [1, 1]} : vector<8x16xf32> to vector<8x4xf32>
    %cst_34 = arith.constant dense<0xFF800000> : vector<8xf32>
    %61 = vector.multi_reduction <maximumf>, %60, %cst_34 [1] : vector<8x4xf32> to vector<8xf32>
    %62 = vector.shape_cast %61 : vector<8xf32> to vector<8x1xf32>
    %63 = vector.shape_cast %59 : vector<8x1xf32> to vector<8x1xf32>
    %64 = vector.broadcast %63 : vector<8x1xf32> to vector<8x4xf32>
    %65 = vector.shape_cast %62 : vector<8x1xf32> to vector<8x1xf32>
    %66 = vector.broadcast %65 : vector<8x1xf32> to vector<8x4xf32>
    %67 = vector.extract_strided_slice %50 {offsets = [0, 2], sizes = [8, 2], strides = [1, 1]} : vector<8x8xf32> to vector<8x2xf32>
    %cst_35 = arith.constant dense<0xFF800000> : vector<8xf32>
    %68 = vector.multi_reduction <maximumf>, %67, %cst_35 [1] : vector<8x2xf32> to vector<8xf32>
    %69 = vector.shape_cast %68 : vector<8xf32> to vector<8x1xf32>
    %70 = vector.extract_strided_slice %51 {offsets = [0, 4], sizes = [8, 4], strides = [1, 1]} : vector<8x16xf32> to vector<8x4xf32>
    %cst_36 = arith.constant dense<0xFF800000> : vector<8xf32>
    %71 = vector.multi_reduction <maximumf>, %70, %cst_36 [1] : vector<8x4xf32> to vector<8xf32>
    %72 = vector.shape_cast %71 : vector<8xf32> to vector<8x1xf32>
    %73 = vector.shape_cast %69 : vector<8x1xf32> to vector<8x1xf32>
    %74 = vector.broadcast %73 : vector<8x1xf32> to vector<8x4xf32>
    %75 = vector.shape_cast %72 : vector<8x1xf32> to vector<8x1xf32>
    %76 = vector.broadcast %75 : vector<8x1xf32> to vector<8x4xf32>
    %77 = vector.extract_strided_slice %50 {offsets = [0, 4], sizes = [8, 2], strides = [1, 1]} : vector<8x8xf32> to vector<8x2xf32>
    %cst_37 = arith.constant dense<0xFF800000> : vector<8xf32>
    %78 = vector.multi_reduction <maximumf>, %77, %cst_37 [1] : vector<8x2xf32> to vector<8xf32>
    %79 = vector.shape_cast %78 : vector<8xf32> to vector<8x1xf32>
    %80 = vector.extract_strided_slice %51 {offsets = [0, 8], sizes = [8, 4], strides = [1, 1]} : vector<8x16xf32> to vector<8x4xf32>
    %cst_38 = arith.constant dense<0xFF800000> : vector<8xf32>
    %81 = vector.multi_reduction <maximumf>, %80, %cst_38 [1] : vector<8x4xf32> to vector<8xf32>
    %82 = vector.shape_cast %81 : vector<8xf32> to vector<8x1xf32>
    %83 = vector.shape_cast %79 : vector<8x1xf32> to vector<8x1xf32>
    %84 = vector.broadcast %83 : vector<8x1xf32> to vector<8x4xf32>
    %85 = vector.shape_cast %82 : vector<8x1xf32> to vector<8x1xf32>
    %86 = vector.broadcast %85 : vector<8x1xf32> to vector<8x4xf32>
    %87 = vector.extract_strided_slice %50 {offsets = [0, 6], sizes = [8, 2], strides = [1, 1]} : vector<8x8xf32> to vector<8x2xf32>
    %cst_39 = arith.constant dense<0xFF800000> : vector<8xf32>
    %88 = vector.multi_reduction <maximumf>, %87, %cst_39 [1] : vector<8x2xf32> to vector<8xf32>
    %89 = vector.shape_cast %88 : vector<8xf32> to vector<8x1xf32>
    %90 = vector.extract_strided_slice %51 {offsets = [0, 12], sizes = [8, 4], strides = [1, 1]} : vector<8x16xf32> to vector<8x4xf32>
    %cst_40 = arith.constant dense<0xFF800000> : vector<8xf32>
    %91 = vector.multi_reduction <maximumf>, %90, %cst_40 [1] : vector<8x4xf32> to vector<8xf32>
    %92 = vector.shape_cast %91 : vector<8xf32> to vector<8x1xf32>
    %93 = vector.shape_cast %89 : vector<8x1xf32> to vector<8x1xf32>
    %94 = vector.broadcast %93 : vector<8x1xf32> to vector<8x4xf32>
    %95 = vector.shape_cast %92 : vector<8x1xf32> to vector<8x1xf32>
    %96 = vector.broadcast %95 : vector<8x1xf32> to vector<8x4xf32>
    %97 = tpu.concatenate %59, %69, %79, %89 in 1 : vector<8x1xf32>, vector<8x1xf32>, vector<8x1xf32>, vector<8x1xf32> -> vector<8x4xf32>
    %98 = tpu.concatenate %64, %74, %84, %94 in 1 : vector<8x4xf32>, vector<8x4xf32>, vector<8x4xf32>, vector<8x4xf32> -> vector<8x16xf32>
    %99 = tpu.concatenate %66, %76, %86, %96 in 1 : vector<8x4xf32>, vector<8x4xf32>, vector<8x4xf32>, vector<8x4xf32> -> vector<8x16xf32>
    %cst_41 = arith.constant 2.000000e-01 : f32
    %100 = vector.broadcast %cst_41 : f32 to vector<8x16xf32>
    %101 = arith.mulf %98, %100 : vector<8x16xf32>
    %cst_42 = arith.constant dense<0xFF800000> : vector<8xf32>
    %102 = vector.multi_reduction <maximumf>, %101, %cst_42 [1] : vector<8x16xf32> to vector<8xf32>
    %103 = vector.shape_cast %102 : vector<8xf32> to vector<8x1xf32>
    %104 = vector.broadcast %103 : vector<8x1xf32> to vector<8x16xf32>
    %105 = arith.subf %101, %104 : vector<8x16xf32>
    %106 = math.exp %105 : vector<8x16xf32>
    %cst_43 = arith.constant dense<0.000000e+00> : vector<8xf32>
    %107 = vector.multi_reduction <add>, %106, %cst_43 [1] : vector<8x16xf32> to vector<8xf32>
    %108 = vector.shape_cast %107 : vector<8xf32> to vector<8x1xf32>
    %109 = tpu.reciprocal %108 {approx = true} : vector<8x1xf32> -> vector<8x1xf32>
    %110 = vector.broadcast %109 : vector<8x1xf32> to vector<8x16xf32>
    %111 = arith.mulf %106, %110 : vector<8x16xf32>
    %cst_44 = arith.constant 4.000000e+00 : f32
    %112 = vector.broadcast %cst_44 : f32 to vector<8x16xf32>
    %113 = arith.mulf %111, %112 : vector<8x16xf32>
    %cst_45 = arith.constant 2.000000e-01 : f32
    %114 = vector.broadcast %cst_45 : f32 to vector<8x16xf32>
    %115 = arith.mulf %99, %114 : vector<8x16xf32>
    %cst_46 = arith.constant dense<0xFF800000> : vector<8xf32>
    %116 = vector.multi_reduction <maximumf>, %115, %cst_46 [1] : vector<8x16xf32> to vector<8xf32>
    %117 = vector.shape_cast %116 : vector<8xf32> to vector<8x1xf32>
    %118 = vector.broadcast %117 : vector<8x1xf32> to vector<8x16xf32>
    %119 = arith.subf %115, %118 : vector<8x16xf32>
    %120 = math.exp %119 : vector<8x16xf32>
    %cst_47 = arith.constant dense<0.000000e+00> : vector<8xf32>
    %121 = vector.multi_reduction <add>, %120, %cst_47 [1] : vector<8x16xf32> to vector<8xf32>
    %122 = vector.shape_cast %121 : vector<8xf32> to vector<8x1xf32>
    %123 = tpu.reciprocal %122 {approx = true} : vector<8x1xf32> -> vector<8x1xf32>
    %124 = vector.broadcast %123 : vector<8x1xf32> to vector<8x16xf32>
    %125 = arith.mulf %120, %124 : vector<8x16xf32>
    %cst_48 = arith.constant 4.000000e+00 : f32
    %126 = vector.broadcast %cst_48 : f32 to vector<8x16xf32>
    %127 = arith.mulf %125, %126 : vector<8x16xf32>
    %128 = arith.mulf %56, %113 : vector<8x16xf32>
    %129 = arith.mulf %56, %127 : vector<8x16xf32>
    %c0_49 = arith.constant 0 : index
    %130 = memref.load %arg7[%c0_49] : memref<1xf32, #tpu.memory_space<smem>>
    %131 = vector.broadcast %130 : f32 to vector<8x16xf32>
    %132 = arith.mulf %131, %128 : vector<8x16xf32>
    %cst_50 = arith.constant 1.000000e+00 : f32
    %133 = arith.subf %cst_50, %130 : f32
    %134 = vector.broadcast %133 : f32 to vector<8x16xf32>
    %135 = arith.mulf %134, %129 : vector<8x16xf32>
    %136 = arith.addf %132, %135 : vector<8x16xf32>
    %cst_51 = arith.constant 0.000000e+00 : f32
    %137 = vector.broadcast %cst_51 : f32 to vector<8x20xf32>
    %138 = tpu.concatenate %50, %97, %51, %55, %56, %128, %129, %136, %137 in 1 : vector<8x8xf32>, vector<8x4xf32>, vector<8x16xf32>, vector<8x16xf32>, vector<8x16xf32>, vector<8x16xf32>, vector<8x16xf32>, vector<8x16xf32>, vector<8x20xf32> -> vector<8x128xf32>
    %c0_52 = arith.constant 0 : index
    %c0_53 = arith.constant 0 : index
    %139 = vector.load %arg8[%c0_52, %c0_53] : memref<8x128xf32, #tpu.memory_space<vmem>>, vector<8x128xf32>
    tpu.vector_store %arg8[%c0_52, %c0_53], %138 {strides = array<i32>} : memref<8x128xf32, #tpu.memory_space<vmem>>, vector<8x128xf32>,
    return
  }
}

</mosaic_0001>

<llo_original>
// kernel: model_forward.1
$region0: #{model_forward.1}
  #allocation0 [shape = 'u32[]', space=smem, size = 0x4, offset = 0x4, fixed_abs, tag = 'smem constant byte address 0x4 - core index']
  #allocation1 [shape = 'u32[144,128]{1,0:T(1,128)}', space=vmem, size = 0x12000, scoped, tag = 'internal scratch']
  #allocation2 [shape = 'f32[1]{0:T(128)S(6)}', space=smem, size = 0x200, scoped, tag = 'scoped memory for model_forward.1']
  %s0 = inlined_call_operand.vmem [shape: bf16[2048,36], index: 0, kind: input, shape index: {}]
  %s1 = inlined_call_operand.vmem [shape: bf16[128,128], index: 1, kind: input, shape index: {}]
  %s2 = inlined_call_operand.vmem [shape: bf16[128,128], index: 2, kind: input, shape index: {}]
  %s3 = inlined_call_operand.vmem [shape: bf16[8,1024], index: 3, kind: input, shape index: {}]
  %s4 = inlined_call_operand.vmem [shape: bf16[1024,128], index: 4, kind: input, shape index: {}]
  %s5 = inlined_call_operand.vmem [shape: bf16[128,56], index: 5, kind: input, shape index: {}]
  %s6 = inlined_call_operand.vmem [shape: f32[1,16], index: 6, kind: input, shape index: {}]
  %s7 = inlined_call_operand.<no memory space> [shape: f32[1], index: 7, kind: input, shape index: {}]
  %s8 = inlined_call_operand.vmem [shape: f32[8,128], index: 8, kind: output, shape index: {0}]
  %s9 = inlined_call_operand.hbm [shape: f32[8,128], index: 9, kind: output, shape index: {1}]
  %s10 = inlined_call_operand.hbm [shape: f32[8,128], index: 10, kind: output, shape index: {2}]
  %11 = xla_tuple %s8, %s9, %s10
  %s12 = sld [smem:[#allocation0]]
  $region58: #{model_forward.1} parent=0
    _
  %s14 = ssub.s32 1, %s12
  %s15 = scalar_select 0, %s14, %s12
  %16 = sst [smem:[#allocation2]] %s7
  $region1: #{model_forward.1} parent=0
    #allocation3 [shape = 'u8[4096]{0}', space=vmem, size = 0x1000, scoped, tag = 'output window, operand 1, single buffered']
    #allocation4 [shape = 's32[1]{0}', space=sflag, size = 0x4, scoped, tag = 'scoped memory for model_forward.1']
    #allocation5 [shape = 'u8[4096]{0}', space=vmem, size = 0x1000, scoped, tag = 'output window, operand 2, single buffered']
    #allocation6 [shape = 's32[1]{0}', space=sflag, size = 0x4, scoped, tag = 'scoped memory for model_forward.1']
    %17 = vsyncpa [#allocation4], 0
    %18 = vsyncpa [#allocation6], 0
    // Predicated region
    $region2: #{model_forward.1} parent=1 // pred_check
      _
    $region3: #{model_forward.1} parent=1 // pred_check_branch
      %20 = sbr.rel (0) target = $region5
    $region4: #{model_forward.1} parent=1 // pred_region
      _
    $region5: #{model_forward.1} parent=1 // pred_fallthru
      _
    // Predicated region
    $region6: #{model_forward.1} parent=1 // pred_check
      _
    $region7: #{model_forward.1} parent=1 // pred_check_branch
      %22 = sbr.rel (0) target = $region9
    $region8: #{model_forward.1} parent=1 // pred_region
      _
    $region9: #{model_forward.1} parent=1 // pred_fallthru
      _
    // Predicated region
    $region10: #{model_forward.1} parent=1 // pred_check
      _
    $region11: #{model_forward.1} parent=1 // pred_check_branch
      %24 = sbr.rel (0) target = $region13
    $region12: #{model_forward.1} parent=1 // pred_region
      _
    $region13: #{model_forward.1} parent=1 // pred_fallthru
      _
    // Predicated region
    $region14: #{model_forward.1} parent=1 // pred_check
      _
    $region15: #{model_forward.1} parent=1 // pred_check_branch
      %26 = sbr.rel (0) target = $region17
    $region16: #{model_forward.1} parent=1 // pred_region
      _
    $region17: #{model_forward.1} parent=1 // pred_fallthru
      _
    // Predicated region
    $region18: #{model_forward.1} parent=1 // pred_check
      _
    $region19: #{model_forward.1} parent=1 // pred_check_branch
      %28 = sbr.rel (0) target = $region21
    $region20: #{model_forward.1} parent=1 // pred_region
      _
    $region21: #{model_forward.1} parent=1 // pred_fallthru
      _
    // Predicated region
    $region22: #{model_forward.1} parent=1 // pred_check
      _
    $region23: #{model_forward.1} parent=1 // pred_check_branch
      %30 = sbr.rel (0) target = $region25
    $region24: #{model_forward.1} parent=1 // pred_region
      _
    $region25: #{model_forward.1} parent=1 // pred_fallthru
      _
    // Predicated region
    $region26: #{model_forward.1} parent=1 // pred_check
      _
    $region27: #{model_forward.1} parent=1 // pred_check_branch
      %32 = sbr.rel (0) target = $region29
    $region28: #{model_forward.1} parent=1 // pred_region
      _
    $region29: #{model_forward.1} parent=1 // pred_fallthru
      _
    // Predicated region
    $region30: #{model_forward.1} parent=1 // pred_check
      _
    $region31: #{model_forward.1} parent=1 // pred_check_branch
      %34 = sbr.rel (0) target = $region33
    $region32: #{model_forward.1} parent=1 // pred_region
      _
    $region33: #{model_forward.1} parent=1 // pred_fallthru
      _
    %v36 = vld [vmem:[%s0] sm:$0xf]
    %v37 = vld [vmem:[%s0 + $0x4] sm:$0xf]
    %v38 = vld [vmem:[%s0 + $0x8] sm:$0xf]
    %v39 = vld [vmem:[%s0 + $0xc] sm:$0xf]
    %v40 = vld [vmem:[%s0 + $0x10] sm:$0xf]
    %v41 = vld [vmem:[%s0 + $0x14] sm:$0xf]
    %v42 = vld [vmem:[%s0 + $0x18] sm:$0xf]
    %v43 = vld [vmem:[%s0 + $0x1c] sm:$0xf]
    %v44 = vld [vmem:[%s0 + $0x20] sm:$0xf]
    %v45 = vld [vmem:[%s0 + $0x24] sm:$0xf]
    %v46 = vld [vmem:[%s0 + $0x28] sm:$0xf]
    %v47 = vld [vmem:[%s0 + $0x2c] sm:$0xf]
    %v48 = vld [vmem:[%s0 + $0x30] sm:$0xf]
    %v49 = vld [vmem:[%s0 + $0x34] sm:$0xf]
    %v50 = vld [vmem:[%s0 + $0x38] sm:$0xf]
    %v51 = vld [vmem:[%s0 + $0x3c] sm:$0xf]
    %v52 = vld [vmem:[%s0 + $0x40] sm:$0xf]
    %v53 = vld [vmem:[%s0 + $0x44] sm:$0xf]
    %v54 = vld [vmem:[%s0 + $0x48] sm:$0xf]
    %v55 = vld [vmem:[%s0 + $0x4c] sm:$0xf]
    %v56 = vld [vmem:[%s0 + $0x50] sm:$0xf]
    %v57 = vld [vmem:[%s0 + $0x54] sm:$0xf]
    %v58 = vld [vmem:[%s0 + $0x58] sm:$0xf]
    %v59 = vld [vmem:[%s0 + $0x5c] sm:$0xf]
    %v60 = vld [vmem:[%s0 + $0x60] sm:$0xf]
    %v61 = vld [vmem:[%s0 + $0x64] sm:$0xf]
    %v62 = vld [vmem:[%s0 + $0x68] sm:$0xf]
    %v63 = vld [vmem:[%s0 + $0x6c] sm:$0xf]
    %v64 = vld [vmem:[%s0 + $0x70] sm:$0xf]
    %v65 = vld [vmem:[%s0 + $0x74] sm:$0xf]
    %v66 = vld [vmem:[%s0 + $0x78] sm:$0xf]
    %v67 = vld [vmem:[%s0 + $0x7c] sm:$0xf]
    %v68 = vld [vmem:[%s0 + $0x80] sm:$0xf]
    %v69 = vld [vmem:[%s0 + $0x84] sm:$0xf]
    %v70 = vld [vmem:[%s0 + $0x88] sm:$0xf]
    %v71 = vld [vmem:[%s0 + $0x8c] sm:$0xf]
    %v72 = vld [vmem:[%s0 + $0x90] sm:$0xf]
    %v73 = vld [vmem:[%s0 + $0x94] sm:$0xf]
    %v74 = vld [vmem:[%s0 + $0x98] sm:$0xf]
    %v75 = vld [vmem:[%s0 + $0x9c] sm:$0xf]
    %v76 = vld [vmem:[%s0 + $0xa0] sm:$0xf]
    %v77 = vld [vmem:[%s0 + $0xa4] sm:$0xf]
    %v78 = vld [vmem:[%s0 + $0xa8] sm:$0xf]
    %v79 = vld [vmem:[%s0 + $0xac] sm:$0xf]
    %v80 = vld [vmem:[%s0 + $0xb0] sm:$0xf]
    %v81 = vld [vmem:[%s0 + $0xb4] sm:$0xf]
    %v82 = vld [vmem:[%s0 + $0xb8] sm:$0xf]
    %v83 = vld [vmem:[%s0 + $0xbc] sm:$0xf]
    %v84 = vld [vmem:[%s0 + $0xc0] sm:$0xf]
    %v85 = vld [vmem:[%s0 + $0xc4] sm:$0xf]
    %v86 = vld [vmem:[%s0 + $0xc8] sm:$0xf]
    %v87 = vld [vmem:[%s0 + $0xcc] sm:$0xf]
    %v88 = vld [vmem:[%s0 + $0xd0] sm:$0xf]
    %v89 = vld [vmem:[%s0 + $0xd4] sm:$0xf]
    %v90 = vld [vmem:[%s0 + $0xd8] sm:$0xf]
    %v91 = vld [vmem:[%s0 + $0xdc] sm:$0xf]
    %v92 = vld [vmem:[%s0 + $0xe0] sm:$0xf]
    %v93 = vld [vmem:[%s0 + $0xe4] sm:$0xf]
    %v94 = vld [vmem:[%s0 + $0xe8] sm:$0xf]
    %v95 = vld [vmem:[%s0 + $0xec] sm:$0xf]
    %v96 = vld [vmem:[%s0 + $0xf0] sm:$0xf]
    %v97 = vld [vmem:[%s0 + $0xf4] sm:$0xf]
    %v98 = vld [vmem:[%s0 + $0xf8] sm:$0xf]
    %v99 = vld [vmem:[%s0 + $0xfc] sm:$0xf]
    %v100 = vld [vmem:[%s0 + $0x100] sm:$0xf]
    %v101 = vld [vmem:[%s0 + $0x104] sm:$0xf]
    %v102 = vld [vmem:[%s0 + $0x108] sm:$0xf]
    %v103 = vld [vmem:[%s0 + $0x10c] sm:$0xf]
    %v104 = vld [vmem:[%s0 + $0x110] sm:$0xf]
    %v105 = vld [vmem:[%s0 + $0x114] sm:$0xf]
    %v106 = vld [vmem:[%s0 + $0x118] sm:$0xf]
    %v107 = vld [vmem:[%s0 + $0x11c] sm:$0xf]
    %v108 = vld [vmem:[%s0 + $0x120] sm:$0xf]
    %v109 = vld [vmem:[%s0 + $0x124] sm:$0xf]
    %v110 = vld [vmem:[%s0 + $0x128] sm:$0xf]
    %v111 = vld [vmem:[%s0 + $0x12c] sm:$0xf]
    %v112 = vld [vmem:[%s0 + $0x130] sm:$0xf]
    %v113 = vld [vmem:[%s0 + $0x134] sm:$0xf]
    %v114 = vld [vmem:[%s0 + $0x138] sm:$0xf]
    %v115 = vld [vmem:[%s0 + $0x13c] sm:$0xf]
    %v116 = vld [vmem:[%s0 + $0x140] sm:$0xf]
    %v117 = vld [vmem:[%s0 + $0x144] sm:$0xf]
    %v118 = vld [vmem:[%s0 + $0x148] sm:$0xf]
    %v119 = vld [vmem:[%s0 + $0x14c] sm:$0xf]
    %v120 = vld [vmem:[%s0 + $0x150] sm:$0xf]
    %v121 = vld [vmem:[%s0 + $0x154] sm:$0xf]
    %v122 = vld [vmem:[%s0 + $0x158] sm:$0xf]
    %v123 = vld [vmem:[%s0 + $0x15c] sm:$0xf]
    %v124 = vld [vmem:[%s0 + $0x160] sm:$0xf]
    %v125 = vld [vmem:[%s0 + $0x164] sm:$0xf]
    %v126 = vld [vmem:[%s0 + $0x168] sm:$0xf]
    %v127 = vld [vmem:[%s0 + $0x16c] sm:$0xf]
    %v128 = vld [vmem:[%s0 + $0x170] sm:$0xf]
    %v129 = vld [vmem:[%s0 + $0x174] sm:$0xf]
    %v130 = vld [vmem:[%s0 + $0x178] sm:$0xf]
    %v131 = vld [vmem:[%s0 + $0x17c] sm:$0xf]
    %v132 = vld [vmem:[%s0 + $0x180] sm:$0xf]
    %v133 = vld [vmem:[%s0 + $0x184] sm:$0xf]
    %v134 = vld [vmem:[%s0 + $0x188] sm:$0xf]
    %v135 = vld [vmem:[%s0 + $0x18c] sm:$0xf]
    %v136 = vld [vmem:[%s0 + $0x190] sm:$0xf]
    %v137 = vld [vmem:[%s0 + $0x194] sm:$0xf]
    %v138 = vld [vmem:[%s0 + $0x198] sm:$0xf]
    %v139 = vld [vmem:[%s0 + $0x19c] sm:$0xf]
    %v140 = vld [vmem:[%s0 + $0x1a0] sm:$0xf]
    %v141 = vld [vmem:[%s0 + $0x1a4] sm:$0xf]
    %v142 = vld [vmem:[%s0 + $0x1a8] sm:$0xf]
    %v143 = vld [vmem:[%s0 + $0x1ac] sm:$0xf]
    %v144 = vld [vmem:[%s0 + $0x1b0] sm:$0xf]
    %v145 = vld [vmem:[%s0 + $0x1b4] sm:$0xf]
    %v146 = vld [vmem:[%s0 + $0x1b8] sm:$0xf]
    %v147 = vld [vmem:[%s0 + $0x1bc] sm:$0xf]
    %v148 = vld [vmem:[%s0 + $0x1c0] sm:$0xf]
    %v149 = vld [vmem:[%s0 + $0x1c4] sm:$0xf]
    %v150 = vld [vmem:[%s0 + $0x1c8] sm:$0xf]
    %v151 = vld [vmem:[%s0 + $0x1cc] sm:$0xf]
    %v152 = vld [vmem:[%s0 + $0x1d0] sm:$0xf]
    %v153 = vld [vmem:[%s0 + $0x1d4] sm:$0xf]
    %v154 = vld [vmem:[%s0 + $0x1d8] sm:$0xf]
    %v155 = vld [vmem:[%s0 + $0x1dc] sm:$0xf]
    %v156 = vld [vmem:[%s0 + $0x1e0] sm:$0xf]
    %v157 = vld [vmem:[%s0 + $0x1e4] sm:$0xf]
    %v158 = vld [vmem:[%s0 + $0x1e8] sm:$0xf]
    %v159 = vld [vmem:[%s0 + $0x1ec] sm:$0xf]
    %v160 = vld [vmem:[%s0 + $0x1f0] sm:$0xf]
    %v161 = vld [vmem:[%s0 + $0x1f4] sm:$0xf]
    %v162 = vld [vmem:[%s0 + $0x1f8] sm:$0xf]
    %v163 = vld [vmem:[%s0 + $0x1fc] sm:$0xf]
    %v164 = vld [vmem:[%s0 + $0x200] sm:$0xf]
    %v165 = vld [vmem:[%s0 + $0x204] sm:$0xf]
    %v166 = vld [vmem:[%s0 + $0x208] sm:$0xf]
    %v167 = vld [vmem:[%s0 + $0x20c] sm:$0xf]
    %v168 = vld [vmem:[%s0 + $0x210] sm:$0xf]
    %v169 = vld [vmem:[%s0 + $0x214] sm:$0xf]
    %v170 = vld [vmem:[%s0 + $0x218] sm:$0xf]
    %v171 = vld [vmem:[%s0 + $0x21c] sm:$0xf]
    %v172 = vld [vmem:[%s0 + $0x220] sm:$0xf]
    %v173 = vld [vmem:[%s0 + $0x224] sm:$0xf]
    %v174 = vld [vmem:[%s0 + $0x228] sm:$0xf]
    %v175 = vld [vmem:[%s0 + $0x22c] sm:$0xf]
    %v176 = vld [vmem:[%s0 + $0x230] sm:$0xf]
    %v177 = vld [vmem:[%s0 + $0x234] sm:$0xf]
    %v178 = vld [vmem:[%s0 + $0x238] sm:$0xf]
    %v179 = vld [vmem:[%s0 + $0x23c] sm:$0xf]
    %v180 = vld [vmem:[%s0 + $0x240] sm:$0xf]
    %v181 = vld [vmem:[%s0 + $0x244] sm:$0xf]
    %v182 = vld [vmem:[%s0 + $0x248] sm:$0xf]
    %v183 = vld [vmem:[%s0 + $0x24c] sm:$0xf]
    %v184 = vld [vmem:[%s0 + $0x250] sm:$0xf]
    %v185 = vld [vmem:[%s0 + $0x254] sm:$0xf]
    %v186 = vld [vmem:[%s0 + $0x258] sm:$0xf]
    %v187 = vld [vmem:[%s0 + $0x25c] sm:$0xf]
    %v188 = vld [vmem:[%s0 + $0x260] sm:$0xf]
    %v189 = vld [vmem:[%s0 + $0x264] sm:$0xf]
    %v190 = vld [vmem:[%s0 + $0x268] sm:$0xf]
    %v191 = vld [vmem:[%s0 + $0x26c] sm:$0xf]
    %v192 = vld [vmem:[%s0 + $0x270] sm:$0xf]
    %v193 = vld [vmem:[%s0 + $0x274] sm:$0xf]
    %v194 = vld [vmem:[%s0 + $0x278] sm:$0xf]
    %v195 = vld [vmem:[%s0 + $0x27c] sm:$0xf]
    %v196 = vld [vmem:[%s0 + $0x280] sm:$0xf]
    %v197 = vld [vmem:[%s0 + $0x284] sm:$0xf]
    %v198 = vld [vmem:[%s0 + $0x288] sm:$0xf]
    %v199 = vld [vmem:[%s0 + $0x28c] sm:$0xf]
    %v200 = vld [vmem:[%s0 + $0x290] sm:$0xf]
    %v201 = vld [vmem:[%s0 + $0x294] sm:$0xf]
    %v202 = vld [vmem:[%s0 + $0x298] sm:$0xf]
    %v203 = vld [vmem:[%s0 + $0x29c] sm:$0xf]
    %v204 = vld [vmem:[%s0 + $0x2a0] sm:$0xf]
    %v205 = vld [vmem:[%s0 + $0x2a4] sm:$0xf]
    %v206 = vld [vmem:[%s0 + $0x2a8] sm:$0xf]
    %v207 = vld [vmem:[%s0 + $0x2ac] sm:$0xf]
    %v208 = vld [vmem:[%s0 + $0x2b0] sm:$0xf]
    %v209 = vld [vmem:[%s0 + $0x2b4] sm:$0xf]
    %v210 = vld [vmem:[%s0 + $0x2b8] sm:$0xf]
    %v211 = vld [vmem:[%s0 + $0x2bc] sm:$0xf]
    %v212 = vld [vmem:[%s0 + $0x2c0] sm:$0xf]
    %v213 = vld [vmem:[%s0 + $0x2c4] sm:$0xf]
    %v214 = vld [vmem:[%s0 + $0x2c8] sm:$0xf]
    %v215 = vld [vmem:[%s0 + $0x2cc] sm:$0xf]
    %v216 = vld [vmem:[%s0 + $0x2d0] sm:$0xf]
    %v217 = vld [vmem:[%s0 + $0x2d4] sm:$0xf]
    %v218 = vld [vmem:[%s0 + $0x2d8] sm:$0xf]
    %v219 = vld [vmem:[%s0 + $0x2dc] sm:$0xf]
    %v220 = vld [vmem:[%s0 + $0x2e0] sm:$0xf]
    %v221 = vld [vmem:[%s0 + $0x2e4] sm:$0xf]
    %v222 = vld [vmem:[%s0 + $0x2e8] sm:$0xf]
    %v223 = vld [vmem:[%s0 + $0x2ec] sm:$0xf]
    %v224 = vld [vmem:[%s0 + $0x2f0] sm:$0xf]
    %v225 = vld [vmem:[%s0 + $0x2f4] sm:$0xf]
    %v226 = vld [vmem:[%s0 + $0x2f8] sm:$0xf]
    %v227 = vld [vmem:[%s0 + $0x2fc] sm:$0xf]
    %v228 = vld [vmem:[%s0 + $0x300] sm:$0xf]
    %v229 = vld [vmem:[%s0 + $0x304] sm:$0xf]
    %v230 = vld [vmem:[%s0 + $0x308] sm:$0xf]
    %v231 = vld [vmem:[%s0 + $0x30c] sm:$0xf]
    %v232 = vld [vmem:[%s0 + $0x310] sm:$0xf]
    %v233 = vld [vmem:[%s0 + $0x314] sm:$0xf]
    %v234 = vld [vmem:[%s0 + $0x318] sm:$0xf]
    %v235 = vld [vmem:[%s0 + $0x31c] sm:$0xf]
    %v236 = vld [vmem:[%s0 + $0x320] sm:$0xf]
    %v237 = vld [vmem:[%s0 + $0x324] sm:$0xf]
    %v238 = vld [vmem:[%s0 + $0x328] sm:$0xf]
    %v239 = vld [vmem:[%s0 + $0x32c] sm:$0xf]
    %v240 = vld [vmem:[%s0 + $0x330] sm:$0xf]
    %v241 = vld [vmem:[%s0 + $0x334] sm:$0xf]
    %v242 = vld [vmem:[%s0 + $0x338] sm:$0xf]
    %v243 = vld [vmem:[%s0 + $0x33c] sm:$0xf]
    %v244 = vld [vmem:[%s0 + $0x340] sm:$0xf]
    %v245 = vld [vmem:[%s0 + $0x344] sm:$0xf]
    %v246 = vld [vmem:[%s0 + $0x348] sm:$0xf]
    %v247 = vld [vmem:[%s0 + $0x34c] sm:$0xf]
    %v248 = vld [vmem:[%s0 + $0x350] sm:$0xf]
    %v249 = vld [vmem:[%s0 + $0x354] sm:$0xf]
    %v250 = vld [vmem:[%s0 + $0x358] sm:$0xf]
    %v251 = vld [vmem:[%s0 + $0x35c] sm:$0xf]
    %v252 = vld [vmem:[%s0 + $0x360] sm:$0xf]
    %v253 = vld [vmem:[%s0 + $0x364] sm:$0xf]
    %v254 = vld [vmem:[%s0 + $0x368] sm:$0xf]
    %v255 = vld [vmem:[%s0 + $0x36c] sm:$0xf]
    %v256 = vld [vmem:[%s0 + $0x370] sm:$0xf]
    %v257 = vld [vmem:[%s0 + $0x374] sm:$0xf]
    %v258 = vld [vmem:[%s0 + $0x378] sm:$0xf]
    %v259 = vld [vmem:[%s0 + $0x37c] sm:$0xf]
    %v260 = vld [vmem:[%s0 + $0x380] sm:$0xf]
    %v261 = vld [vmem:[%s0 + $0x384] sm:$0xf]
    %v262 = vld [vmem:[%s0 + $0x388] sm:$0xf]
    %v263 = vld [vmem:[%s0 + $0x38c] sm:$0xf]
    %v264 = vld [vmem:[%s0 + $0x390] sm:$0xf]
    %v265 = vld [vmem:[%s0 + $0x394] sm:$0xf]
    %v266 = vld [vmem:[%s0 + $0x398] sm:$0xf]
    %v267 = vld [vmem:[%s0 + $0x39c] sm:$0xf]
    %v268 = vld [vmem:[%s0 + $0x3a0] sm:$0xf]
    %v269 = vld [vmem:[%s0 + $0x3a4] sm:$0xf]
    %v270 = vld [vmem:[%s0 + $0x3a8] sm:$0xf]
    %v271 = vld [vmem:[%s0 + $0x3ac] sm:$0xf]
    %v272 = vld [vmem:[%s0 + $0x3b0] sm:$0xf]
    %v273 = vld [vmem:[%s0 + $0x3b4] sm:$0xf]
    %v274 = vld [vmem:[%s0 + $0x3b8] sm:$0xf]
    %v275 = vld [vmem:[%s0 + $0x3bc] sm:$0xf]
    %v276 = vld [vmem:[%s0 + $0x3c0] sm:$0xf]
    %v277 = vld [vmem:[%s0 + $0x3c4] sm:$0xf]
    %v278 = vld [vmem:[%s0 + $0x3c8] sm:$0xf]
    %v279 = vld [vmem:[%s0 + $0x3cc] sm:$0xf]
    %v280 = vld [vmem:[%s0 + $0x3d0] sm:$0xf]
    %v281 = vld [vmem:[%s0 + $0x3d4] sm:$0xf]
    %v282 = vld [vmem:[%s0 + $0x3d8] sm:$0xf]
    %v283 = vld [vmem:[%s0 + $0x3dc] sm:$0xf]
    %v284 = vld [vmem:[%s0 + $0x3e0] sm:$0xf]
    %v285 = vld [vmem:[%s0 + $0x3e4] sm:$0xf]
    %v286 = vld [vmem:[%s0 + $0x3e8] sm:$0xf]
    %v287 = vld [vmem:[%s0 + $0x3ec] sm:$0xf]
    %v288 = vld [vmem:[%s0 + $0x3f0] sm:$0xf]
    %v289 = vld [vmem:[%s0 + $0x3f4] sm:$0xf]
    %v290 = vld [vmem:[%s0 + $0x3f8] sm:$0xf]
    %v291 = vld [vmem:[%s0 + $0x3fc] sm:$0xf]
    %v548 = vunpack.c.l.b16 %v36
    %v549 = vunpack.c.l.b16 %v37
    %v550 = vunpack.c.l.b16 %v38
    %v551 = vunpack.c.l.b16 %v39
    %v552 = vunpack.c.l.b16 %v40
    %v553 = vunpack.c.l.b16 %v41
    %v554 = vunpack.c.l.b16 %v42
    %v555 = vunpack.c.l.b16 %v43
    %v556 = vunpack.c.l.b16 %v44
    %v557 = vunpack.c.l.b16 %v45
    %v558 = vunpack.c.l.b16 %v46
    %v559 = vunpack.c.l.b16 %v47
    %v560 = vunpack.c.l.b16 %v48
    %v561 = vunpack.c.l.b16 %v49
    %v562 = vunpack.c.l.b16 %v50
    %v563 = vunpack.c.l.b16 %v51
    %v564 = vunpack.c.l.b16 %v52
    %v565 = vunpack.c.l.b16 %v53
    %v566 = vunpack.c.l.b16 %v54
    %v567 = vunpack.c.l.b16 %v55
    %v568 = vunpack.c.l.b16 %v56
    %v569 = vunpack.c.l.b16 %v57
    %v570 = vunpack.c.l.b16 %v58
    %v571 = vunpack.c.l.b16 %v59
    %v572 = vunpack.c.l.b16 %v60
    %v573 = vunpack.c.l.b16 %v61
    %v574 = vunpack.c.l.b16 %v62
    %v575 = vunpack.c.l.b16 %v63
    %v576 = vunpack.c.l.b16 %v64
    %v577 = vunpack.c.l.b16 %v65
    %v578 = vunpack.c.l.b16 %v66
    %v579 = vunpack.c.l.b16 %v67
    %v580 = vunpack.c.l.b16 %v68
    %v581 = vunpack.c.l.b16 %v69
    %v582 = vunpack.c.l.b16 %v70
    %v583 = vunpack.c.l.b16 %v71
    %v584 = vunpack.c.l.b16 %v72
    %v585 = vunpack.c.l.b16 %v73
    %v586 = vunpack.c.l.b16 %v74
    %v587 = vunpack.c.l.b16 %v75
    %v588 = vunpack.c.l.b16 %v76
    %v589 = vunpack.c.l.b16 %v77
    %v590 = vunpack.c.l.b16 %v78
    %v591 = vunpack.c.l.b16 %v79
    %v592 = vunpack.c.l.b16 %v80
    %v593 = vunpack.c.l.b16 %v81
    %v594 = vunpack.c.l.b16 %v82
    %v595 = vunpack.c.l.b16 %v83
    %v596 = vunpack.c.l.b16 %v84
    %v597 = vunpack.c.l.b16 %v85
    %v598 = vunpack.c.l.b16 %v86
    %v599 = vunpack.c.l.b16 %v87
    %v600 = vunpack.c.l.b16 %v88
    %v601 = vunpack.c.l.b16 %v89
    %v602 = vunpack.c.l.b16 %v90
    %v603 = vunpack.c.l.b16 %v91
    %v604 = vunpack.c.l.b16 %v92
    %v605 = vunpack.c.l.b16 %v93
    %v606 = vunpack.c.l.b16 %v94
    %v607 = vunpack.c.l.b16 %v95
    %v608 = vunpack.c.l.b16 %v96
    %v609 = vunpack.c.l.b16 %v97
    %v610 = vunpack.c.l.b16 %v98
    %v611 = vunpack.c.l.b16 %v99
    %v612 = vunpack.c.l.b16 %v100
    %v613 = vunpack.c.l.b16 %v101
    %v614 = vunpack.c.l.b16 %v102
    %v615 = vunpack.c.l.b16 %v103
    %v616 = vunpack.c.l.b16 %v104
    %v617 = vunpack.c.l.b16 %v105
    %v618 = vunpack.c.l.b16 %v106
    %v619 = vunpack.c.l.b16 %v107
    %v620 = vunpack.c.l.b16 %v108
    %v621 = vunpack.c.l.b16 %v109
    %v622 = vunpack.c.l.b16 %v110
    %v623 = vunpack.c.l.b16 %v111
    %v624 = vunpack.c.l.b16 %v112
    %v625 = vunpack.c.l.b16 %v113
    %v626 = vunpack.c.l.b16 %v114
    %v627 = vunpack.c.l.b16 %v115
    %v628 = vunpack.c.l.b16 %v116
    %v629 = vunpack.c.l.b16 %v117
    %v630 = vunpack.c.l.b16 %v118
    %v631 = vunpack.c.l.b16 %v119
    %v632 = vunpack.c.l.b16 %v120
    %v633 = vunpack.c.l.b16 %v121
    %v634 = vunpack.c.l.b16 %v122
    %v635 = vunpack.c.l.b16 %v123
    %v636 = vunpack.c.l.b16 %v124
    %v637 = vunpack.c.l.b16 %v125
    %v638 = vunpack.c.l.b16 %v126
    %v639 = vunpack.c.l.b16 %v127
    %v640 = vunpack.c.l.b16 %v128
    %v641 = vunpack.c.l.b16 %v129
    %v642 = vunpack.c.l.b16 %v130
    %v643 = vunpack.c.l.b16 %v131
    %v644 = vunpack.c.l.b16 %v132
    %v645 = vunpack.c.l.b16 %v133
    %v646 = vunpack.c.l.b16 %v134
    %v647 = vunpack.c.l.b16 %v135
    %v648 = vunpack.c.l.b16 %v136
    %v649 = vunpack.c.l.b16 %v137
    %v650 = vunpack.c.l.b16 %v138
    %v651 = vunpack.c.l.b16 %v139
    %v652 = vunpack.c.l.b16 %v140
    %v653 = vunpack.c.l.b16 %v141
    %v654 = vunpack.c.l.b16 %v142
    %v655 = vunpack.c.l.b16 %v143
    %v656 = vunpack.c.l.b16 %v144
    %v657 = vunpack.c.l.b16 %v145
    %v658 = vunpack.c.l.b16 %v146
    %v659 = vunpack.c.l.b16 %v147
    %v660 = vunpack.c.l.b16 %v148
    %v661 = vunpack.c.l.b16 %v149
    %v662 = vunpack.c.l.b16 %v150
    %v663 = vunpack.c.l.b16 %v151
    %v664 = vunpack.c.l.b16 %v152
    %v665 = vunpack.c.l.b16 %v153
    %v666 = vunpack.c.l.b16 %v154
    %v667 = vunpack.c.l.b16 %v155
    %v668 = vunpack.c.l.b16 %v156
    %v669 = vunpack.c.l.b16 %v157
    %v670 = vunpack.c.l.b16 %v158
    %v671 = vunpack.c.l.b16 %v159
    %v672 = vunpack.c.l.b16 %v160
    %v673 = vunpack.c.l.b16 %v161
    %v674 = vunpack.c.l.b16 %v162
    %v675 = vunpack.c.l.b16 %v163
    %v676 = vunpack.c.l.b16 %v164
    %v677 = vunpack.c.l.b16 %v165
    %v678 = vunpack.c.l.b16 %v166
    %v679 = vunpack.c.l.b16 %v167
    %v680 = vunpack.c.l.b16 %v168
    %v681 = vunpack.c.l.b16 %v169
    %v682 = vunpack.c.l.b16 %v170
    %v683 = vunpack.c.l.b16 %v171
    %v684 = vunpack.c.l.b16 %v172
    %v685 = vunpack.c.l.b16 %v173
    %v686 = vunpack.c.l.b16 %v174
    %v687 = vunpack.c.l.b16 %v175
    %v688 = vunpack.c.l.b16 %v176
    %v689 = vunpack.c.l.b16 %v177
    %v690 = vunpack.c.l.b16 %v178
    %v691 = vunpack.c.l.b16 %v179
    %v692 = vunpack.c.l.b16 %v180
    %v693 = vunpack.c.l.b16 %v181
    %v694 = vunpack.c.l.b16 %v182
    %v695 = vunpack.c.l.b16 %v183
    %v696 = vunpack.c.l.b16 %v184
    %v697 = vunpack.c.l.b16 %v185
    %v698 = vunpack.c.l.b16 %v186
    %v699 = vunpack.c.l.b16 %v187
    %v700 = vunpack.c.l.b16 %v188
    %v701 = vunpack.c.l.b16 %v189
    %v702 = vunpack.c.l.b16 %v190
    %v703 = vunpack.c.l.b16 %v191
    %v704 = vunpack.c.l.b16 %v192
    %v705 = vunpack.c.l.b16 %v193
    %v706 = vunpack.c.l.b16 %v194
    %v707 = vunpack.c.l.b16 %v195
    %v708 = vunpack.c.l.b16 %v196
    %v709 = vunpack.c.l.b16 %v197
    %v710 = vunpack.c.l.b16 %v198
    %v711 = vunpack.c.l.b16 %v199
    %v712 = vunpack.c.l.b16 %v200
    %v713 = vunpack.c.l.b16 %v201
    %v714 = vunpack.c.l.b16 %v202
    %v715 = vunpack.c.l.b16 %v203
    %v716 = vunpack.c.l.b16 %v204
    %v717 = vunpack.c.l.b16 %v205
    %v718 = vunpack.c.l.b16 %v206
    %v719 = vunpack.c.l.b16 %v207
    %v720 = vunpack.c.l.b16 %v208
    %v721 = vunpack.c.l.b16 %v209
    %v722 = vunpack.c.l.b16 %v210
    %v723 = vunpack.c.l.b16 %v211
    %v724 = vunpack.c.l.b16 %v212
    %v725 = vunpack.c.l.b16 %v213
    %v726 = vunpack.c.l.b16 %v214
    %v727 = vunpack.c.l.b16 %v215
    %v728 = vunpack.c.l.b16 %v216
    %v729 = vunpack.c.l.b16 %v217
    %v730 = vunpack.c.l.b16 %v218
    %v731 = vunpack.c.l.b16 %v219
    %v732 = vunpack.c.l.b16 %v220
    %v733 = vunpack.c.l.b16 %v221
    %v734 = vunpack.c.l.b16 %v222
    %v735 = vunpack.c.l.b16 %v223
    %v736 = vunpack.c.l.b16 %v224
    %v737 = vunpack.c.l.b16 %v225
    %v738 = vunpack.c.l.b16 %v226
    %v739 = vunpack.c.l.b16 %v227
    %v740 = vunpack.c.l.b16 %v228
    %v741 = vunpack.c.l.b16 %v229
    %v742 = vunpack.c.l.b16 %v230
    %v743 = vunpack.c.l.b16 %v231
    %v744 = vunpack.c.l.b16 %v232
    %v745 = vunpack.c.l.b16 %v233
    %v746 = vunpack.c.l.b16 %v234
    %v747 = vunpack.c.l.b16 %v235
    %v748 = vunpack.c.l.b16 %v236
    %v749 = vunpack.c.l.b16 %v237
    %v750 = vunpack.c.l.b16 %v238
    %v751 = vunpack.c.l.b16 %v239
    %v752 = vunpack.c.l.b16 %v240
    %v753 = vunpack.c.l.b16 %v241
    %v754 = vunpack.c.l.b16 %v242
    %v755 = vunpack.c.l.b16 %v243
    %v756 = vunpack.c.l.b16 %v244
    %v757 = vunpack.c.l.b16 %v245
    %v758 = vunpack.c.l.b16 %v246
    %v759 = vunpack.c.l.b16 %v247
    %v760 = vunpack.c.l.b16 %v248
    %v761 = vunpack.c.l.b16 %v249
    %v762 = vunpack.c.l.b16 %v250
    %v763 = vunpack.c.l.b16 %v251
    %v764 = vunpack.c.l.b16 %v252
    %v765 = vunpack.c.l.b16 %v253
    %v766 = vunpack.c.l.b16 %v254
    %v767 = vunpack.c.l.b16 %v255
    %v768 = vunpack.c.l.b16 %v256
    %v769 = vunpack.c.l.b16 %v257
    %v770 = vunpack.c.l.b16 %v258
    %v771 = vunpack.c.l.b16 %v259
    %v772 = vunpack.c.l.b16 %v260
    %v773 = vunpack.c.l.b16 %v261
    %v774 = vunpack.c.l.b16 %v262
    %v775 = vunpack.c.l.b16 %v263
    %v776 = vunpack.c.l.b16 %v264
    %v777 = vunpack.c.l.b16 %v265
    %v778 = vunpack.c.l.b16 %v266
    %v779 = vunpack.c.l.b16 %v267
    %v780 = vunpack.c.l.b16 %v268
    %v781 = vunpack.c.l.b16 %v269
    %v782 = vunpack.c.l.b16 %v270
    %v783 = vunpack.c.l.b16 %v271
    %v784 = vunpack.c.l.b16 %v272
    %v785 = vunpack.c.l.b16 %v273
    %v786 = vunpack.c.l.b16 %v274
    %v787 = vunpack.c.l.b16 %v275
    %v788 = vunpack.c.l.b16 %v276
    %v789 = vunpack.c.l.b16 %v277
    %v790 = vunpack.c.l.b16 %v278
    %v791 = vunpack.c.l.b16 %v279
    %v792 = vunpack.c.l.b16 %v280
    %v793 = vunpack.c.l.b16 %v281
    %v794 = vunpack.c.l.b16 %v282
    %v795 = vunpack.c.l.b16 %v283
    %v796 = vunpack.c.l.b16 %v284
    %v797 = vunpack.c.l.b16 %v285
    %v798 = vunpack.c.l.b16 %v286
    %v799 = vunpack.c.l.b16 %v287
    %v800 = vunpack.c.l.b16 %v288
    %v801 = vunpack.c.l.b16 %v289
    %v802 = vunpack.c.l.b16 %v290
    %v803 = vunpack.c.l.b16 %v291
    %v804 = vpack.c.b16 %v549, %v548
    %v805 = vpack.c.b16 %v551, %v550
    %v806 = vpack.c.b16 %v553, %v552
    %v807 = vpack.c.b16 %v555, %v554
    %v808 = vpack.c.b16 %v557, %v556
    %v809 = vpack.c.b16 %v559, %v558
    %v810 = vpack.c.b16 %v561, %v560
    %v811 = vpack.c.b16 %v563, %v562
    %v812 = vpack.c.b16 %v565, %v564
    %v813 = vpack.c.b16 %v567, %v566
    %v814 = vpack.c.b16 %v569, %v568
    %v815 = vpack.c.b16 %v571, %v570
    %v816 = vpack.c.b16 %v573, %v572
    %v817 = vpack.c.b16 %v575, %v574
    %v818 = vpack.c.b16 %v577, %v576
    %v819 = vpack.c.b16 %v579, %v578
    %v820 = vpack.c.b16 %v581, %v580
    %v821 = vpack.c.b16 %v583, %v582
    %v822 = vpack.c.b16 %v585, %v584
    %v823 = vpack.c.b16 %v587, %v586
    %v824 = vpack.c.b16 %v589, %v588
    %v825 = vpack.c.b16 %v591, %v590
    %v826 = vpack.c.b16 %v593, %v592
    %v827 = vpack.c.b16 %v595, %v594
    %v828 = vpack.c.b16 %v597, %v596
    %v829 = vpack.c.b16 %v599, %v598
    %v830 = vpack.c.b16 %v601, %v600
    %v831 = vpack.c.b16 %v603, %v602
    %v832 = vpack.c.b16 %v605, %v604
    %v833 = vpack.c.b16 %v607, %v606
    %v834 = vpack.c.b16 %v609, %v608
    %v835 = vpack.c.b16 %v611, %v610
    %v836 = vpack.c.b16 %v613, %v612
    %v837 = vpack.c.b16 %v615, %v614
    %v838 = vpack.c.b16 %v617, %v616
    %v839 = vpack.c.b16 %v619, %v618
    %v840 = vpack.c.b16 %v621, %v620
    %v841 = vpack.c.b16 %v623, %v622
    %v842 = vpack.c.b16 %v625, %v624
    %v843 = vpack.c.b16 %v627, %v626
    %v844 = vpack.c.b16 %v629, %v628
    %v845 = vpack.c.b16 %v631, %v630
    %v846 = vpack.c.b16 %v633, %v632
    %v847 = vpack.c.b16 %v635, %v634
    %v848 = vpack.c.b16 %v637, %v636
    %v849 = vpack.c.b16 %v639, %v638
    %v850 = vpack.c.b16 %v641, %v640
    %v851 = vpack.c.b16 %v643, %v642
    %v852 = vpack.c.b16 %v645, %v644
    %v853 = vpack.c.b16 %v647, %v646
    %v854 = vpack.c.b16 %v649, %v648
    %v855 = vpack.c.b16 %v651, %v650
    %v856 = vpack.c.b16 %v653, %v652
    %v857 = vpack.c.b16 %v655, %v654
    %v858 = vpack.c.b16 %v657, %v656
    %v859 = vpack.c.b16 %v659, %v658
    %v860 = vpack.c.b16 %v661, %v660
    %v861 = vpack.c.b16 %v663, %v662
    %v862 = vpack.c.b16 %v665, %v664
    %v863 = vpack.c.b16 %v667, %v666
    %v864 = vpack.c.b16 %v669, %v668
    %v865 = vpack.c.b16 %v671, %v670
    %v866 = vpack.c.b16 %v673, %v672
    %v867 = vpack.c.b16 %v675, %v674
    %v868 = vpack.c.b16 %v677, %v676
    %v869 = vpack.c.b16 %v679, %v678
    %v870 = vpack.c.b16 %v681, %v680
    %v871 = vpack.c.b16 %v683, %v682
    %v872 = vpack.c.b16 %v685, %v684
    %v873 = vpack.c.b16 %v687, %v686
    %v874 = vpack.c.b16 %v689, %v688
    %v875 = vpack.c.b16 %v691, %v690
    %v876 = vpack.c.b16 %v693, %v692
    %v877 = vpack.c.b16 %v695, %v694
    %v878 = vpack.c.b16 %v697, %v696
    %v879 = vpack.c.b16 %v699, %v698
    %v880 = vpack.c.b16 %v701, %v700
    %v881 = vpack.c.b16 %v703, %v702
    %v882 = vpack.c.b16 %v705, %v704
    %v883 = vpack.c.b16 %v707, %v706
    %v884 = vpack.c.b16 %v709, %v708
    %v885 = vpack.c.b16 %v711, %v710
    %v886 = vpack.c.b16 %v713, %v712
    %v887 = vpack.c.b16 %v715, %v714
    %v888 = vpack.c.b16 %v717, %v716
    %v889 = vpack.c.b16 %v719, %v718
    %v890 = vpack.c.b16 %v721, %v720
    %v891 = vpack.c.b16 %v723, %v722
    %v892 = vpack.c.b16 %v725, %v724
    %v893 = vpack.c.b16 %v727, %v726
    %v894 = vpack.c.b16 %v729, %v728
    %v895 = vpack.c.b16 %v731, %v730
    %v896 = vpack.c.b16 %v733, %v732
    %v897 = vpack.c.b16 %v735, %v734
    %v898 = vpack.c.b16 %v737, %v736
    %v899 = vpack.c.b16 %v739, %v738
    %v900 = vpack.c.b16 %v741, %v740
    %v901 = vpack.c.b16 %v743, %v742
    %v902 = vpack.c.b16 %v745, %v744
    %v903 = vpack.c.b16 %v747, %v746
    %v904 = vpack.c.b16 %v749, %v748
    %v905 = vpack.c.b16 %v751, %v750
    %v906 = vpack.c.b16 %v753, %v752
    %v907 = vpack.c.b16 %v755, %v754
    %v908 = vpack.c.b16 %v757, %v756
    %v909 = vpack.c.b16 %v759, %v758
    %v910 = vpack.c.b16 %v761, %v760
    %v911 = vpack.c.b16 %v763, %v762
    %v912 = vpack.c.b16 %v765, %v764
    %v913 = vpack.c.b16 %v767, %v766
    %v914 = vpack.c.b16 %v769, %v768
    %v915 = vpack.c.b16 %v771, %v770
    %v916 = vpack.c.b16 %v773, %v772
    %v917 = vpack.c.b16 %v775, %v774
    %v918 = vpack.c.b16 %v777, %v776
    %v919 = vpack.c.b16 %v779, %v778
    %v920 = vpack.c.b16 %v781, %v780
    %v921 = vpack.c.b16 %v783, %v782
    %v922 = vpack.c.b16 %v785, %v784
    %v923 = vpack.c.b16 %v787, %v786
    %v924 = vpack.c.b16 %v789, %v788
    %v925 = vpack.c.b16 %v791, %v790
    %v926 = vpack.c.b16 %v793, %v792
    %v927 = vpack.c.b16 %v795, %v794
    %v928 = vpack.c.b16 %v797, %v796
    %v929 = vpack.c.b16 %v799, %v798
    %v930 = vpack.c.b16 %v801, %v800
    %v931 = vpack.c.b16 %v803, %v802
    %vm932 = vcmask 293888
    %v935 = vsel %vm932, %v804, 0
    %v938 = vsel %vm932, %v805, 0
    %v941 = vsel %vm932, %v806, 0
    %v944 = vsel %vm932, %v807, 0
    %v947 = vsel %vm932, %v808, 0
    %v950 = vsel %vm932, %v809, 0
    %v953 = vsel %vm932, %v810, 0
    %v956 = vsel %vm932, %v811, 0
    %v959 = vsel %vm932, %v812, 0
    %v962 = vsel %vm932, %v813, 0
    %v965 = vsel %vm932, %v814, 0
    %v968 = vsel %vm932, %v815, 0
    %v971 = vsel %vm932, %v816, 0
    %v974 = vsel %vm932, %v817, 0
    %v977 = vsel %vm932, %v818, 0
    %v980 = vsel %vm932, %v819, 0
    %v983 = vsel %vm932, %v820, 0
    %v986 = vsel %vm932, %v821, 0
    %v989 = vsel %vm932, %v822, 0
    %v992 = vsel %vm932, %v823, 0
    %v995 = vsel %vm932, %v824, 0
    %v998 = vsel %vm932, %v825, 0
    %v1001 = vsel %vm932, %v826, 0
    %v1004 = vsel %vm932, %v827, 0
    %v1007 = vsel %vm932, %v828, 0
    %v1010 = vsel %vm932, %v829, 0
    %v1013 = vsel %vm932, %v830, 0
    %v1016 = vsel %vm932, %v831, 0
    %v1019 = vsel %vm932, %v832, 0
    %v1022 = vsel %vm932, %v833, 0
    %v1025 = vsel %vm932, %v834, 0
    %v1028 = vsel %vm932, %v835, 0
    %v1031 = vsel %vm932, %v836, 0
    %v1034 = vsel %vm932, %v837, 0
    %v1037 = vsel %vm932, %v838, 0
    %v1040 = vsel %vm932, %v839, 0
    %v1043 = vsel %vm932, %v840, 0
    %v1046 = vsel %vm932, %v841, 0
    %v1049 = vsel %vm932, %v842, 0
    %v1052 = vsel %vm932, %v843, 0
    %v1055 = vsel %vm932, %v844, 0
    %v1058 = vsel %vm932, %v845, 0
    %v1061 = vsel %vm932, %v846, 0
    %v1064 = vsel %vm932, %v847, 0
    %v1067 = vsel %vm932, %v848, 0
    %v1070 = vsel %vm932, %v849, 0
    %v1073 = vsel %vm932, %v850, 0
    %v1076 = vsel %vm932, %v851, 0
    %v1079 = vsel %vm932, %v852, 0
    %v1082 = vsel %vm932, %v853, 0
    %v1085 = vsel %vm932, %v854, 0
    %v1088 = vsel %vm932, %v855, 0
    %v1091 = vsel %vm932, %v856, 0
    %v1094 = vsel %vm932, %v857, 0
    %v1097 = vsel %vm932, %v858, 0
    %v1100 = vsel %vm932, %v859, 0
    %v1103 = vsel %vm932, %v860, 0
    %v1106 = vsel %vm932, %v861, 0
    %v1109 = vsel %vm932, %v862, 0
    %v1112 = vsel %vm932, %v863, 0
    %v1115 = vsel %vm932, %v864, 0
    %v1118 = vsel %vm932, %v865, 0
    %v1121 = vsel %vm932, %v866, 0
    %v1124 = vsel %vm932, %v867, 0
    %v1127 = vsel %vm932, %v868, 0
    %v1130 = vsel %vm932, %v869, 0
    %v1133 = vsel %vm932, %v870, 0
    %v1136 = vsel %vm932, %v871, 0
    %v1139 = vsel %vm932, %v872, 0
    %v1142 = vsel %vm932, %v873, 0
    %v1145 = vsel %vm932, %v874, 0
    %v1148 = vsel %vm932, %v875, 0
    %v1151 = vsel %vm932, %v876, 0
    %v1154 = vsel %vm932, %v877, 0
    %v1157 = vsel %vm932, %v878, 0
    %v1160 = vsel %vm932, %v879, 0
    %v1163 = vsel %vm932, %v880, 0
    %v1166 = vsel %vm932, %v881, 0
    %v1169 = vsel %vm932, %v882, 0
    %v1172 = vsel %vm932, %v883, 0
    %v1175 = vsel %vm932, %v884, 0
    %v1178 = vsel %vm932, %v885, 0
    %v1181 = vsel %vm932, %v886, 0
    %v1184 = vsel %vm932, %v887, 0
    %v1187 = vsel %vm932, %v888, 0
    %v1190 = vsel %vm932, %v889, 0
    %v1193 = vsel %vm932, %v890, 0
    %v1196 = vsel %vm932, %v891, 0
    %v1199 = vsel %vm932, %v892, 0
    %v1202 = vsel %vm932, %v893, 0
    %v1205 = vsel %vm932, %v894, 0
    %v1208 = vsel %vm932, %v895, 0
    %v1211 = vsel %vm932, %v896, 0
    %v1214 = vsel %vm932, %v897, 0
    %v1217 = vsel %vm932, %v898, 0
    %v1220 = vsel %vm932, %v899, 0
    %v1223 = vsel %vm932, %v900, 0
    %v1226 = vsel %vm932, %v901, 0
    %v1229 = vsel %vm932, %v902, 0
    %v1232 = vsel %vm932, %v903, 0
    %v1235 = vsel %vm932, %v904, 0
    %v1238 = vsel %vm932, %v905, 0
    %v1241 = vsel %vm932, %v906, 0
    %v1244 = vsel %vm932, %v907, 0
    %v1247 = vsel %vm932, %v908, 0
    %v1250 = vsel %vm932, %v909, 0
    %v1253 = vsel %vm932, %v910, 0
    %v1256 = vsel %vm932, %v911, 0
    %v1259 = vsel %vm932, %v912, 0
    %v1262 = vsel %vm932, %v913, 0
    %v1265 = vsel %vm932, %v914, 0
    %v1268 = vsel %vm932, %v915, 0
    %v1271 = vsel %vm932, %v916, 0
    %v1274 = vsel %vm932, %v917, 0
    %v1277 = vsel %vm932, %v918, 0
    %v1280 = vsel %vm932, %v919, 0
    %v1283 = vsel %vm932, %v920, 0
    %v1286 = vsel %vm932, %v921, 0
    %v1289 = vsel %vm932, %v922, 0
    %v1292 = vsel %vm932, %v923, 0
    %v1295 = vsel %vm932, %v924, 0
    %v1298 = vsel %vm932, %v925, 0
    %v1301 = vsel %vm932, %v926, 0
    %v1304 = vsel %vm932, %v927, 0
    %v1307 = vsel %vm932, %v928, 0
    %v1310 = vsel %vm932, %v929, 0
    %v1313 = vsel %vm932, %v930, 0
    %v1316 = vsel %vm932, %v931, 0
    %v1318 = vld [vmem:[%s1] sm:$0xf]
    %v1319 = vld [vmem:[%s1 + $0x4] sm:$0xf]
    %v1320 = vld [vmem:[%s1 + $0x8] sm:$0xf]
    %v1321 = vld [vmem:[%s1 + $0xc] sm:$0xf]
    %v1322 = vld [vmem:[%s1 + $0x10] sm:$0xf]
    %v1323 = vld [vmem:[%s1 + $0x14] sm:$0xf]
    %v1324 = vld [vmem:[%s1 + $0x18] sm:$0xf]
    %v1325 = vld [vmem:[%s1 + $0x1c] sm:$0xf]
    %v1326 = vld [vmem:[%s1 + $0x20] sm:$0xf]
    %v1327 = vld [vmem:[%s1 + $0x24] sm:$0xf]
    %v1328 = vld [vmem:[%s1 + $0x28] sm:$0xf]
    %v1329 = vld [vmem:[%s1 + $0x2c] sm:$0xf]
    %v1330 = vld [vmem:[%s1 + $0x30] sm:$0xf]
    %v1331 = vld [vmem:[%s1 + $0x34] sm:$0xf]
    %v1332 = vld [vmem:[%s1 + $0x38] sm:$0xf]
    %v1333 = vld [vmem:[%s1 + $0x3c] sm:$0xf]
    %v1350 = vunpack.c.l.b16 %v1318
    %v1351 = vunpack.c.l.b16 %v1319
    %v1352 = vunpack.c.l.b16 %v1320
    %v1353 = vunpack.c.l.b16 %v1321
    %v1354 = vunpack.c.l.b16 %v1322
    %v1355 = vunpack.c.l.b16 %v1323
    %v1356 = vunpack.c.l.b16 %v1324
    %v1357 = vunpack.c.l.b16 %v1325
    %v1358 = vunpack.c.l.b16 %v1326
    %v1359 = vunpack.c.l.b16 %v1327
    %v1360 = vunpack.c.l.b16 %v1328
    %v1361 = vunpack.c.l.b16 %v1329
    %v1362 = vunpack.c.l.b16 %v1330
    %v1363 = vunpack.c.l.b16 %v1331
    %v1364 = vunpack.c.l.b16 %v1332
    %v1365 = vunpack.c.l.b16 %v1333
    %v1366 = vpack.c.b16 %v1351, %v1350
    %v1367 = vpack.c.b16 %v1353, %v1352
    %v1368 = vpack.c.b16 %v1355, %v1354
    %v1369 = vpack.c.b16 %v1357, %v1356
    %v1370 = vpack.c.b16 %v1359, %v1358
    %v1371 = vpack.c.b16 %v1361, %v1360
    %v1372 = vpack.c.b16 %v1363, %v1362
    %v1373 = vpack.c.b16 %v1365, %v1364
    %1382 = vmatprep.subr.bf16.mxu0 0
    %1383 = vmatpush1.bf16.msra.mxu0 %v1373
    %1384 = vmatprep.subr.bf16.mxu0 0
    %1385 = vmatpush1.bf16.msra.mxu0 %v1372
    %1386 = vmatprep.subr.bf16.mxu0 0
    %1387 = vmatpush1.bf16.msra.mxu0 %v1371
    %1388 = vmatprep.subr.bf16.mxu0 0
    %1389 = vmatpush1.bf16.msra.mxu0 %v1370
    %1390 = vmatprep.subr.bf16.mxu0 0
    %1391 = vmatpush1.bf16.msra.mxu0 %v1369
    %1392 = vmatprep.subr.bf16.mxu0 0
    %1393 = vmatpush1.bf16.msra.mxu0 %v1368
    %1394 = vmatprep.subr.bf16.mxu0 0
    %1395 = vmatpush1.bf16.msra.mxu0 %v1367
    %1396 = vmatprep.subr.bf16.mxu0 0
    %1397 = vmatpush1.bf16.msra.mxu0 %v1366
    %1398 = vmatprep.subr.bf16.mxu0 0
    %1399 = vmatpush2.bf16.msra.mxu0 0
    %1400 = vmatprep.subr.bf16.mxu0 0
    %1401 = vmatpush2.bf16.msra.mxu0 0
    %1402 = vmatprep.subr.bf16.mxu0 0
    %1403 = vmatpush2.bf16.msra.mxu0 0
    %1404 = vmatprep.subr.bf16.mxu0 0
    %1405 = vmatpush2.bf16.msra.mxu0 0
    %1406 = vmatprep.subr.bf16.mxu0 0
    %1407 = vmatpush2.bf16.msra.mxu0 0
    %1408 = vmatprep.subr.bf16.mxu0 0
    %1409 = vmatpush2.bf16.msra.mxu0 0
    %1410 = vmatprep.subr.bf16.mxu0 0
    %1411 = vmatpush2.bf16.msra.mxu0 0
    %1412 = vmatprep.subr.bf16.mxu0 0
    %1413 = vmatpush2.bf16.msra.mxu0 0
    %1414 = vmatprep.mubr.bf16.mxu0 0
    %1415 = vmatmul.mubr.bf16.gmra.mxu0 %v935
    %v1416 = vpop.f32.mrf.mxu0
    %v1417 = vadd.f32 0.0, %v1416
    %v1418 = vpop.f32.mrf.mxu0
    %v1419 = vpop.f32.mrf.mxu0
    %v1420 = vadd.f32 0.0, %v1419
    %v1421 = vpop.f32.mrf.mxu0
    %1422 = vmatprep.mubr.bf16.mxu0 0
    %1423 = vmatmul.mubr.bf16.gmra.mxu0 %v938
    %v1424 = vpop.f32.mrf.mxu0
    %v1425 = vadd.f32 0.0, %v1424
    %v1426 = vpop.f32.mrf.mxu0
    %v1427 = vpop.f32.mrf.mxu0
    %v1428 = vadd.f32 0.0, %v1427
    %v1429 = vpop.f32.mrf.mxu0
    %1430 = vmatprep.mubr.bf16.mxu0 0
    %1431 = vmatmul.mubr.bf16.gmra.mxu0 %v941
    %v1432 = vpop.f32.mrf.mxu0
    %v1433 = vadd.f32 0.0, %v1432
    %v1434 = vpop.f32.mrf.mxu0
    %v1435 = vpop.f32.mrf.mxu0
    %v1436 = vadd.f32 0.0, %v1435
    %v1437 = vpop.f32.mrf.mxu0
    %1438 = vmatprep.mubr.bf16.mxu0 0
    %1439 = vmatmul.mubr.bf16.gmra.mxu0 %v944
    %v1440 = vpop.f32.mrf.mxu0
    %v1441 = vadd.f32 0.0, %v1440
    %v1442 = vpop.f32.mrf.mxu0
    %v1443 = vpop.f32.mrf.mxu0
    %v1444 = vadd.f32 0.0, %v1443
    %v1445 = vpop.f32.mrf.mxu0
    %1446 = vmatprep.mubr.bf16.mxu0 0
    %1447 = vmatmul.mubr.bf16.gmra.mxu0 %v947
    %v1448 = vpop.f32.mrf.mxu0
    %v1449 = vadd.f32 0.0, %v1448
    %v1450 = vpop.f32.mrf.mxu0
    %v1451 = vpop.f32.mrf.mxu0
    %v1452 = vadd.f32 0.0, %v1451
    %v1453 = vpop.f32.mrf.mxu0
    %1454 = vmatprep.mubr.bf16.mxu0 0
    %1455 = vmatmul.mubr.bf16.gmra.mxu0 %v950
    %v1456 = vpop.f32.mrf.mxu0
    %v1457 = vadd.f32 0.0, %v1456
    %v1458 = vpop.f32.mrf.mxu0
    %v1459 = vpop.f32.mrf.mxu0
    %v1460 = vadd.f32 0.0, %v1459
    %v1461 = vpop.f32.mrf.mxu0
    %1462 = vmatprep.mubr.bf16.mxu0 0
    %1463 = vmatmul.mubr.bf16.gmra.mxu0 %v953
    %v1464 = vpop.f32.mrf.mxu0
    %v1465 = vadd.f32 0.0, %v1464
    %v1466 = vpop.f32.mrf.mxu0
    %v1467 = vpop.f32.mrf.mxu0
    %v1468 = vadd.f32 0.0, %v1467
    %v1469 = vpop.f32.mrf.mxu0
    %1470 = vmatprep.mubr.bf16.mxu0 0
    %1471 = vmatmul.mubr.bf16.gmra.mxu0 %v956
    %v1472 = vpop.f32.mrf.mxu0
    %v1473 = vadd.f32 0.0, %v1472
    %v1474 = vpop.f32.mrf.mxu0
    %v1475 = vpop.f32.mrf.mxu0
    %v1476 = vadd.f32 0.0, %v1475
    %v1477 = vpop.f32.mrf.mxu0
    %1478 = vmatprep.mubr.bf16.mxu0 0
    %1479 = vmatmul.mubr.bf16.gmra.mxu0 %v959
    %v1480 = vpop.f32.mrf.mxu0
    %v1481 = vadd.f32 0.0, %v1480
    %v1482 = vpop.f32.mrf.mxu0
    %v1483 = vpop.f32.mrf.mxu0
    %v1484 = vadd.f32 0.0, %v1483
    %v1485 = vpop.f32.mrf.mxu0
    %1486 = vmatprep.mubr.bf16.mxu0 0
    %1487 = vmatmul.mubr.bf16.gmra.mxu0 %v962
    %v1488 = vpop.f32.mrf.mxu0
    %v1489 = vadd.f32 0.0, %v1488
    %v1490 = vpop.f32.mrf.mxu0
    %v1491 = vpop.f32.mrf.mxu0
    %v1492 = vadd.f32 0.0, %v1491
    %v1493 = vpop.f32.mrf.mxu0
    %1494 = vmatprep.mubr.bf16.mxu0 0
    %1495 = vmatmul.mubr.bf16.gmra.mxu0 %v965
    %v1496 = vpop.f32.mrf.mxu0
    %v1497 = vadd.f32 0.0, %v1496
    %v1498 = vpop.f32.mrf.mxu0
    %v1499 = vpop.f32.mrf.mxu0
    %v1500 = vadd.f32 0.0, %v1499
    %v1501 = vpop.f32.mrf.mxu0
    %1502 = vmatprep.mubr.bf16.mxu0 0
    %1503 = vmatmul.mubr.bf16.gmra.mxu0 %v968
    %v1504 = vpop.f32.mrf.mxu0
    %v1505 = vadd.f32 0.0, %v1504
    %v1506 = vpop.f32.mrf.mxu0
    %v1507 = vpop.f32.mrf.mxu0
    %v1508 = vadd.f32 0.0, %v1507
    %v1509 = vpop.f32.mrf.mxu0
    %1510 = vmatprep.mubr.bf16.mxu0 0
    %1511 = vmatmul.mubr.bf16.gmra.mxu0 %v971
    %v1512 = vpop.f32.mrf.mxu0
    %v1513 = vadd.f32 0.0, %v1512
    %v1514 = vpop.f32.mrf.mxu0
    %v1515 = vpop.f32.mrf.mxu0
    %v1516 = vadd.f32 0.0, %v1515
    %v1517 = vpop.f32.mrf.mxu0
    %1518 = vmatprep.mubr.bf16.mxu0 0
    %1519 = vmatmul.mubr.bf16.gmra.mxu0 %v974
    %v1520 = vpop.f32.mrf.mxu0
    %v1521 = vadd.f32 0.0, %v1520
    %v1522 = vpop.f32.mrf.mxu0
    %v1523 = vpop.f32.mrf.mxu0
    %v1524 = vadd.f32 0.0, %v1523
    %v1525 = vpop.f32.mrf.mxu0
    %1526 = vmatprep.mubr.bf16.mxu0 0
    %1527 = vmatmul.mubr.bf16.gmra.mxu0 %v977
    %v1528 = vpop.f32.mrf.mxu0
    %v1529 = vadd.f32 0.0, %v1528
    %v1530 = vpop.f32.mrf.mxu0
    %v1531 = vpop.f32.mrf.mxu0
    %v1532 = vadd.f32 0.0, %v1531
    %v1533 = vpop.f32.mrf.mxu0
    %1534 = vmatprep.mubr.bf16.mxu0 0
    %1535 = vmatmul.mubr.bf16.gmra.mxu0 %v980
    %v1536 = vpop.f32.mrf.mxu0
    %v1537 = vadd.f32 0.0, %v1536
    %v1538 = vpop.f32.mrf.mxu0
    %v1539 = vpop.f32.mrf.mxu0
    %v1540 = vadd.f32 0.0, %v1539
    %v1541 = vpop.f32.mrf.mxu0
    %1542 = vmatprep.mubr.bf16.mxu0 0
    %1543 = vmatmul.mubr.bf16.gmra.mxu0 %v983
    %v1544 = vpop.f32.mrf.mxu0
    %v1545 = vadd.f32 0.0, %v1544
    %v1546 = vpop.f32.mrf.mxu0
    %v1547 = vpop.f32.mrf.mxu0
    %v1548 = vadd.f32 0.0, %v1547
    %v1549 = vpop.f32.mrf.mxu0
    %1550 = vmatprep.mubr.bf16.mxu0 0
    %1551 = vmatmul.mubr.bf16.gmra.mxu0 %v986
    %v1552 = vpop.f32.mrf.mxu0
    %v1553 = vadd.f32 0.0, %v1552
    %v1554 = vpop.f32.mrf.mxu0
    %v1555 = vpop.f32.mrf.mxu0
    %v1556 = vadd.f32 0.0, %v1555
    %v1557 = vpop.f32.mrf.mxu0
    %1558 = vmatprep.mubr.bf16.mxu0 0
    %1559 = vmatmul.mubr.bf16.gmra.mxu0 %v989
    %v1560 = vpop.f32.mrf.mxu0
    %v1561 = vadd.f32 0.0, %v1560
    %v1562 = vpop.f32.mrf.mxu0
    %v1563 = vpop.f32.mrf.mxu0
    %v1564 = vadd.f32 0.0, %v1563
    %v1565 = vpop.f32.mrf.mxu0
    %1566 = vmatprep.mubr.bf16.mxu0 0
    %1567 = vmatmul.mubr.bf16.gmra.mxu0 %v992
    %v1568 = vpop.f32.mrf.mxu0
    %v1569 = vadd.f32 0.0, %v1568
    %v1570 = vpop.f32.mrf.mxu0
    %v1571 = vpop.f32.mrf.mxu0
    %v1572 = vadd.f32 0.0, %v1571
    %v1573 = vpop.f32.mrf.mxu0
    %1574 = vmatprep.mubr.bf16.mxu0 0
    %1575 = vmatmul.mubr.bf16.gmra.mxu0 %v995
    %v1576 = vpop.f32.mrf.mxu0
    %v1577 = vadd.f32 0.0, %v1576
    %v1578 = vpop.f32.mrf.mxu0
    %v1579 = vpop.f32.mrf.mxu0
    %v1580 = vadd.f32 0.0, %v1579
    %v1581 = vpop.f32.mrf.mxu0
    %1582 = vmatprep.mubr.bf16.mxu0 0
    %1583 = vmatmul.mubr.bf16.gmra.mxu0 %v998
    %v1584 = vpop.f32.mrf.mxu0
    %v1585 = vadd.f32 0.0, %v1584
    %v1586 = vpop.f32.mrf.mxu0
    %v1587 = vpop.f32.mrf.mxu0
    %v1588 = vadd.f32 0.0, %v1587
    %v1589 = vpop.f32.mrf.mxu0
    %1590 = vmatprep.mubr.bf16.mxu0 0
    %1591 = vmatmul.mubr.bf16.gmra.mxu0 %v1001
    %v1592 = vpop.f32.mrf.mxu0
    %v1593 = vadd.f32 0.0, %v1592
    %v1594 = vpop.f32.mrf.mxu0
    %v1595 = vpop.f32.mrf.mxu0
    %v1596 = vadd.f32 0.0, %v1595
    %v1597 = vpop.f32.mrf.mxu0
    %1598 = vmatprep.mubr.bf16.mxu0 0
    %1599 = vmatmul.mubr.bf16.gmra.mxu0 %v1004
    %v1600 = vpop.f32.mrf.mxu0
    %v1601 = vadd.f32 0.0, %v1600
    %v1602 = vpop.f32.mrf.mxu0
    %v1603 = vpop.f32.mrf.mxu0
    %v1604 = vadd.f32 0.0, %v1603
    %v1605 = vpop.f32.mrf.mxu0
    %1606 = vmatprep.mubr.bf16.mxu0 0
    %1607 = vmatmul.mubr.bf16.gmra.mxu0 %v1007
    %v1608 = vpop.f32.mrf.mxu0
    %v1609 = vadd.f32 0.0, %v1608
    %v1610 = vpop.f32.mrf.mxu0
    %v1611 = vpop.f32.mrf.mxu0
    %v1612 = vadd.f32 0.0, %v1611
    %v1613 = vpop.f32.mrf.mxu0
    %1614 = vmatprep.mubr.bf16.mxu0 0
    %1615 = vmatmul.mubr.bf16.gmra.mxu0 %v1010
    %v1616 = vpop.f32.mrf.mxu0
    %v1617 = vadd.f32 0.0, %v1616
    %v1618 = vpop.f32.mrf.mxu0
    %v1619 = vpop.f32.mrf.mxu0
    %v1620 = vadd.f32 0.0, %v1619
    %v1621 = vpop.f32.mrf.mxu0
    %1622 = vmatprep.mubr.bf16.mxu0 0
    %1623 = vmatmul.mubr.bf16.gmra.mxu0 %v1013
    %v1624 = vpop.f32.mrf.mxu0
    %v1625 = vadd.f32 0.0, %v1624
    %v1626 = vpop.f32.mrf.mxu0
    %v1627 = vpop.f32.mrf.mxu0
    %v1628 = vadd.f32 0.0, %v1627
    %v1629 = vpop.f32.mrf.mxu0
    %1630 = vmatprep.mubr.bf16.mxu0 0
    %1631 = vmatmul.mubr.bf16.gmra.mxu0 %v1016
    %v1632 = vpop.f32.mrf.mxu0
    %v1633 = vadd.f32 0.0, %v1632
    %v1634 = vpop.f32.mrf.mxu0
    %v1635 = vpop.f32.mrf.mxu0
    %v1636 = vadd.f32 0.0, %v1635
    %v1637 = vpop.f32.mrf.mxu0
    %1638 = vmatprep.mubr.bf16.mxu0 0
    %1639 = vmatmul.mubr.bf16.gmra.mxu0 %v1019
    %v1640 = vpop.f32.mrf.mxu0
    %v1641 = vadd.f32 0.0, %v1640
    %v1642 = vpop.f32.mrf.mxu0
    %v1643 = vpop.f32.mrf.mxu0
    %v1644 = vadd.f32 0.0, %v1643
    %v1645 = vpop.f32.mrf.mxu0
    %1646 = vmatprep.mubr.bf16.mxu0 0
    %1647 = vmatmul.mubr.bf16.gmra.mxu0 %v1022
    %v1648 = vpop.f32.mrf.mxu0
    %v1649 = vadd.f32 0.0, %v1648
    %v1650 = vpop.f32.mrf.mxu0
    %v1651 = vpop.f32.mrf.mxu0
    %v1652 = vadd.f32 0.0, %v1651
    %v1653 = vpop.f32.mrf.mxu0
    %1654 = vmatprep.mubr.bf16.mxu0 0
    %1655 = vmatmul.mubr.bf16.gmra.mxu0 %v1025
    %v1656 = vpop.f32.mrf.mxu0
    %v1657 = vadd.f32 0.0, %v1656
    %v1658 = vpop.f32.mrf.mxu0
    %v1659 = vpop.f32.mrf.mxu0
    %v1660 = vadd.f32 0.0, %v1659
    %v1661 = vpop.f32.mrf.mxu0
    %1662 = vmatprep.mubr.bf16.mxu0 0
    %1663 = vmatmul.mubr.bf16.gmra.mxu0 %v1028
    %v1664 = vpop.f32.mrf.mxu0
    %v1665 = vadd.f32 0.0, %v1664
    %v1666 = vpop.f32.mrf.mxu0
    %v1667 = vpop.f32.mrf.mxu0
    %v1668 = vadd.f32 0.0, %v1667
    %v1669 = vpop.f32.mrf.mxu0
    %1670 = vmatprep.mubr.bf16.mxu0 0
    %1671 = vmatmul.mubr.bf16.gmra.mxu0 %v1031
    %v1672 = vpop.f32.mrf.mxu0
    %v1673 = vadd.f32 0.0, %v1672
    %v1674 = vpop.f32.mrf.mxu0
    %v1675 = vpop.f32.mrf.mxu0
    %v1676 = vadd.f32 0.0, %v1675
    %v1677 = vpop.f32.mrf.mxu0
    %1678 = vmatprep.mubr.bf16.mxu0 0
    %1679 = vmatmul.mubr.bf16.gmra.mxu0 %v1034
    %v1680 = vpop.f32.mrf.mxu0
    %v1681 = vadd.f32 0.0, %v1680
    %v1682 = vpop.f32.mrf.mxu0
    %v1683 = vpop.f32.mrf.mxu0
    %v1684 = vadd.f32 0.0, %v1683
    %v1685 = vpop.f32.mrf.mxu0
    %1686 = vmatprep.mubr.bf16.mxu0 0
    %1687 = vmatmul.mubr.bf16.gmra.mxu0 %v1037
    %v1688 = vpop.f32.mrf.mxu0
    %v1689 = vadd.f32 0.0, %v1688
    %v1690 = vpop.f32.mrf.mxu0
    %v1691 = vpop.f32.mrf.mxu0
    %v1692 = vadd.f32 0.0, %v1691
    %v1693 = vpop.f32.mrf.mxu0
    %1694 = vmatprep.mubr.bf16.mxu0 0
    %1695 = vmatmul.mubr.bf16.gmra.mxu0 %v1040
    %v1696 = vpop.f32.mrf.mxu0
    %v1697 = vadd.f32 0.0, %v1696
    %v1698 = vpop.f32.mrf.mxu0
    %v1699 = vpop.f32.mrf.mxu0
    %v1700 = vadd.f32 0.0, %v1699
    %v1701 = vpop.f32.mrf.mxu0
    %1702 = vmatprep.mubr.bf16.mxu0 0
    %1703 = vmatmul.mubr.bf16.gmra.mxu0 %v1043
    %v1704 = vpop.f32.mrf.mxu0
    %v1705 = vadd.f32 0.0, %v1704
    %v1706 = vpop.f32.mrf.mxu0
    %v1707 = vpop.f32.mrf.mxu0
    %v1708 = vadd.f32 0.0, %v1707
    %v1709 = vpop.f32.mrf.mxu0
    %1710 = vmatprep.mubr.bf16.mxu0 0
    %1711 = vmatmul.mubr.bf16.gmra.mxu0 %v1046
    %v1712 = vpop.f32.mrf.mxu0
    %v1713 = vadd.f32 0.0, %v1712
    %v1714 = vpop.f32.mrf.mxu0
    %v1715 = vpop.f32.mrf.mxu0
    %v1716 = vadd.f32 0.0, %v1715
    %v1717 = vpop.f32.mrf.mxu0
    %1718 = vmatprep.mubr.bf16.mxu0 0
    %1719 = vmatmul.mubr.bf16.gmra.mxu0 %v1049
    %v1720 = vpop.f32.mrf.mxu0
    %v1721 = vadd.f32 0.0, %v1720
    %v1722 = vpop.f32.mrf.mxu0
    %v1723 = vpop.f32.mrf.mxu0
    %v1724 = vadd.f32 0.0, %v1723
    %v1725 = vpop.f32.mrf.mxu0
    %1726 = vmatprep.mubr.bf16.mxu0 0
    %1727 = vmatmul.mubr.bf16.gmra.mxu0 %v1052
    %v1728 = vpop.f32.mrf.mxu0
    %v1729 = vadd.f32 0.0, %v1728
    %v1730 = vpop.f32.mrf.mxu0
    %v1731 = vpop.f32.mrf.mxu0
    %v1732 = vadd.f32 0.0, %v1731
    %v1733 = vpop.f32.mrf.mxu0
    %1734 = vmatprep.mubr.bf16.mxu0 0
    %1735 = vmatmul.mubr.bf16.gmra.mxu0 %v1055
    %v1736 = vpop.f32.mrf.mxu0
    %v1737 = vadd.f32 0.0, %v1736
    %v1738 = vpop.f32.mrf.mxu0
    %v1739 = vpop.f32.mrf.mxu0
    %v1740 = vadd.f32 0.0, %v1739
    %v1741 = vpop.f32.mrf.mxu0
    %1742 = vmatprep.mubr.bf16.mxu0 0
    %1743 = vmatmul.mubr.bf16.gmra.mxu0 %v1058
    %v1744 = vpop.f32.mrf.mxu0
    %v1745 = vadd.f32 0.0, %v1744
    %v1746 = vpop.f32.mrf.mxu0
    %v1747 = vpop.f32.mrf.mxu0
    %v1748 = vadd.f32 0.0, %v1747
    %v1749 = vpop.f32.mrf.mxu0
    %1750 = vmatprep.mubr.bf16.mxu0 0
    %1751 = vmatmul.mubr.bf16.gmra.mxu0 %v1061
    %v1752 = vpop.f32.mrf.mxu0
    %v1753 = vadd.f32 0.0, %v1752
    %v1754 = vpop.f32.mrf.mxu0
    %v1755 = vpop.f32.mrf.mxu0
    %v1756 = vadd.f32 0.0, %v1755
    %v1757 = vpop.f32.mrf.mxu0
    %1758 = vmatprep.mubr.bf16.mxu0 0
    %1759 = vmatmul.mubr.bf16.gmra.mxu0 %v1064
    %v1760 = vpop.f32.mrf.mxu0
    %v1761 = vadd.f32 0.0, %v1760
    %v1762 = vpop.f32.mrf.mxu0
    %v1763 = vpop.f32.mrf.mxu0
    %v1764 = vadd.f32 0.0, %v1763
    %v1765 = vpop.f32.mrf.mxu0
    %1766 = vmatprep.mubr.bf16.mxu0 0
    %1767 = vmatmul.mubr.bf16.gmra.mxu0 %v1067
    %v1768 = vpop.f32.mrf.mxu0
    %v1769 = vadd.f32 0.0, %v1768
    %v1770 = vpop.f32.mrf.mxu0
    %v1771 = vpop.f32.mrf.mxu0
    %v1772 = vadd.f32 0.0, %v1771
    %v1773 = vpop.f32.mrf.mxu0
    %1774 = vmatprep.mubr.bf16.mxu0 0
    %1775 = vmatmul.mubr.bf16.gmra.mxu0 %v1070
    %v1776 = vpop.f32.mrf.mxu0
    %v1777 = vadd.f32 0.0, %v1776
    %v1778 = vpop.f32.mrf.mxu0
    %v1779 = vpop.f32.mrf.mxu0
    %v1780 = vadd.f32 0.0, %v1779
    %v1781 = vpop.f32.mrf.mxu0
    %1782 = vmatprep.mubr.bf16.mxu0 0
    %1783 = vmatmul.mubr.bf16.gmra.mxu0 %v1073
    %v1784 = vpop.f32.mrf.mxu0
    %v1785 = vadd.f32 0.0, %v1784
    %v1786 = vpop.f32.mrf.mxu0
    %v1787 = vpop.f32.mrf.mxu0
    %v1788 = vadd.f32 0.0, %v1787
    %v1789 = vpop.f32.mrf.mxu0
    %1790 = vmatprep.mubr.bf16.mxu0 0
    %1791 = vmatmul.mubr.bf16.gmra.mxu0 %v1076
    %v1792 = vpop.f32.mrf.mxu0
    %v1793 = vadd.f32 0.0, %v1792
    %v1794 = vpop.f32.mrf.mxu0
    %v1795 = vpop.f32.mrf.mxu0
    %v1796 = vadd.f32 0.0, %v1795
    %v1797 = vpop.f32.mrf.mxu0
    %1798 = vmatprep.mubr.bf16.mxu0 0
    %1799 = vmatmul.mubr.bf16.gmra.mxu0 %v1079
    %v1800 = vpop.f32.mrf.mxu0
    %v1801 = vadd.f32 0.0, %v1800
    %v1802 = vpop.f32.mrf.mxu0
    %v1803 = vpop.f32.mrf.mxu0
    %v1804 = vadd.f32 0.0, %v1803
    %v1805 = vpop.f32.mrf.mxu0
    %1806 = vmatprep.mubr.bf16.mxu0 0
    %1807 = vmatmul.mubr.bf16.gmra.mxu0 %v1082
    %v1808 = vpop.f32.mrf.mxu0
    %v1809 = vadd.f32 0.0, %v1808
    %v1810 = vpop.f32.mrf.mxu0
    %v1811 = vpop.f32.mrf.mxu0
    %v1812 = vadd.f32 0.0, %v1811
    %v1813 = vpop.f32.mrf.mxu0
    %1814 = vmatprep.mubr.bf16.mxu0 0
    %1815 = vmatmul.mubr.bf16.gmra.mxu0 %v1085
    %v1816 = vpop.f32.mrf.mxu0
    %v1817 = vadd.f32 0.0, %v1816
    %v1818 = vpop.f32.mrf.mxu0
    %v1819 = vpop.f32.mrf.mxu0
    %v1820 = vadd.f32 0.0, %v1819
    %v1821 = vpop.f32.mrf.mxu0
    %1822 = vmatprep.mubr.bf16.mxu0 0
    %1823 = vmatmul.mubr.bf16.gmra.mxu0 %v1088
    %v1824 = vpop.f32.mrf.mxu0
    %v1825 = vadd.f32 0.0, %v1824
    %v1826 = vpop.f32.mrf.mxu0
    %v1827 = vpop.f32.mrf.mxu0
    %v1828 = vadd.f32 0.0, %v1827
    %v1829 = vpop.f32.mrf.mxu0
    %1830 = vmatprep.mubr.bf16.mxu0 0
    %1831 = vmatmul.mubr.bf16.gmra.mxu0 %v1091
    %v1832 = vpop.f32.mrf.mxu0
    %v1833 = vadd.f32 0.0, %v1832
    %v1834 = vpop.f32.mrf.mxu0
    %v1835 = vpop.f32.mrf.mxu0
    %v1836 = vadd.f32 0.0, %v1835
    %v1837 = vpop.f32.mrf.mxu0
    %1838 = vmatprep.mubr.bf16.mxu0 0
    %1839 = vmatmul.mubr.bf16.gmra.mxu0 %v1094
    %v1840 = vpop.f32.mrf.mxu0
    %v1841 = vadd.f32 0.0, %v1840
    %v1842 = vpop.f32.mrf.mxu0
    %v1843 = vpop.f32.mrf.mxu0
    %v1844 = vadd.f32 0.0, %v1843
    %v1845 = vpop.f32.mrf.mxu0
    %1846 = vmatprep.mubr.bf16.mxu0 0
    %1847 = vmatmul.mubr.bf16.gmra.mxu0 %v1097
    %v1848 = vpop.f32.mrf.mxu0
    %v1849 = vadd.f32 0.0, %v1848
    %v1850 = vpop.f32.mrf.mxu0
    %v1851 = vpop.f32.mrf.mxu0
    %v1852 = vadd.f32 0.0, %v1851
    %v1853 = vpop.f32.mrf.mxu0
    %1854 = vmatprep.mubr.bf16.mxu0 0
    %1855 = vmatmul.mubr.bf16.gmra.mxu0 %v1100
    %v1856 = vpop.f32.mrf.mxu0
    %v1857 = vadd.f32 0.0, %v1856
    %v1858 = vpop.f32.mrf.mxu0
    %v1859 = vpop.f32.mrf.mxu0
    %v1860 = vadd.f32 0.0, %v1859
    %v1861 = vpop.f32.mrf.mxu0
    %1862 = vmatprep.mubr.bf16.mxu0 0
    %1863 = vmatmul.mubr.bf16.gmra.mxu0 %v1103
    %v1864 = vpop.f32.mrf.mxu0
    %v1865 = vadd.f32 0.0, %v1864
    %v1866 = vpop.f32.mrf.mxu0
    %v1867 = vpop.f32.mrf.mxu0
    %v1868 = vadd.f32 0.0, %v1867
    %v1869 = vpop.f32.mrf.mxu0
    %1870 = vmatprep.mubr.bf16.mxu0 0
    %1871 = vmatmul.mubr.bf16.gmra.mxu0 %v1106
    %v1872 = vpop.f32.mrf.mxu0
    %v1873 = vadd.f32 0.0, %v1872
    %v1874 = vpop.f32.mrf.mxu0
    %v1875 = vpop.f32.mrf.mxu0
    %v1876 = vadd.f32 0.0, %v1875
    %v1877 = vpop.f32.mrf.mxu0
    %1878 = vmatprep.mubr.bf16.mxu0 0
    %1879 = vmatmul.mubr.bf16.gmra.mxu0 %v1109
    %v1880 = vpop.f32.mrf.mxu0
    %v1881 = vadd.f32 0.0, %v1880
    %v1882 = vpop.f32.mrf.mxu0
    %v1883 = vpop.f32.mrf.mxu0
    %v1884 = vadd.f32 0.0, %v1883
    %v1885 = vpop.f32.mrf.mxu0
    %1886 = vmatprep.mubr.bf16.mxu0 0
    %1887 = vmatmul.mubr.bf16.gmra.mxu0 %v1112
    %v1888 = vpop.f32.mrf.mxu0
    %v1889 = vadd.f32 0.0, %v1888
    %v1890 = vpop.f32.mrf.mxu0
    %v1891 = vpop.f32.mrf.mxu0
    %v1892 = vadd.f32 0.0, %v1891
    %v1893 = vpop.f32.mrf.mxu0
    %1894 = vmatprep.mubr.bf16.mxu0 0
    %1895 = vmatmul.mubr.bf16.gmra.mxu0 %v1115
    %v1896 = vpop.f32.mrf.mxu0
    %v1897 = vadd.f32 0.0, %v1896
    %v1898 = vpop.f32.mrf.mxu0
    %v1899 = vpop.f32.mrf.mxu0
    %v1900 = vadd.f32 0.0, %v1899
    %v1901 = vpop.f32.mrf.mxu0
    %1902 = vmatprep.mubr.bf16.mxu0 0
    %1903 = vmatmul.mubr.bf16.gmra.mxu0 %v1118
    %v1904 = vpop.f32.mrf.mxu0
    %v1905 = vadd.f32 0.0, %v1904
    %v1906 = vpop.f32.mrf.mxu0
    %v1907 = vpop.f32.mrf.mxu0
    %v1908 = vadd.f32 0.0, %v1907
    %v1909 = vpop.f32.mrf.mxu0
    %1910 = vmatprep.mubr.bf16.mxu0 0
    %1911 = vmatmul.mubr.bf16.gmra.mxu0 %v1121
    %v1912 = vpop.f32.mrf.mxu0
    %v1913 = vadd.f32 0.0, %v1912
    %v1914 = vpop.f32.mrf.mxu0
    %v1915 = vpop.f32.mrf.mxu0
    %v1916 = vadd.f32 0.0, %v1915
    %v1917 = vpop.f32.mrf.mxu0
    %1918 = vmatprep.mubr.bf16.mxu0 0
    %1919 = vmatmul.mubr.bf16.gmra.mxu0 %v1124
    %v1920 = vpop.f32.mrf.mxu0
    %v1921 = vadd.f32 0.0, %v1920
    %v1922 = vpop.f32.mrf.mxu0
    %v1923 = vpop.f32.mrf.mxu0
    %v1924 = vadd.f32 0.0, %v1923
    %v1925 = vpop.f32.mrf.mxu0
    %1926 = vmatprep.mubr.bf16.mxu0 0
    %1927 = vmatmul.mubr.bf16.gmra.mxu0 %v1127
    %v1928 = vpop.f32.mrf.mxu0
    %v1929 = vadd.f32 0.0, %v1928
    %v1930 = vpop.f32.mrf.mxu0
    %v1931 = vpop.f32.mrf.mxu0
    %v1932 = vadd.f32 0.0, %v1931
    %v1933 = vpop.f32.mrf.mxu0
    %1934 = vmatprep.mubr.bf16.mxu0 0
    %1935 = vmatmul.mubr.bf16.gmra.mxu0 %v1130
    %v1936 = vpop.f32.mrf.mxu0
    %v1937 = vadd.f32 0.0, %v1936
    %v1938 = vpop.f32.mrf.mxu0
    %v1939 = vpop.f32.mrf.mxu0
    %v1940 = vadd.f32 0.0, %v1939
    %v1941 = vpop.f32.mrf.mxu0
    %1942 = vmatprep.mubr.bf16.mxu0 0
    %1943 = vmatmul.mubr.bf16.gmra.mxu0 %v1133
    %v1944 = vpop.f32.mrf.mxu0
    %v1945 = vadd.f32 0.0, %v1944
    %v1946 = vpop.f32.mrf.mxu0
    %v1947 = vpop.f32.mrf.mxu0
    %v1948 = vadd.f32 0.0, %v1947
    %v1949 = vpop.f32.mrf.mxu0
    %1950 = vmatprep.mubr.bf16.mxu0 0
    %1951 = vmatmul.mubr.bf16.gmra.mxu0 %v1136
    %v1952 = vpop.f32.mrf.mxu0
    %v1953 = vadd.f32 0.0, %v1952
    %v1954 = vpop.f32.mrf.mxu0
    %v1955 = vpop.f32.mrf.mxu0
    %v1956 = vadd.f32 0.0, %v1955
    %v1957 = vpop.f32.mrf.mxu0
    %1958 = vmatprep.mubr.bf16.mxu0 0
    %1959 = vmatmul.mubr.bf16.gmra.mxu0 %v1139
    %v1960 = vpop.f32.mrf.mxu0
    %v1961 = vadd.f32 0.0, %v1960
    %v1962 = vpop.f32.mrf.mxu0
    %v1963 = vpop.f32.mrf.mxu0
    %v1964 = vadd.f32 0.0, %v1963
    %v1965 = vpop.f32.mrf.mxu0
    %1966 = vmatprep.mubr.bf16.mxu0 0
    %1967 = vmatmul.mubr.bf16.gmra.mxu0 %v1142
    %v1968 = vpop.f32.mrf.mxu0
    %v1969 = vadd.f32 0.0, %v1968
    %v1970 = vpop.f32.mrf.mxu0
    %v1971 = vpop.f32.mrf.mxu0
    %v1972 = vadd.f32 0.0, %v1971
    %v1973 = vpop.f32.mrf.mxu0
    %1974 = vmatprep.mubr.bf16.mxu0 0
    %1975 = vmatmul.mubr.bf16.gmra.mxu0 %v1145
    %v1976 = vpop.f32.mrf.mxu0
    %v1977 = vadd.f32 0.0, %v1976
    %v1978 = vpop.f32.mrf.mxu0
    %v1979 = vpop.f32.mrf.mxu0
    %v1980 = vadd.f32 0.0, %v1979
    %v1981 = vpop.f32.mrf.mxu0
    %1982 = vmatprep.mubr.bf16.mxu0 0
    %1983 = vmatmul.mubr.bf16.gmra.mxu0 %v1148
    %v1984 = vpop.f32.mrf.mxu0
    %v1985 = vadd.f32 0.0, %v1984
    %v1986 = vpop.f32.mrf.mxu0
    %v1987 = vpop.f32.mrf.mxu0
    %v1988 = vadd.f32 0.0, %v1987
    %v1989 = vpop.f32.mrf.mxu0
    %1990 = vmatprep.mubr.bf16.mxu0 0
    %1991 = vmatmul.mubr.bf16.gmra.mxu0 %v1151
    %v1992 = vpop.f32.mrf.mxu0
    %v1993 = vadd.f32 0.0, %v1992
    %v1994 = vpop.f32.mrf.mxu0
    %v1995 = vpop.f32.mrf.mxu0
    %v1996 = vadd.f32 0.0, %v1995
    %v1997 = vpop.f32.mrf.mxu0
    %1998 = vmatprep.mubr.bf16.mxu0 0
    %1999 = vmatmul.mubr.bf16.gmra.mxu0 %v1154
    %v2000 = vpop.f32.mrf.mxu0
    %v2001 = vadd.f32 0.0, %v2000
    %v2002 = vpop.f32.mrf.mxu0
    %v2003 = vpop.f32.mrf.mxu0
    %v2004 = vadd.f32 0.0, %v2003
    %v2005 = vpop.f32.mrf.mxu0
    %2006 = vmatprep.mubr.bf16.mxu0 0
    %2007 = vmatmul.mubr.bf16.gmra.mxu0 %v1157
    %v2008 = vpop.f32.mrf.mxu0
    %v2009 = vadd.f32 0.0, %v2008
    %v2010 = vpop.f32.mrf.mxu0
    %v2011 = vpop.f32.mrf.mxu0
    %v2012 = vadd.f32 0.0, %v2011
    %v2013 = vpop.f32.mrf.mxu0
    %2014 = vmatprep.mubr.bf16.mxu0 0
    %2015 = vmatmul.mubr.bf16.gmra.mxu0 %v1160
    %v2016 = vpop.f32.mrf.mxu0
    %v2017 = vadd.f32 0.0, %v2016
    %v2018 = vpop.f32.mrf.mxu0
    %v2019 = vpop.f32.mrf.mxu0
    %v2020 = vadd.f32 0.0, %v2019
    %v2021 = vpop.f32.mrf.mxu0
    %2022 = vmatprep.mubr.bf16.mxu0 0
    %2023 = vmatmul.mubr.bf16.gmra.mxu0 %v1163
    %v2024 = vpop.f32.mrf.mxu0
    %v2025 = vadd.f32 0.0, %v2024
    %v2026 = vpop.f32.mrf.mxu0
    %v2027 = vpop.f32.mrf.mxu0
    %v2028 = vadd.f32 0.0, %v2027
    %v2029 = vpop.f32.mrf.mxu0
    %2030 = vmatprep.mubr.bf16.mxu0 0
    %2031 = vmatmul.mubr.bf16.gmra.mxu0 %v1166
    %v2032 = vpop.f32.mrf.mxu0
    %v2033 = vadd.f32 0.0, %v2032
    %v2034 = vpop.f32.mrf.mxu0
    %v2035 = vpop.f32.mrf.mxu0
    %v2036 = vadd.f32 0.0, %v2035
    %v2037 = vpop.f32.mrf.mxu0
    %2038 = vmatprep.mubr.bf16.mxu0 0
    %2039 = vmatmul.mubr.bf16.gmra.mxu0 %v1169
    %v2040 = vpop.f32.mrf.mxu0
    %v2041 = vadd.f32 0.0, %v2040
    %v2042 = vpop.f32.mrf.mxu0
    %v2043 = vpop.f32.mrf.mxu0
    %v2044 = vadd.f32 0.0, %v2043
    %v2045 = vpop.f32.mrf.mxu0
    %2046 = vmatprep.mubr.bf16.mxu0 0
    %2047 = vmatmul.mubr.bf16.gmra.mxu0 %v1172
    %v2048 = vpop.f32.mrf.mxu0
    %v2049 = vadd.f32 0.0, %v2048
    %v2050 = vpop.f32.mrf.mxu0
    %v2051 = vpop.f32.mrf.mxu0
    %v2052 = vadd.f32 0.0, %v2051
    %v2053 = vpop.f32.mrf.mxu0
    %2054 = vmatprep.mubr.bf16.mxu0 0
    %2055 = vmatmul.mubr.bf16.gmra.mxu0 %v1175
    %v2056 = vpop.f32.mrf.mxu0
    %v2057 = vadd.f32 0.0, %v2056
    %v2058 = vpop.f32.mrf.mxu0
    %v2059 = vpop.f32.mrf.mxu0
    %v2060 = vadd.f32 0.0, %v2059
    %v2061 = vpop.f32.mrf.mxu0
    %2062 = vmatprep.mubr.bf16.mxu0 0
    %2063 = vmatmul.mubr.bf16.gmra.mxu0 %v1178
    %v2064 = vpop.f32.mrf.mxu0
    %v2065 = vadd.f32 0.0, %v2064
    %v2066 = vpop.f32.mrf.mxu0
    %v2067 = vpop.f32.mrf.mxu0
    %v2068 = vadd.f32 0.0, %v2067
    %v2069 = vpop.f32.mrf.mxu0
    %2070 = vmatprep.mubr.bf16.mxu0 0
    %2071 = vmatmul.mubr.bf16.gmra.mxu0 %v1181
    %v2072 = vpop.f32.mrf.mxu0
    %v2073 = vadd.f32 0.0, %v2072
    %v2074 = vpop.f32.mrf.mxu0
    %v2075 = vpop.f32.mrf.mxu0
    %v2076 = vadd.f32 0.0, %v2075
    %v2077 = vpop.f32.mrf.mxu0
    %2078 = vmatprep.mubr.bf16.mxu0 0
    %2079 = vmatmul.mubr.bf16.gmra.mxu0 %v1184
    %v2080 = vpop.f32.mrf.mxu0
    %v2081 = vadd.f32 0.0, %v2080
    %v2082 = vpop.f32.mrf.mxu0
    %v2083 = vpop.f32.mrf.mxu0
    %v2084 = vadd.f32 0.0, %v2083
    %v2085 = vpop.f32.mrf.mxu0
    %2086 = vmatprep.mubr.bf16.mxu0 0
    %2087 = vmatmul.mubr.bf16.gmra.mxu0 %v1187
    %v2088 = vpop.f32.mrf.mxu0
    %v2089 = vadd.f32 0.0, %v2088
    %v2090 = vpop.f32.mrf.mxu0
    %v2091 = vpop.f32.mrf.mxu0
    %v2092 = vadd.f32 0.0, %v2091
    %v2093 = vpop.f32.mrf.mxu0
    %2094 = vmatprep.mubr.bf16.mxu0 0
    %2095 = vmatmul.mubr.bf16.gmra.mxu0 %v1190
    %v2096 = vpop.f32.mrf.mxu0
    %v2097 = vadd.f32 0.0, %v2096
    %v2098 = vpop.f32.mrf.mxu0
    %v2099 = vpop.f32.mrf.mxu0
    %v2100 = vadd.f32 0.0, %v2099
    %v2101 = vpop.f32.mrf.mxu0
    %2102 = vmatprep.mubr.bf16.mxu0 0
    %2103 = vmatmul.mubr.bf16.gmra.mxu0 %v1193
    %v2104 = vpop.f32.mrf.mxu0
    %v2105 = vadd.f32 0.0, %v2104
    %v2106 = vpop.f32.mrf.mxu0
    %v2107 = vpop.f32.mrf.mxu0
    %v2108 = vadd.f32 0.0, %v2107
    %v2109 = vpop.f32.mrf.mxu0
    %2110 = vmatprep.mubr.bf16.mxu0 0
    %2111 = vmatmul.mubr.bf16.gmra.mxu0 %v1196
    %v2112 = vpop.f32.mrf.mxu0
    %v2113 = vadd.f32 0.0, %v2112
    %v2114 = vpop.f32.mrf.mxu0
    %v2115 = vpop.f32.mrf.mxu0
    %v2116 = vadd.f32 0.0, %v2115
    %v2117 = vpop.f32.mrf.mxu0
    %2118 = vmatprep.mubr.bf16.mxu0 0
    %2119 = vmatmul.mubr.bf16.gmra.mxu0 %v1199
    %v2120 = vpop.f32.mrf.mxu0
    %v2121 = vadd.f32 0.0, %v2120
    %v2122 = vpop.f32.mrf.mxu0
    %v2123 = vpop.f32.mrf.mxu0
    %v2124 = vadd.f32 0.0, %v2123
    %v2125 = vpop.f32.mrf.mxu0
    %2126 = vmatprep.mubr.bf16.mxu0 0
    %2127 = vmatmul.mubr.bf16.gmra.mxu0 %v1202
    %v2128 = vpop.f32.mrf.mxu0
    %v2129 = vadd.f32 0.0, %v2128
    %v2130 = vpop.f32.mrf.mxu0
    %v2131 = vpop.f32.mrf.mxu0
    %v2132 = vadd.f32 0.0, %v2131
    %v2133 = vpop.f32.mrf.mxu0
    %2134 = vmatprep.mubr.bf16.mxu0 0
    %2135 = vmatmul.mubr.bf16.gmra.mxu0 %v1205
    %v2136 = vpop.f32.mrf.mxu0
    %v2137 = vadd.f32 0.0, %v2136
    %v2138 = vpop.f32.mrf.mxu0
    %v2139 = vpop.f32.mrf.mxu0
    %v2140 = vadd.f32 0.0, %v2139
    %v2141 = vpop.f32.mrf.mxu0
    %2142 = vmatprep.mubr.bf16.mxu0 0
    %2143 = vmatmul.mubr.bf16.gmra.mxu0 %v1208
    %v2144 = vpop.f32.mrf.mxu0
    %v2145 = vadd.f32 0.0, %v2144
    %v2146 = vpop.f32.mrf.mxu0
    %v2147 = vpop.f32.mrf.mxu0
    %v2148 = vadd.f32 0.0, %v2147
    %v2149 = vpop.f32.mrf.mxu0
    %2150 = vmatprep.mubr.bf16.mxu0 0
    %2151 = vmatmul.mubr.bf16.gmra.mxu0 %v1211
    %v2152 = vpop.f32.mrf.mxu0
    %v2153 = vadd.f32 0.0, %v2152
    %v2154 = vpop.f32.mrf.mxu0
    %v2155 = vpop.f32.mrf.mxu0
    %v2156 = vadd.f32 0.0, %v2155
    %v2157 = vpop.f32.mrf.mxu0
    %2158 = vmatprep.mubr.bf16.mxu0 0
    %2159 = vmatmul.mubr.bf16.gmra.mxu0 %v1214
    %v2160 = vpop.f32.mrf.mxu0
    %v2161 = vadd.f32 0.0, %v2160
    %v2162 = vpop.f32.mrf.mxu0
    %v2163 = vpop.f32.mrf.mxu0
    %v2164 = vadd.f32 0.0, %v2163
    %v2165 = vpop.f32.mrf.mxu0
    %2166 = vmatprep.mubr.bf16.mxu0 0
    %2167 = vmatmul.mubr.bf16.gmra.mxu0 %v1217
    %v2168 = vpop.f32.mrf.mxu0
    %v2169 = vadd.f32 0.0, %v2168
    %v2170 = vpop.f32.mrf.mxu0
    %v2171 = vpop.f32.mrf.mxu0
    %v2172 = vadd.f32 0.0, %v2171
    %v2173 = vpop.f32.mrf.mxu0
    %2174 = vmatprep.mubr.bf16.mxu0 0
    %2175 = vmatmul.mubr.bf16.gmra.mxu0 %v1220
    %v2176 = vpop.f32.mrf.mxu0
    %v2177 = vadd.f32 0.0, %v2176
    %v2178 = vpop.f32.mrf.mxu0
    %v2179 = vpop.f32.mrf.mxu0
    %v2180 = vadd.f32 0.0, %v2179
    %v2181 = vpop.f32.mrf.mxu0
    %2182 = vmatprep.mubr.bf16.mxu0 0
    %2183 = vmatmul.mubr.bf16.gmra.mxu0 %v1223
    %v2184 = vpop.f32.mrf.mxu0
    %v2185 = vadd.f32 0.0, %v2184
    %v2186 = vpop.f32.mrf.mxu0
    %v2187 = vpop.f32.mrf.mxu0
    %v2188 = vadd.f32 0.0, %v2187
    %v2189 = vpop.f32.mrf.mxu0
    %2190 = vmatprep.mubr.bf16.mxu0 0
    %2191 = vmatmul.mubr.bf16.gmra.mxu0 %v1226
    %v2192 = vpop.f32.mrf.mxu0
    %v2193 = vadd.f32 0.0, %v2192
    %v2194 = vpop.f32.mrf.mxu0
    %v2195 = vpop.f32.mrf.mxu0
    %v2196 = vadd.f32 0.0, %v2195
    %v2197 = vpop.f32.mrf.mxu0
    %2198 = vmatprep.mubr.bf16.mxu0 0
    %2199 = vmatmul.mubr.bf16.gmra.mxu0 %v1229
    %v2200 = vpop.f32.mrf.mxu0
    %v2201 = vadd.f32 0.0, %v2200
    %v2202 = vpop.f32.mrf.mxu0
    %v2203 = vpop.f32.mrf.mxu0
    %v2204 = vadd.f32 0.0, %v2203
    %v2205 = vpop.f32.mrf.mxu0
    %2206 = vmatprep.mubr.bf16.mxu0 0
    %2207 = vmatmul.mubr.bf16.gmra.mxu0 %v1232
    %v2208 = vpop.f32.mrf.mxu0
    %v2209 = vadd.f32 0.0, %v2208
    %v2210 = vpop.f32.mrf.mxu0
    %v2211 = vpop.f32.mrf.mxu0
    %v2212 = vadd.f32 0.0, %v2211
    %v2213 = vpop.f32.mrf.mxu0
    %2214 = vmatprep.mubr.bf16.mxu0 0
    %2215 = vmatmul.mubr.bf16.gmra.mxu0 %v1235
    %v2216 = vpop.f32.mrf.mxu0
    %v2217 = vadd.f32 0.0, %v2216
    %v2218 = vpop.f32.mrf.mxu0
    %v2219 = vpop.f32.mrf.mxu0
    %v2220 = vadd.f32 0.0, %v2219
    %v2221 = vpop.f32.mrf.mxu0
    %2222 = vmatprep.mubr.bf16.mxu0 0
    %2223 = vmatmul.mubr.bf16.gmra.mxu0 %v1238
    %v2224 = vpop.f32.mrf.mxu0
    %v2225 = vadd.f32 0.0, %v2224
    %v2226 = vpop.f32.mrf.mxu0
    %v2227 = vpop.f32.mrf.mxu0
    %v2228 = vadd.f32 0.0, %v2227
    %v2229 = vpop.f32.mrf.mxu0
    %2230 = vmatprep.mubr.bf16.mxu0 0
    %2231 = vmatmul.mubr.bf16.gmra.mxu0 %v1241
    %v2232 = vpop.f32.mrf.mxu0
    %v2233 = vadd.f32 0.0, %v2232
    %v2234 = vpop.f32.mrf.mxu0
    %v2235 = vpop.f32.mrf.mxu0
    %v2236 = vadd.f32 0.0, %v2235
    %v2237 = vpop.f32.mrf.mxu0
    %2238 = vmatprep.mubr.bf16.mxu0 0
    %2239 = vmatmul.mubr.bf16.gmra.mxu0 %v1244
    %v2240 = vpop.f32.mrf.mxu0
    %v2241 = vadd.f32 0.0, %v2240
    %v2242 = vpop.f32.mrf.mxu0
    %v2243 = vpop.f32.mrf.mxu0
    %v2244 = vadd.f32 0.0, %v2243
    %v2245 = vpop.f32.mrf.mxu0
    %2246 = vmatprep.mubr.bf16.mxu0 0
    %2247 = vmatmul.mubr.bf16.gmra.mxu0 %v1247
    %v2248 = vpop.f32.mrf.mxu0
    %v2249 = vadd.f32 0.0, %v2248
    %v2250 = vpop.f32.mrf.mxu0
    %v2251 = vpop.f32.mrf.mxu0
    %v2252 = vadd.f32 0.0, %v2251
    %v2253 = vpop.f32.mrf.mxu0
    %2254 = vmatprep.mubr.bf16.mxu0 0
    %2255 = vmatmul.mubr.bf16.gmra.mxu0 %v1250
    %v2256 = vpop.f32.mrf.mxu0
    %v2257 = vadd.f32 0.0, %v2256
    %v2258 = vpop.f32.mrf.mxu0
    %v2259 = vpop.f32.mrf.mxu0
    %v2260 = vadd.f32 0.0, %v2259
    %v2261 = vpop.f32.mrf.mxu0
    %2262 = vmatprep.mubr.bf16.mxu0 0
    %2263 = vmatmul.mubr.bf16.gmra.mxu0 %v1253
    %v2264 = vpop.f32.mrf.mxu0
    %v2265 = vadd.f32 0.0, %v2264
    %v2266 = vpop.f32.mrf.mxu0
    %v2267 = vpop.f32.mrf.mxu0
    %v2268 = vadd.f32 0.0, %v2267
    %v2269 = vpop.f32.mrf.mxu0
    %2270 = vmatprep.mubr.bf16.mxu0 0
    %2271 = vmatmul.mubr.bf16.gmra.mxu0 %v1256
    %v2272 = vpop.f32.mrf.mxu0
    %v2273 = vadd.f32 0.0, %v2272
    %v2274 = vpop.f32.mrf.mxu0
    %v2275 = vpop.f32.mrf.mxu0
    %v2276 = vadd.f32 0.0, %v2275
    %v2277 = vpop.f32.mrf.mxu0
    %2278 = vmatprep.mubr.bf16.mxu0 0
    %2279 = vmatmul.mubr.bf16.gmra.mxu0 %v1259
    %v2280 = vpop.f32.mrf.mxu0
    %v2281 = vadd.f32 0.0, %v2280
    %v2282 = vpop.f32.mrf.mxu0
    %v2283 = vpop.f32.mrf.mxu0
    %v2284 = vadd.f32 0.0, %v2283
    %v2285 = vpop.f32.mrf.mxu0
    %2286 = vmatprep.mubr.bf16.mxu0 0
    %2287 = vmatmul.mubr.bf16.gmra.mxu0 %v1262
    %v2288 = vpop.f32.mrf.mxu0
    %v2289 = vadd.f32 0.0, %v2288
    %v2290 = vpop.f32.mrf.mxu0
    %v2291 = vpop.f32.mrf.mxu0
    %v2292 = vadd.f32 0.0, %v2291
    %v2293 = vpop.f32.mrf.mxu0
    %2294 = vmatprep.mubr.bf16.mxu0 0
    %2295 = vmatmul.mubr.bf16.gmra.mxu0 %v1265
    %v2296 = vpop.f32.mrf.mxu0
    %v2297 = vadd.f32 0.0, %v2296
    %v2298 = vpop.f32.mrf.mxu0
    %v2299 = vpop.f32.mrf.mxu0
    %v2300 = vadd.f32 0.0, %v2299
    %v2301 = vpop.f32.mrf.mxu0
    %2302 = vmatprep.mubr.bf16.mxu0 0
    %2303 = vmatmul.mubr.bf16.gmra.mxu0 %v1268
    %v2304 = vpop.f32.mrf.mxu0
    %v2305 = vadd.f32 0.0, %v2304
    %v2306 = vpop.f32.mrf.mxu0
    %v2307 = vpop.f32.mrf.mxu0
    %v2308 = vadd.f32 0.0, %v2307
    %v2309 = vpop.f32.mrf.mxu0
    %2310 = vmatprep.mubr.bf16.mxu0 0
    %2311 = vmatmul.mubr.bf16.gmra.mxu0 %v1271
    %v2312 = vpop.f32.mrf.mxu0
    %v2313 = vadd.f32 0.0, %v2312
    %v2314 = vpop.f32.mrf.mxu0
    %v2315 = vpop.f32.mrf.mxu0
    %v2316 = vadd.f32 0.0, %v2315
    %v2317 = vpop.f32.mrf.mxu0
    %2318 = vmatprep.mubr.bf16.mxu0 0
    %2319 = vmatmul.mubr.bf16.gmra.mxu0 %v1274
    %v2320 = vpop.f32.mrf.mxu0
    %v2321 = vadd.f32 0.0, %v2320
    %v2322 = vpop.f32.mrf.mxu0
    %v2323 = vpop.f32.mrf.mxu0
    %v2324 = vadd.f32 0.0, %v2323
    %v2325 = vpop.f32.mrf.mxu0
    %2326 = vmatprep.mubr.bf16.mxu0 0
    %2327 = vmatmul.mubr.bf16.gmra.mxu0 %v1277
    %v2328 = vpop.f32.mrf.mxu0
    %v2329 = vadd.f32 0.0, %v2328
    %v2330 = vpop.f32.mrf.mxu0
    %v2331 = vpop.f32.mrf.mxu0
    %v2332 = vadd.f32 0.0, %v2331
    %v2333 = vpop.f32.mrf.mxu0
    %2334 = vmatprep.mubr.bf16.mxu0 0
    %2335 = vmatmul.mubr.bf16.gmra.mxu0 %v1280
    %v2336 = vpop.f32.mrf.mxu0
    %v2337 = vadd.f32 0.0, %v2336
    %v2338 = vpop.f32.mrf.mxu0
    %v2339 = vpop.f32.mrf.mxu0
    %v2340 = vadd.f32 0.0, %v2339
    %v2341 = vpop.f32.mrf.mxu0
    %2342 = vmatprep.mubr.bf16.mxu0 0
    %2343 = vmatmul.mubr.bf16.gmra.mxu0 %v1283
    %v2344 = vpop.f32.mrf.mxu0
    %v2345 = vadd.f32 0.0, %v2344
    %v2346 = vpop.f32.mrf.mxu0
    %v2347 = vpop.f32.mrf.mxu0
    %v2348 = vadd.f32 0.0, %v2347
    %v2349 = vpop.f32.mrf.mxu0
    %2350 = vmatprep.mubr.bf16.mxu0 0
    %2351 = vmatmul.mubr.bf16.gmra.mxu0 %v1286
    %v2352 = vpop.f32.mrf.mxu0
    %v2353 = vadd.f32 0.0, %v2352
    %v2354 = vpop.f32.mrf.mxu0
    %v2355 = vpop.f32.mrf.mxu0
    %v2356 = vadd.f32 0.0, %v2355
    %v2357 = vpop.f32.mrf.mxu0
    %2358 = vmatprep.mubr.bf16.mxu0 0
    %2359 = vmatmul.mubr.bf16.gmra.mxu0 %v1289
    %v2360 = vpop.f32.mrf.mxu0
    %v2361 = vadd.f32 0.0, %v2360
    %v2362 = vpop.f32.mrf.mxu0
    %v2363 = vpop.f32.mrf.mxu0
    %v2364 = vadd.f32 0.0, %v2363
    %v2365 = vpop.f32.mrf.mxu0
    %2366 = vmatprep.mubr.bf16.mxu0 0
    %2367 = vmatmul.mubr.bf16.gmra.mxu0 %v1292
    %v2368 = vpop.f32.mrf.mxu0
    %v2369 = vadd.f32 0.0, %v2368
    %v2370 = vpop.f32.mrf.mxu0
    %v2371 = vpop.f32.mrf.mxu0
    %v2372 = vadd.f32 0.0, %v2371
    %v2373 = vpop.f32.mrf.mxu0
    %2374 = vmatprep.mubr.bf16.mxu0 0
    %2375 = vmatmul.mubr.bf16.gmra.mxu0 %v1295
    %v2376 = vpop.f32.mrf.mxu0
    %v2377 = vadd.f32 0.0, %v2376
    %v2378 = vpop.f32.mrf.mxu0
    %v2379 = vpop.f32.mrf.mxu0
    %v2380 = vadd.f32 0.0, %v2379
    %v2381 = vpop.f32.mrf.mxu0
    %2382 = vmatprep.mubr.bf16.mxu0 0
    %2383 = vmatmul.mubr.bf16.gmra.mxu0 %v1298
    %v2384 = vpop.f32.mrf.mxu0
    %v2385 = vadd.f32 0.0, %v2384
    %v2386 = vpop.f32.mrf.mxu0
    %v2387 = vpop.f32.mrf.mxu0
    %v2388 = vadd.f32 0.0, %v2387
    %v2389 = vpop.f32.mrf.mxu0
    %2390 = vmatprep.mubr.bf16.mxu0 0
    %2391 = vmatmul.mubr.bf16.gmra.mxu0 %v1301
    %v2392 = vpop.f32.mrf.mxu0
    %v2393 = vadd.f32 0.0, %v2392
    %v2394 = vpop.f32.mrf.mxu0
    %v2395 = vpop.f32.mrf.mxu0
    %v2396 = vadd.f32 0.0, %v2395
    %v2397 = vpop.f32.mrf.mxu0
    %2398 = vmatprep.mubr.bf16.mxu0 0
    %2399 = vmatmul.mubr.bf16.gmra.mxu0 %v1304
    %v2400 = vpop.f32.mrf.mxu0
    %v2401 = vadd.f32 0.0, %v2400
    %v2402 = vpop.f32.mrf.mxu0
    %v2403 = vpop.f32.mrf.mxu0
    %v2404 = vadd.f32 0.0, %v2403
    %v2405 = vpop.f32.mrf.mxu0
    %2406 = vmatprep.mubr.bf16.mxu0 0
    %2407 = vmatmul.mubr.bf16.gmra.mxu0 %v1307
    %v2408 = vpop.f32.mrf.mxu0
    %v2409 = vadd.f32 0.0, %v2408
    %v2410 = vpop.f32.mrf.mxu0
    %v2411 = vpop.f32.mrf.mxu0
    %v2412 = vadd.f32 0.0, %v2411
    %v2413 = vpop.f32.mrf.mxu0
    %2414 = vmatprep.mubr.bf16.mxu0 0
    %2415 = vmatmul.mubr.bf16.gmra.mxu0 %v1310
    %v2416 = vpop.f32.mrf.mxu0
    %v2417 = vadd.f32 0.0, %v2416
    %v2418 = vpop.f32.mrf.mxu0
    %v2419 = vpop.f32.mrf.mxu0
    %v2420 = vadd.f32 0.0, %v2419
    %v2421 = vpop.f32.mrf.mxu0
    %2422 = vmatprep.mubr.bf16.mxu0 0
    %2423 = vmatmul.mubr.bf16.gmra.mxu0 %v1313
    %v2424 = vpop.f32.mrf.mxu0
    %v2425 = vadd.f32 0.0, %v2424
    %v2426 = vpop.f32.mrf.mxu0
    %v2427 = vpop.f32.mrf.mxu0
    %v2428 = vadd.f32 0.0, %v2427
    %v2429 = vpop.f32.mrf.mxu0
    %2430 = vmatprep.mubr.bf16.mxu0 0
    %2431 = vmatmul.mubr.bf16.gmra.mxu0 %v1316
    %v2432 = vpop.f32.mrf.mxu0
    %v2433 = vadd.f32 0.0, %v2432
    %v2434 = vpop.f32.mrf.mxu0
    %v2435 = vpop.f32.mrf.mxu0
    %v2436 = vadd.f32 0.0, %v2435
    %v2437 = vpop.f32.mrf.mxu0
    %2438 = vdwg.mxu0
    %v2439 = vmax.f32 %v1417, 0.0
    %v2440 = vmax.f32 %v1420, 0.0
    %v2441 = vmax.f32 %v1425, 0.0
    %v2442 = vmax.f32 %v1428, 0.0
    %v2443 = vmax.f32 %v1433, 0.0
    %v2444 = vmax.f32 %v1436, 0.0
    %v2445 = vmax.f32 %v1441, 0.0
    %v2446 = vmax.f32 %v1444, 0.0
    %v2447 = vmax.f32 %v1449, 0.0
    %v2448 = vmax.f32 %v1452, 0.0
    %v2449 = vmax.f32 %v1457, 0.0
    %v2450 = vmax.f32 %v1460, 0.0
    %v2451 = vmax.f32 %v1465, 0.0
    %v2452 = vmax.f32 %v1468, 0.0
    %v2453 = vmax.f32 %v1473, 0.0
    %v2454 = vmax.f32 %v1476, 0.0
    %v2455 = vmax.f32 %v1481, 0.0
    %v2456 = vmax.f32 %v1484, 0.0
    %v2457 = vmax.f32 %v1489, 0.0
    %v2458 = vmax.f32 %v1492, 0.0
    %v2459 = vmax.f32 %v1497, 0.0
    %v2460 = vmax.f32 %v1500, 0.0
    %v2461 = vmax.f32 %v1505, 0.0
    %v2462 = vmax.f32 %v1508, 0.0
    %v2463 = vmax.f32 %v1513, 0.0
    %v2464 = vmax.f32 %v1516, 0.0
    %v2465 = vmax.f32 %v1521, 0.0
    %v2466 = vmax.f32 %v1524, 0.0
    %v2467 = vmax.f32 %v1529, 0.0
    %v2468 = vmax.f32 %v1532, 0.0
    %v2469 = vmax.f32 %v1537, 0.0
    %v2470 = vmax.f32 %v1540, 0.0
    %v2471 = vmax.f32 %v1545, 0.0
    %v2472 = vmax.f32 %v1548, 0.0
    %v2473 = vmax.f32 %v1553, 0.0
    %v2474 = vmax.f32 %v1556, 0.0
    %v2475 = vmax.f32 %v1561, 0.0
    %v2476 = vmax.f32 %v1564, 0.0
    %v2477 = vmax.f32 %v1569, 0.0
    %v2478 = vmax.f32 %v1572, 0.0
    %v2479 = vmax.f32 %v1577, 0.0
    %v2480 = vmax.f32 %v1580, 0.0
    %v2481 = vmax.f32 %v1585, 0.0
    %v2482 = vmax.f32 %v1588, 0.0
    %v2483 = vmax.f32 %v1593, 0.0
    %v2484 = vmax.f32 %v1596, 0.0
    %v2485 = vmax.f32 %v1601, 0.0
    %v2486 = vmax.f32 %v1604, 0.0
    %v2487 = vmax.f32 %v1609, 0.0
    %v2488 = vmax.f32 %v1612, 0.0
    %v2489 = vmax.f32 %v1617, 0.0
    %v2490 = vmax.f32 %v1620, 0.0
    %v2491 = vmax.f32 %v1625, 0.0
    %v2492 = vmax.f32 %v1628, 0.0
    %v2493 = vmax.f32 %v1633, 0.0
    %v2494 = vmax.f32 %v1636, 0.0
    %v2495 = vmax.f32 %v1641, 0.0
    %v2496 = vmax.f32 %v1644, 0.0
    %v2497 = vmax.f32 %v1649, 0.0
    %v2498 = vmax.f32 %v1652, 0.0
    %v2499 = vmax.f32 %v1657, 0.0
    %v2500 = vmax.f32 %v1660, 0.0
    %v2501 = vmax.f32 %v1665, 0.0
    %v2502 = vmax.f32 %v1668, 0.0
    %v2503 = vmax.f32 %v1673, 0.0
    %v2504 = vmax.f32 %v1676, 0.0
    %v2505 = vmax.f32 %v1681, 0.0
    %v2506 = vmax.f32 %v1684, 0.0
    %v2507 = vmax.f32 %v1689, 0.0
    %v2508 = vmax.f32 %v1692, 0.0
    %v2509 = vmax.f32 %v1697, 0.0
    %v2510 = vmax.f32 %v1700, 0.0
    %v2511 = vmax.f32 %v1705, 0.0
    %v2512 = vmax.f32 %v1708, 0.0
    %v2513 = vmax.f32 %v1713, 0.0
    %v2514 = vmax.f32 %v1716, 0.0
    %v2515 = vmax.f32 %v1721, 0.0
    %v2516 = vmax.f32 %v1724, 0.0
    %v2517 = vmax.f32 %v1729, 0.0
    %v2518 = vmax.f32 %v1732, 0.0
    %v2519 = vmax.f32 %v1737, 0.0
    %v2520 = vmax.f32 %v1740, 0.0
    %v2521 = vmax.f32 %v1745, 0.0
    %v2522 = vmax.f32 %v1748, 0.0
    %v2523 = vmax.f32 %v1753, 0.0
    %v2524 = vmax.f32 %v1756, 0.0
    %v2525 = vmax.f32 %v1761, 0.0
    %v2526 = vmax.f32 %v1764, 0.0
    %v2527 = vmax.f32 %v1769, 0.0
    %v2528 = vmax.f32 %v1772, 0.0
    %v2529 = vmax.f32 %v1777, 0.0
    %v2530 = vmax.f32 %v1780, 0.0
    %v2531 = vmax.f32 %v1785, 0.0
    %v2532 = vmax.f32 %v1788, 0.0
    %v2533 = vmax.f32 %v1793, 0.0
    %v2534 = vmax.f32 %v1796, 0.0
    %v2535 = vmax.f32 %v1801, 0.0
    %v2536 = vmax.f32 %v1804, 0.0
    %v2537 = vmax.f32 %v1809, 0.0
    %v2538 = vmax.f32 %v1812, 0.0
    %v2539 = vmax.f32 %v1817, 0.0
    %v2540 = vmax.f32 %v1820, 0.0
    %v2541 = vmax.f32 %v1825, 0.0
    %v2542 = vmax.f32 %v1828, 0.0
    %v2543 = vmax.f32 %v1833, 0.0
    %v2544 = vmax.f32 %v1836, 0.0
    %v2545 = vmax.f32 %v1841, 0.0
    %v2546 = vmax.f32 %v1844, 0.0
    %v2547 = vmax.f32 %v1849, 0.0
    %v2548 = vmax.f32 %v1852, 0.0
    %v2549 = vmax.f32 %v1857, 0.0
    %v2550 = vmax.f32 %v1860, 0.0
    %v2551 = vmax.f32 %v1865, 0.0
    %v2552 = vmax.f32 %v1868, 0.0
    %v2553 = vmax.f32 %v1873, 0.0
    %v2554 = vmax.f32 %v1876, 0.0
    %v2555 = vmax.f32 %v1881, 0.0
    %v2556 = vmax.f32 %v1884, 0.0
    %v2557 = vmax.f32 %v1889, 0.0
    %v2558 = vmax.f32 %v1892, 0.0
    %v2559 = vmax.f32 %v1897, 0.0
    %v2560 = vmax.f32 %v1900, 0.0
    %v2561 = vmax.f32 %v1905, 0.0
    %v2562 = vmax.f32 %v1908, 0.0
    %v2563 = vmax.f32 %v1913, 0.0
    %v2564 = vmax.f32 %v1916, 0.0
    %v2565 = vmax.f32 %v1921, 0.0
    %v2566 = vmax.f32 %v1924, 0.0
    %v2567 = vmax.f32 %v1929, 0.0
    %v2568 = vmax.f32 %v1932, 0.0
    %v2569 = vmax.f32 %v1937, 0.0
    %v2570 = vmax.f32 %v1940, 0.0
    %v2571 = vmax.f32 %v1945, 0.0
    %v2572 = vmax.f32 %v1948, 0.0
    %v2573 = vmax.f32 %v1953, 0.0
    %v2574 = vmax.f32 %v1956, 0.0
    %v2575 = vmax.f32 %v1961, 0.0
    %v2576 = vmax.f32 %v1964, 0.0
    %v2577 = vmax.f32 %v1969, 0.0
    %v2578 = vmax.f32 %v1972, 0.0
    %v2579 = vmax.f32 %v1977, 0.0
    %v2580 = vmax.f32 %v1980, 0.0
    %v2581 = vmax.f32 %v1985, 0.0
    %v2582 = vmax.f32 %v1988, 0.0
    %v2583 = vmax.f32 %v1993, 0.0
    %v2584 = vmax.f32 %v1996, 0.0
    %v2585 = vmax.f32 %v2001, 0.0
    %v2586 = vmax.f32 %v2004, 0.0
    %v2587 = vmax.f32 %v2009, 0.0
    %v2588 = vmax.f32 %v2012, 0.0
    %v2589 = vmax.f32 %v2017, 0.0
    %v2590 = vmax.f32 %v2020, 0.0
    %v2591 = vmax.f32 %v2025, 0.0
    %v2592 = vmax.f32 %v2028, 0.0
    %v2593 = vmax.f32 %v2033, 0.0
    %v2594 = vmax.f32 %v2036, 0.0
    %v2595 = vmax.f32 %v2041, 0.0
    %v2596 = vmax.f32 %v2044, 0.0
    %v2597 = vmax.f32 %v2049, 0.0
    %v2598 = vmax.f32 %v2052, 0.0
    %v2599 = vmax.f32 %v2057, 0.0
    %v2600 = vmax.f32 %v2060, 0.0
    %v2601 = vmax.f32 %v2065, 0.0
    %v2602 = vmax.f32 %v2068, 0.0
    %v2603 = vmax.f32 %v2073, 0.0
    %v2604 = vmax.f32 %v2076, 0.0
    %v2605 = vmax.f32 %v2081, 0.0
    %v2606 = vmax.f32 %v2084, 0.0
    %v2607 = vmax.f32 %v2089, 0.0
    %v2608 = vmax.f32 %v2092, 0.0
    %v2609 = vmax.f32 %v2097, 0.0
    %v2610 = vmax.f32 %v2100, 0.0
    %v2611 = vmax.f32 %v2105, 0.0
    %v2612 = vmax.f32 %v2108, 0.0
    %v2613 = vmax.f32 %v2113, 0.0
    %v2614 = vmax.f32 %v2116, 0.0
    %v2615 = vmax.f32 %v2121, 0.0
    %v2616 = vmax.f32 %v2124, 0.0
    %v2617 = vmax.f32 %v2129, 0.0
    %v2618 = vmax.f32 %v2132, 0.0
    %v2619 = vmax.f32 %v2137, 0.0
    %v2620 = vmax.f32 %v2140, 0.0
    %v2621 = vmax.f32 %v2145, 0.0
    %v2622 = vmax.f32 %v2148, 0.0
    %v2623 = vmax.f32 %v2153, 0.0
    %v2624 = vmax.f32 %v2156, 0.0
    %v2625 = vmax.f32 %v2161, 0.0
    %v2626 = vmax.f32 %v2164, 0.0
    %v2627 = vmax.f32 %v2169, 0.0
    %v2628 = vmax.f32 %v2172, 0.0
    %v2629 = vmax.f32 %v2177, 0.0
    %v2630 = vmax.f32 %v2180, 0.0
    %v2631 = vmax.f32 %v2185, 0.0
    %v2632 = vmax.f32 %v2188, 0.0
    %v2633 = vmax.f32 %v2193, 0.0
    %v2634 = vmax.f32 %v2196, 0.0
    %v2635 = vmax.f32 %v2201, 0.0
    %v2636 = vmax.f32 %v2204, 0.0
    %v2637 = vmax.f32 %v2209, 0.0
    %v2638 = vmax.f32 %v2212, 0.0
    %v2639 = vmax.f32 %v2217, 0.0
    %v2640 = vmax.f32 %v2220, 0.0
    %v2641 = vmax.f32 %v2225, 0.0
    %v2642 = vmax.f32 %v2228, 0.0
    %v2643 = vmax.f32 %v2233, 0.0
    %v2644 = vmax.f32 %v2236, 0.0
    %v2645 = vmax.f32 %v2241, 0.0
    %v2646 = vmax.f32 %v2244, 0.0
    %v2647 = vmax.f32 %v2249, 0.0
    %v2648 = vmax.f32 %v2252, 0.0
    %v2649 = vmax.f32 %v2257, 0.0
    %v2650 = vmax.f32 %v2260, 0.0
    %v2651 = vmax.f32 %v2265, 0.0
    %v2652 = vmax.f32 %v2268, 0.0
    %v2653 = vmax.f32 %v2273, 0.0
    %v2654 = vmax.f32 %v2276, 0.0
    %v2655 = vmax.f32 %v2281, 0.0
    %v2656 = vmax.f32 %v2284, 0.0
    %v2657 = vmax.f32 %v2289, 0.0
    %v2658 = vmax.f32 %v2292, 0.0
    %v2659 = vmax.f32 %v2297, 0.0
    %v2660 = vmax.f32 %v2300, 0.0
    %v2661 = vmax.f32 %v2305, 0.0
    %v2662 = vmax.f32 %v2308, 0.0
    %v2663 = vmax.f32 %v2313, 0.0
    %v2664 = vmax.f32 %v2316, 0.0
    %v2665 = vmax.f32 %v2321, 0.0
    %v2666 = vmax.f32 %v2324, 0.0
    %v2667 = vmax.f32 %v2329, 0.0
    %v2668 = vmax.f32 %v2332, 0.0
    %v2669 = vmax.f32 %v2337, 0.0
    %v2670 = vmax.f32 %v2340, 0.0
    %v2671 = vmax.f32 %v2345, 0.0
    %v2672 = vmax.f32 %v2348, 0.0
    %v2673 = vmax.f32 %v2353, 0.0
    %v2674 = vmax.f32 %v2356, 0.0
    %v2675 = vmax.f32 %v2361, 0.0
    %v2676 = vmax.f32 %v2364, 0.0
    %v2677 = vmax.f32 %v2369, 0.0
    %v2678 = vmax.f32 %v2372, 0.0
    %v2679 = vmax.f32 %v2377, 0.0
    %v2680 = vmax.f32 %v2380, 0.0
    %v2681 = vmax.f32 %v2385, 0.0
    %v2682 = vmax.f32 %v2388, 0.0
    %v2683 = vmax.f32 %v2393, 0.0
    %v2684 = vmax.f32 %v2396, 0.0
    %v2685 = vmax.f32 %v2401, 0.0
    %v2686 = vmax.f32 %v2404, 0.0
    %v2687 = vmax.f32 %v2409, 0.0
    %v2688 = vmax.f32 %v2412, 0.0
    %v2689 = vmax.f32 %v2417, 0.0
    %v2690 = vmax.f32 %v2420, 0.0
    %v2691 = vmax.f32 %v2425, 0.0
    %v2692 = vmax.f32 %v2428, 0.0
    %v2693 = vmax.f32 %v2433, 0.0
    %v2694 = vmax.f32 %v2436, 0.0
    %v2695 = vadd.f32 %v2439, %v2440
    %v2696 = vadd.f32 %v2695, %v2441
    %v2697 = vadd.f32 %v2696, %v2442
    %v2698 = vadd.f32 %v2697, %v2443
    %v2699 = vadd.f32 %v2698, %v2444
    %v2700 = vadd.f32 %v2699, %v2445
    %v2701 = vadd.f32 %v2700, %v2446
    %v2702 = vadd.f32 %v2701, %v2447
    %v2703 = vadd.f32 %v2702, %v2448
    %v2704 = vadd.f32 %v2703, %v2449
    %v2705 = vadd.f32 %v2704, %v2450
    %v2706 = vadd.f32 %v2705, %v2451
    %v2707 = vadd.f32 %v2706, %v2452
    %v2708 = vadd.f32 %v2707, %v2453
    %v2709 = vadd.f32 %v2708, %v2454
    %v2710 = vadd.f32 %v2709, %v2455
    %v2711 = vadd.f32 %v2710, %v2456
    %v2712 = vadd.f32 %v2711, %v2457
    %v2713 = vadd.f32 %v2712, %v2458
    %v2714 = vadd.f32 %v2713, %v2459
    %v2715 = vadd.f32 %v2714, %v2460
    %v2716 = vadd.f32 %v2715, %v2461
    %v2717 = vadd.f32 %v2716, %v2462
    %v2718 = vadd.f32 %v2717, %v2463
    %v2719 = vadd.f32 %v2718, %v2464
    %v2720 = vadd.f32 %v2719, %v2465
    %v2721 = vadd.f32 %v2720, %v2466
    %v2722 = vadd.f32 %v2721, %v2467
    %v2723 = vadd.f32 %v2722, %v2468
    %v2724 = vadd.f32 %v2723, %v2469
    %v2725 = vadd.f32 %v2724, %v2470
    %v2726 = vrot.slane %v2725, 4
    %v2727 = vadd.f32 %v2725, %v2726
    %v2728 = vrot.slane %v2727, 2
    %v2729 = vadd.f32 %v2727, %v2728
    %v2730 = vrot.slane %v2729, 1
    %v2731 = vadd.f32 %v2729, %v2730
    %v2732 = vadd.f32 %v2471, %v2472
    %v2733 = vadd.f32 %v2732, %v2473
    %v2734 = vadd.f32 %v2733, %v2474
    %v2735 = vadd.f32 %v2734, %v2475
    %v2736 = vadd.f32 %v2735, %v2476
    %v2737 = vadd.f32 %v2736, %v2477
    %v2738 = vadd.f32 %v2737, %v2478
    %v2739 = vadd.f32 %v2738, %v2479
    %v2740 = vadd.f32 %v2739, %v2480
    %v2741 = vadd.f32 %v2740, %v2481
    %v2742 = vadd.f32 %v2741, %v2482
    %v2743 = vadd.f32 %v2742, %v2483
    %v2744 = vadd.f32 %v2743, %v2484
    %v2745 = vadd.f32 %v2744, %v2485
    %v2746 = vadd.f32 %v2745, %v2486
    %v2747 = vadd.f32 %v2746, %v2487
    %v2748 = vadd.f32 %v2747, %v2488
    %v2749 = vadd.f32 %v2748, %v2489
    %v2750 = vadd.f32 %v2749, %v2490
    %v2751 = vadd.f32 %v2750, %v2491
    %v2752 = vadd.f32 %v2751, %v2492
    %v2753 = vadd.f32 %v2752, %v2493
    %v2754 = vadd.f32 %v2753, %v2494
    %v2755 = vadd.f32 %v2754, %v2495
    %v2756 = vadd.f32 %v2755, %v2496
    %v2757 = vadd.f32 %v2756, %v2497
    %v2758 = vadd.f32 %v2757, %v2498
    %v2759 = vadd.f32 %v2758, %v2499
    %v2760 = vadd.f32 %v2759, %v2500
    %v2761 = vadd.f32 %v2760, %v2501
    %v2762 = vadd.f32 %v2761, %v2502
    %v2763 = vrot.slane %v2762, 4
    %v2764 = vadd.f32 %v2762, %v2763
    %v2765 = vrot.slane %v2764, 2
    %v2766 = vadd.f32 %v2764, %v2765
    %v2767 = vrot.slane %v2766, 1
    %v2768 = vadd.f32 %v2766, %v2767
    %v2769 = vadd.f32 %v2503, %v2504
    %v2770 = vadd.f32 %v2769, %v2505
    %v2771 = vadd.f32 %v2770, %v2506
    %v2772 = vadd.f32 %v2771, %v2507
    %v2773 = vadd.f32 %v2772, %v2508
    %v2774 = vadd.f32 %v2773, %v2509
    %v2775 = vadd.f32 %v2774, %v2510
    %v2776 = vadd.f32 %v2775, %v2511
    %v2777 = vadd.f32 %v2776, %v2512
    %v2778 = vadd.f32 %v2777, %v2513
    %v2779 = vadd.f32 %v2778, %v2514
    %v2780 = vadd.f32 %v2779, %v2515
    %v2781 = vadd.f32 %v2780, %v2516
    %v2782 = vadd.f32 %v2781, %v2517
    %v2783 = vadd.f32 %v2782, %v2518
    %v2784 = vadd.f32 %v2783, %v2519
    %v2785 = vadd.f32 %v2784, %v2520
    %v2786 = vadd.f32 %v2785, %v2521
    %v2787 = vadd.f32 %v2786, %v2522
    %v2788 = vadd.f32 %v2787, %v2523
    %v2789 = vadd.f32 %v2788, %v2524
    %v2790 = vadd.f32 %v2789, %v2525
    %v2791 = vadd.f32 %v2790, %v2526
    %v2792 = vadd.f32 %v2791, %v2527
    %v2793 = vadd.f32 %v2792, %v2528
    %v2794 = vadd.f32 %v2793, %v2529
    %v2795 = vadd.f32 %v2794, %v2530
    %v2796 = vadd.f32 %v2795, %v2531
    %v2797 = vadd.f32 %v2796, %v2532
    %v2798 = vadd.f32 %v2797, %v2533
    %v2799 = vadd.f32 %v2798, %v2534
    %v2800 = vrot.slane %v2799, 4
    %v2801 = vadd.f32 %v2799, %v2800
    %v2802 = vrot.slane %v2801, 2
    %v2803 = vadd.f32 %v2801, %v2802
    %v2804 = vrot.slane %v2803, 1
    %v2805 = vadd.f32 %v2803, %v2804
    %v2806 = vadd.f32 %v2535, %v2536
    %v2807 = vadd.f32 %v2806, %v2537
    %v2808 = vadd.f32 %v2807, %v2538
    %v2809 = vadd.f32 %v2808, %v2539
    %v2810 = vadd.f32 %v2809, %v2540
    %v2811 = vadd.f32 %v2810, %v2541
    %v2812 = vadd.f32 %v2811, %v2542
    %v2813 = vadd.f32 %v2812, %v2543
    %v2814 = vadd.f32 %v2813, %v2544
    %v2815 = vadd.f32 %v2814, %v2545
    %v2816 = vadd.f32 %v2815, %v2546
    %v2817 = vadd.f32 %v2816, %v2547
    %v2818 = vadd.f32 %v2817, %v2548
    %v2819 = vadd.f32 %v2818, %v2549
    %v2820 = vadd.f32 %v2819, %v2550
    %v2821 = vadd.f32 %v2820, %v2551
    %v2822 = vadd.f32 %v2821, %v2552
    %v2823 = vadd.f32 %v2822, %v2553
    %v2824 = vadd.f32 %v2823, %v2554
    %v2825 = vadd.f32 %v2824, %v2555
    %v2826 = vadd.f32 %v2825, %v2556
    %v2827 = vadd.f32 %v2826, %v2557
    %v2828 = vadd.f32 %v2827, %v2558
    %v2829 = vadd.f32 %v2828, %v2559
    %v2830 = vadd.f32 %v2829, %v2560
    %v2831 = vadd.f32 %v2830, %v2561
    %v2832 = vadd.f32 %v2831, %v2562
    %v2833 = vadd.f32 %v2832, %v2563
    %v2834 = vadd.f32 %v2833, %v2564
    %v2835 = vadd.f32 %v2834, %v2565
    %v2836 = vadd.f32 %v2835, %v2566
    %v2837 = vrot.slane %v2836, 4
    %v2838 = vadd.f32 %v2836, %v2837
    %v2839 = vrot.slane %v2838, 2
    %v2840 = vadd.f32 %v2838, %v2839
    %v2841 = vrot.slane %v2840, 1
    %v2842 = vadd.f32 %v2840, %v2841
    %v2843 = vadd.f32 %v2567, %v2568
    %v2844 = vadd.f32 %v2843, %v2569
    %v2845 = vadd.f32 %v2844, %v2570
    %v2846 = vadd.f32 %v2845, %v2571
    %v2847 = vadd.f32 %v2846, %v2572
    %v2848 = vadd.f32 %v2847, %v2573
    %v2849 = vadd.f32 %v2848, %v2574
    %v2850 = vadd.f32 %v2849, %v2575
    %v2851 = vadd.f32 %v2850, %v2576
    %v2852 = vadd.f32 %v2851, %v2577
    %v2853 = vadd.f32 %v2852, %v2578
    %v2854 = vadd.f32 %v2853, %v2579
    %v2855 = vadd.f32 %v2854, %v2580
    %v2856 = vadd.f32 %v2855, %v2581
    %v2857 = vadd.f32 %v2856, %v2582
    %v2858 = vadd.f32 %v2857, %v2583
    %v2859 = vadd.f32 %v2858, %v2584
    %v2860 = vadd.f32 %v2859, %v2585
    %v2861 = vadd.f32 %v2860, %v2586
    %v2862 = vadd.f32 %v2861, %v2587
    %v2863 = vadd.f32 %v2862, %v2588
    %v2864 = vadd.f32 %v2863, %v2589
    %v2865 = vadd.f32 %v2864, %v2590
    %v2866 = vadd.f32 %v2865, %v2591
    %v2867 = vadd.f32 %v2866, %v2592
    %v2868 = vadd.f32 %v2867, %v2593
    %v2869 = vadd.f32 %v2868, %v2594
    %v2870 = vadd.f32 %v2869, %v2595
    %v2871 = vadd.f32 %v2870, %v2596
    %v2872 = vadd.f32 %v2871, %v2597
    %v2873 = vadd.f32 %v2872, %v2598
    %v2874 = vrot.slane %v2873, 4
    %v2875 = vadd.f32 %v2873, %v2874
    %v2876 = vrot.slane %v2875, 2
    %v2877 = vadd.f32 %v2875, %v2876
    %v2878 = vrot.slane %v2877, 1
    %v2879 = vadd.f32 %v2877, %v2878
    %v2880 = vadd.f32 %v2599, %v2600
    %v2881 = vadd.f32 %v2880, %v2601
    %v2882 = vadd.f32 %v2881, %v2602
    %v2883 = vadd.f32 %v2882, %v2603
    %v2884 = vadd.f32 %v2883, %v2604
    %v2885 = vadd.f32 %v2884, %v2605
    %v2886 = vadd.f32 %v2885, %v2606
    %v2887 = vadd.f32 %v2886, %v2607
    %v2888 = vadd.f32 %v2887, %v2608
    %v2889 = vadd.f32 %v2888, %v2609
    %v2890 = vadd.f32 %v2889, %v2610
    %v2891 = vadd.f32 %v2890, %v2611
    %v2892 = vadd.f32 %v2891, %v2612
    %v2893 = vadd.f32 %v2892, %v2613
    %v2894 = vadd.f32 %v2893, %v2614
    %v2895 = vadd.f32 %v2894, %v2615
    %v2896 = vadd.f32 %v2895, %v2616
    %v2897 = vadd.f32 %v2896, %v2617
    %v2898 = vadd.f32 %v2897, %v2618
    %v2899 = vadd.f32 %v2898, %v2619
    %v2900 = vadd.f32 %v2899, %v2620
    %v2901 = vadd.f32 %v2900, %v2621
    %v2902 = vadd.f32 %v2901, %v2622
    %v2903 = vadd.f32 %v2902, %v2623
    %v2904 = vadd.f32 %v2903, %v2624
    %v2905 = vadd.f32 %v2904, %v2625
    %v2906 = vadd.f32 %v2905, %v2626
    %v2907 = vadd.f32 %v2906, %v2627
    %v2908 = vadd.f32 %v2907, %v2628
    %v2909 = vadd.f32 %v2908, %v2629
    %v2910 = vadd.f32 %v2909, %v2630
    %v2911 = vrot.slane %v2910, 4
    %v2912 = vadd.f32 %v2910, %v2911
    %v2913 = vrot.slane %v2912, 2
    %v2914 = vadd.f32 %v2912, %v2913
    %v2915 = vrot.slane %v2914, 1
    %v2916 = vadd.f32 %v2914, %v2915
    %v2917 = vadd.f32 %v2631, %v2632
    %v2918 = vadd.f32 %v2917, %v2633
    %v2919 = vadd.f32 %v2918, %v2634
    %v2920 = vadd.f32 %v2919, %v2635
    %v2921 = vadd.f32 %v2920, %v2636
    %v2922 = vadd.f32 %v2921, %v2637
    %v2923 = vadd.f32 %v2922, %v2638
    %v2924 = vadd.f32 %v2923, %v2639
    %v2925 = vadd.f32 %v2924, %v2640
    %v2926 = vadd.f32 %v2925, %v2641
    %v2927 = vadd.f32 %v2926, %v2642
    %v2928 = vadd.f32 %v2927, %v2643
    %v2929 = vadd.f32 %v2928, %v2644
    %v2930 = vadd.f32 %v2929, %v2645
    %v2931 = vadd.f32 %v2930, %v2646
    %v2932 = vadd.f32 %v2931, %v2647
    %v2933 = vadd.f32 %v2932, %v2648
    %v2934 = vadd.f32 %v2933, %v2649
    %v2935 = vadd.f32 %v2934, %v2650
    %v2936 = vadd.f32 %v2935, %v2651
    %v2937 = vadd.f32 %v2936, %v2652
    %v2938 = vadd.f32 %v2937, %v2653
    %v2939 = vadd.f32 %v2938, %v2654
    %v2940 = vadd.f32 %v2939, %v2655
    %v2941 = vadd.f32 %v2940, %v2656
    %v2942 = vadd.f32 %v2941, %v2657
    %v2943 = vadd.f32 %v2942, %v2658
    %v2944 = vadd.f32 %v2943, %v2659
    %v2945 = vadd.f32 %v2944, %v2660
    %v2946 = vadd.f32 %v2945, %v2661
    %v2947 = vadd.f32 %v2946, %v2662
    %v2948 = vrot.slane %v2947, 4
    %v2949 = vadd.f32 %v2947, %v2948
    %v2950 = vrot.slane %v2949, 2
    %v2951 = vadd.f32 %v2949, %v2950
    %v2952 = vrot.slane %v2951, 1
    %v2953 = vadd.f32 %v2951, %v2952
    %v2954 = vadd.f32 %v2663, %v2664
    %v2955 = vadd.f32 %v2954, %v2665
    %v2956 = vadd.f32 %v2955, %v2666
    %v2957 = vadd.f32 %v2956, %v2667
    %v2958 = vadd.f32 %v2957, %v2668
    %v2959 = vadd.f32 %v2958, %v2669
    %v2960 = vadd.f32 %v2959, %v2670
    %v2961 = vadd.f32 %v2960, %v2671
    %v2962 = vadd.f32 %v2961, %v2672
    %v2963 = vadd.f32 %v2962, %v2673
    %v2964 = vadd.f32 %v2963, %v2674
    %v2965 = vadd.f32 %v2964, %v2675
    %v2966 = vadd.f32 %v2965, %v2676
    %v2967 = vadd.f32 %v2966, %v2677
    %v2968 = vadd.f32 %v2967, %v2678
    %v2969 = vadd.f32 %v2968, %v2679
    %v2970 = vadd.f32 %v2969, %v2680
    %v2971 = vadd.f32 %v2970, %v2681
    %v2972 = vadd.f32 %v2971, %v2682
    %v2973 = vadd.f32 %v2972, %v2683
    %v2974 = vadd.f32 %v2973, %v2684
    %v2975 = vadd.f32 %v2974, %v2685
    %v2976 = vadd.f32 %v2975, %v2686
    %v2977 = vadd.f32 %v2976, %v2687
    %v2978 = vadd.f32 %v2977, %v2688
    %v2979 = vadd.f32 %v2978, %v2689
    %v2980 = vadd.f32 %v2979, %v2690
    %v2981 = vadd.f32 %v2980, %v2691
    %v2982 = vadd.f32 %v2981, %v2692
    %v2983 = vadd.f32 %v2982, %v2693
    %v2984 = vadd.f32 %v2983, %v2694
    %v2985 = vrot.slane %v2984, 4
    %v2986 = vadd.f32 %v2984, %v2985
    %v2987 = vrot.slane %v2986, 2
    %v2988 = vadd.f32 %v2986, %v2987
    %v2989 = vrot.slane %v2988, 1
    %v2990 = vadd.f32 %v2988, %v2989
    %vm2991 = vcmask 1040384
    %v2992 = vsel %vm2991, %v2731, %v2768
    %vm2993 = vcmask 1041408
    %v2994 = vsel %vm2993, %v2992, %v2805
    %vm2995 = vcmask 1042432
    %v2996 = vsel %vm2995, %v2994, %v2842
    %vm2997 = vcmask 1043456
    %v2998 = vsel %vm2997, %v2996, %v2879
    %vm2999 = vcmask 1044480
    %v3000 = vsel %vm2999, %v2998, %v2916
    %vm3001 = vcmask 1045504
    %v3002 = vsel %vm3001, %v3000, %v2953
    %vm3003 = vcmask 1046528
    %v3004 = vsel %vm3003, %v3002, %v2990
    %v3005 = vmul.f32 %v3004, 0.00390625
    %v3006 = vpack.c.bf16 %v3005, %v3005
    %v3007 = vld [vmem:[%s2] sm:$0xf]
    %v3008 = vld [vmem:[%s2 + $0x4] sm:$0xf]
    %v3009 = vld [vmem:[%s2 + $0x8] sm:$0xf]
    %v3010 = vld [vmem:[%s2 + $0xc] sm:$0xf]
    %v3011 = vld [vmem:[%s2 + $0x10] sm:$0xf]
    %v3012 = vld [vmem:[%s2 + $0x14] sm:$0xf]
    %v3013 = vld [vmem:[%s2 + $0x18] sm:$0xf]
    %v3014 = vld [vmem:[%s2 + $0x1c] sm:$0xf]
    %v3015 = vld [vmem:[%s2 + $0x20] sm:$0xf]
    %v3016 = vld [vmem:[%s2 + $0x24] sm:$0xf]
    %v3017 = vld [vmem:[%s2 + $0x28] sm:$0xf]
    %v3018 = vld [vmem:[%s2 + $0x2c] sm:$0xf]
    %v3019 = vld [vmem:[%s2 + $0x30] sm:$0xf]
    %v3020 = vld [vmem:[%s2 + $0x34] sm:$0xf]
    %v3021 = vld [vmem:[%s2 + $0x38] sm:$0xf]
    %v3022 = vld [vmem:[%s2 + $0x3c] sm:$0xf]
    %v3039 = vunpack.c.l.b16 %v3007
    %v3040 = vunpack.c.l.b16 %v3008
    %v3041 = vunpack.c.l.b16 %v3009
    %v3042 = vunpack.c.l.b16 %v3010
    %v3043 = vunpack.c.l.b16 %v3011
    %v3044 = vunpack.c.l.b16 %v3012
    %v3045 = vunpack.c.l.b16 %v3013
    %v3046 = vunpack.c.l.b16 %v3014
    %v3047 = vunpack.c.l.b16 %v3015
    %v3048 = vunpack.c.l.b16 %v3016
    %v3049 = vunpack.c.l.b16 %v3017
    %v3050 = vunpack.c.l.b16 %v3018
    %v3051 = vunpack.c.l.b16 %v3019
    %v3052 = vunpack.c.l.b16 %v3020
    %v3053 = vunpack.c.l.b16 %v3021
    %v3054 = vunpack.c.l.b16 %v3022
    %v3055 = vpack.c.b16 %v3040, %v3039
    %v3056 = vpack.c.b16 %v3042, %v3041
    %v3057 = vpack.c.b16 %v3044, %v3043
    %v3058 = vpack.c.b16 %v3046, %v3045
    %v3059 = vpack.c.b16 %v3048, %v3047
    %v3060 = vpack.c.b16 %v3050, %v3049
    %v3061 = vpack.c.b16 %v3052, %v3051
    %v3062 = vpack.c.b16 %v3054, %v3053
    %3071 = vmatprep.subr.bf16.mxu0 0
    %3072 = vmatpush1.bf16.msra.mxu0 %v3062
    %3073 = vmatprep.subr.bf16.mxu0 0
    %3074 = vmatpush1.bf16.msra.mxu0 %v3061
    %3075 = vmatprep.subr.bf16.mxu0 0
    %3076 = vmatpush1.bf16.msra.mxu0 %v3060
    %3077 = vmatprep.subr.bf16.mxu0 0
    %3078 = vmatpush1.bf16.msra.mxu0 %v3059
    %3079 = vmatprep.subr.bf16.mxu0 0
    %3080 = vmatpush1.bf16.msra.mxu0 %v3058
    %3081 = vmatprep.subr.bf16.mxu0 0
    %3082 = vmatpush1.bf16.msra.mxu0 %v3057
    %3083 = vmatprep.subr.bf16.mxu0 0
    %3084 = vmatpush1.bf16.msra.mxu0 %v3056
    %3085 = vmatprep.subr.bf16.mxu0 0
    %3086 = vmatpush1.bf16.msra.mxu0 %v3055
    %3087 = vmatprep.subr.bf16.mxu0 0
    %3088 = vmatpush2.bf16.msra.mxu0 0
    %3089 = vmatprep.subr.bf16.mxu0 0
    %3090 = vmatpush2.bf16.msra.mxu0 0
    %3091 = vmatprep.subr.bf16.mxu0 0
    %3092 = vmatpush2.bf16.msra.mxu0 0
    %3093 = vmatprep.subr.bf16.mxu0 0
    %3094 = vmatpush2.bf16.msra.mxu0 0
    %3095 = vmatprep.subr.bf16.mxu0 0
    %3096 = vmatpush2.bf16.msra.mxu0 0
    %3097 = vmatprep.subr.bf16.mxu0 0
    %3098 = vmatpush2.bf16.msra.mxu0 0
    %3099 = vmatprep.subr.bf16.mxu0 0
    %3100 = vmatpush2.bf16.msra.mxu0 0
    %3101 = vmatprep.subr.bf16.mxu0 0
    %3102 = vmatpush2.bf16.msra.mxu0 0
    %3103 = vmatprep.mubr.bf16.mxu0 0
    %3104 = vmatmul.mubr.bf16.gmra.mxu0 %v3006
    %v3105 = vpop.f32.mrf.mxu0
    %v3106 = vadd.f32 0.0, %v3105
    %v3107 = vpop.f32.mrf.mxu0
    %v3108 = vpop.f32.mrf.mxu0
    %v3109 = vpop.f32.mrf.mxu0
    %3110 = vdwg.mxu0
    %v3111 = vmax.f32 %v3106, 0.0
    %3112 = vst [vmem:[#allocation3] sm:$0xff] %v3111
    %v3113 = vld [vmem:[%s3] sm:$0xff]
    %v3114 = vld [vmem:[%s3 + $0x8] sm:$0xff]
    %v3115 = vld [vmem:[%s3 + $0x10] sm:$0xff]
    %v3116 = vld [vmem:[%s3 + $0x18] sm:$0xff]
    %v3117 = vld [vmem:[%s4] sm:$0xf]
    %v3118 = vld [vmem:[%s4 + $0x4] sm:$0xf]
    %v3119 = vld [vmem:[%s4 + $0x8] sm:$0xf]
    %v3120 = vld [vmem:[%s4 + $0xc] sm:$0xf]
    %v3121 = vld [vmem:[%s4 + $0x10] sm:$0xf]
    %v3122 = vld [vmem:[%s4 + $0x14] sm:$0xf]
    %v3123 = vld [vmem:[%s4 + $0x18] sm:$0xf]
    %v3124 = vld [vmem:[%s4 + $0x1c] sm:$0xf]
    %v3125 = vld [vmem:[%s4 + $0x20] sm:$0xf]
    %v3126 = vld [vmem:[%s4 + $0x24] sm:$0xf]
    %v3127 = vld [vmem:[%s4 + $0x28] sm:$0xf]
    %v3128 = vld [vmem:[%s4 + $0x2c] sm:$0xf]
    %v3129 = vld [vmem:[%s4 + $0x30] sm:$0xf]
    %v3130 = vld [vmem:[%s4 + $0x34] sm:$0xf]
    %v3131 = vld [vmem:[%s4 + $0x38] sm:$0xf]
    %v3132 = vld [vmem:[%s4 + $0x3c] sm:$0xf]
    %v3133 = vld [vmem:[%s4 + $0x40] sm:$0xf]
    %v3134 = vld [vmem:[%s4 + $0x44] sm:$0xf]
    %v3135 = vld [vmem:[%s4 + $0x48] sm:$0xf]
    %v3136 = vld [vmem:[%s4 + $0x4c] sm:$0xf]
    %v3137 = vld [vmem:[%s4 + $0x50] sm:$0xf]
    %v3138 = vld [vmem:[%s4 + $0x54] sm:$0xf]
    %v3139 = vld [vmem:[%s4 + $0x58] sm:$0xf]
    %v3140 = vld [vmem:[%s4 + $0x5c] sm:$0xf]
    %v3141 = vld [vmem:[%s4 + $0x60] sm:$0xf]
    %v3142 = vld [vmem:[%s4 + $0x64] sm:$0xf]
    %v3143 = vld [vmem:[%s4 + $0x68] sm:$0xf]
    %v3144 = vld [vmem:[%s4 + $0x6c] sm:$0xf]
    %v3145 = vld [vmem:[%s4 + $0x70] sm:$0xf]
    %v3146 = vld [vmem:[%s4 + $0x74] sm:$0xf]
    %v3147 = vld [vmem:[%s4 + $0x78] sm:$0xf]
    %v3148 = vld [vmem:[%s4 + $0x7c] sm:$0xf]
    %v3149 = vld [vmem:[%s4 + $0x80] sm:$0xf]
    %v3150 = vld [vmem:[%s4 + $0x84] sm:$0xf]
    %v3151 = vld [vmem:[%s4 + $0x88] sm:$0xf]
    %v3152 = vld [vmem:[%s4 + $0x8c] sm:$0xf]
    %v3153 = vld [vmem:[%s4 + $0x90] sm:$0xf]
    %v3154 = vld [vmem:[%s4 + $0x94] sm:$0xf]
    %v3155 = vld [vmem:[%s4 + $0x98] sm:$0xf]
    %v3156 = vld [vmem:[%s4 + $0x9c] sm:$0xf]
    %v3157 = vld [vmem:[%s4 + $0xa0] sm:$0xf]
    %v3158 = vld [vmem:[%s4 + $0xa4] sm:$0xf]
    %v3159 = vld [vmem:[%s4 + $0xa8] sm:$0xf]
    %v3160 = vld [vmem:[%s4 + $0xac] sm:$0xf]
    %v3161 = vld [vmem:[%s4 + $0xb0] sm:$0xf]
    %v3162 = vld [vmem:[%s4 + $0xb4] sm:$0xf]
    %v3163 = vld [vmem:[%s4 + $0xb8] sm:$0xf]
    %v3164 = vld [vmem:[%s4 + $0xbc] sm:$0xf]
    %v3165 = vld [vmem:[%s4 + $0xc0] sm:$0xf]
    %v3166 = vld [vmem:[%s4 + $0xc4] sm:$0xf]
    %v3167 = vld [vmem:[%s4 + $0xc8] sm:$0xf]
    %v3168 = vld [vmem:[%s4 + $0xcc] sm:$0xf]
    %v3169 = vld [vmem:[%s4 + $0xd0] sm:$0xf]
    %v3170 = vld [vmem:[%s4 + $0xd4] sm:$0xf]
    %v3171 = vld [vmem:[%s4 + $0xd8] sm:$0xf]
    %v3172 = vld [vmem:[%s4 + $0xdc] sm:$0xf]
    %v3173 = vld [vmem:[%s4 + $0xe0] sm:$0xf]
    %v3174 = vld [vmem:[%s4 + $0xe4] sm:$0xf]
    %v3175 = vld [vmem:[%s4 + $0xe8] sm:$0xf]
    %v3176 = vld [vmem:[%s4 + $0xec] sm:$0xf]
    %v3177 = vld [vmem:[%s4 + $0xf0] sm:$0xf]
    %v3178 = vld [vmem:[%s4 + $0xf4] sm:$0xf]
    %v3179 = vld [vmem:[%s4 + $0xf8] sm:$0xf]
    %v3180 = vld [vmem:[%s4 + $0xfc] sm:$0xf]
    %v3181 = vld [vmem:[%s4 + $0x100] sm:$0xf]
    %v3182 = vld [vmem:[%s4 + $0x104] sm:$0xf]
    %v3183 = vld [vmem:[%s4 + $0x108] sm:$0xf]
    %v3184 = vld [vmem:[%s4 + $0x10c] sm:$0xf]
    %v3185 = vld [vmem:[%s4 + $0x110] sm:$0xf]
    %v3186 = vld [vmem:[%s4 + $0x114] sm:$0xf]
    %v3187 = vld [vmem:[%s4 + $0x118] sm:$0xf]
    %v3188 = vld [vmem:[%s4 + $0x11c] sm:$0xf]
    %v3189 = vld [vmem:[%s4 + $0x120] sm:$0xf]
    %v3190 = vld [vmem:[%s4 + $0x124] sm:$0xf]
    %v3191 = vld [vmem:[%s4 + $0x128] sm:$0xf]
    %v3192 = vld [vmem:[%s4 + $0x12c] sm:$0xf]
    %v3193 = vld [vmem:[%s4 + $0x130] sm:$0xf]
    %v3194 = vld [vmem:[%s4 + $0x134] sm:$0xf]
    %v3195 = vld [vmem:[%s4 + $0x138] sm:$0xf]
    %v3196 = vld [vmem:[%s4 + $0x13c] sm:$0xf]
    %v3197 = vld [vmem:[%s4 + $0x140] sm:$0xf]
    %v3198 = vld [vmem:[%s4 + $0x144] sm:$0xf]
    %v3199 = vld [vmem:[%s4 + $0x148] sm:$0xf]
    %v3200 = vld [vmem:[%s4 + $0x14c] sm:$0xf]
    %v3201 = vld [vmem:[%s4 + $0x150] sm:$0xf]
    %v3202 = vld [vmem:[%s4 + $0x154] sm:$0xf]
    %v3203 = vld [vmem:[%s4 + $0x158] sm:$0xf]
    %v3204 = vld [vmem:[%s4 + $0x15c] sm:$0xf]
    %v3205 = vld [vmem:[%s4 + $0x160] sm:$0xf]
    %v3206 = vld [vmem:[%s4 + $0x164] sm:$0xf]
    %v3207 = vld [vmem:[%s4 + $0x168] sm:$0xf]
    %v3208 = vld [vmem:[%s4 + $0x16c] sm:$0xf]
    %v3209 = vld [vmem:[%s4 + $0x170] sm:$0xf]
    %v3210 = vld [vmem:[%s4 + $0x174] sm:$0xf]
    %v3211 = vld [vmem:[%s4 + $0x178] sm:$0xf]
    %v3212 = vld [vmem:[%s4 + $0x17c] sm:$0xf]
    %v3213 = vld [vmem:[%s4 + $0x180] sm:$0xf]
    %v3214 = vld [vmem:[%s4 + $0x184] sm:$0xf]
    %v3215 = vld [vmem:[%s4 + $0x188] sm:$0xf]
    %v3216 = vld [vmem:[%s4 + $0x18c] sm:$0xf]
    %v3217 = vld [vmem:[%s4 + $0x190] sm:$0xf]
    %v3218 = vld [vmem:[%s4 + $0x194] sm:$0xf]
    %v3219 = vld [vmem:[%s4 + $0x198] sm:$0xf]
    %v3220 = vld [vmem:[%s4 + $0x19c] sm:$0xf]
    %v3221 = vld [vmem:[%s4 + $0x1a0] sm:$0xf]
    %v3222 = vld [vmem:[%s4 + $0x1a4] sm:$0xf]
    %v3223 = vld [vmem:[%s4 + $0x1a8] sm:$0xf]
    %v3224 = vld [vmem:[%s4 + $0x1ac] sm:$0xf]
    %v3225 = vld [vmem:[%s4 + $0x1b0] sm:$0xf]
    %v3226 = vld [vmem:[%s4 + $0x1b4] sm:$0xf]
    %v3227 = vld [vmem:[%s4 + $0x1b8] sm:$0xf]
    %v3228 = vld [vmem:[%s4 + $0x1bc] sm:$0xf]
    %v3229 = vld [vmem:[%s4 + $0x1c0] sm:$0xf]
    %v3230 = vld [vmem:[%s4 + $0x1c4] sm:$0xf]
    %v3231 = vld [vmem:[%s4 + $0x1c8] sm:$0xf]
    %v3232 = vld [vmem:[%s4 + $0x1cc] sm:$0xf]
    %v3233 = vld [vmem:[%s4 + $0x1d0] sm:$0xf]
    %v3234 = vld [vmem:[%s4 + $0x1d4] sm:$0xf]
    %v3235 = vld [vmem:[%s4 + $0x1d8] sm:$0xf]
    %v3236 = vld [vmem:[%s4 + $0x1dc] sm:$0xf]
    %v3237 = vld [vmem:[%s4 + $0x1e0] sm:$0xf]
    %v3238 = vld [vmem:[%s4 + $0x1e4] sm:$0xf]
    %v3239 = vld [vmem:[%s4 + $0x1e8] sm:$0xf]
    %v3240 = vld [vmem:[%s4 + $0x1ec] sm:$0xf]
    %v3241 = vld [vmem:[%s4 + $0x1f0] sm:$0xf]
    %v3242 = vld [vmem:[%s4 + $0x1f4] sm:$0xf]
    %v3243 = vld [vmem:[%s4 + $0x1f8] sm:$0xf]
    %v3244 = vld [vmem:[%s4 + $0x1fc] sm:$0xf]
    %v3249 = vunpack.c.l.b16 %v3113
    %v3250 = vunpack.c.h.b16 %v3113
    %v3251 = vunpack.c.l.b16 %v3114
    %v3252 = vunpack.c.h.b16 %v3114
    %v3253 = vunpack.c.l.b16 %v3115
    %v3254 = vunpack.c.h.b16 %v3115
    %v3255 = vunpack.c.l.b16 %v3116
    %v3256 = vunpack.c.h.b16 %v3116
    %v3257 = vpack.c.b16 %v3249, %v3249
    %v3258 = vpack.c.b16 %v3250, %v3250
    %v3259 = vpack.c.b16 %v3251, %v3251
    %v3260 = vpack.c.b16 %v3252, %v3252
    %v3261 = vpack.c.b16 %v3253, %v3253
    %v3262 = vpack.c.b16 %v3254, %v3254
    %v3263 = vpack.c.b16 %v3255, %v3255
    %v3264 = vpack.c.b16 %v3256, %v3256
    %v3401 = vunpack.c.l.b16 %v3117
    %v3402 = vunpack.c.l.b16 %v3118
    %v3403 = vunpack.c.l.b16 %v3119
    %v3404 = vunpack.c.l.b16 %v3120
    %v3405 = vunpack.c.l.b16 %v3121
    %v3406 = vunpack.c.l.b16 %v3122
    %v3407 = vunpack.c.l.b16 %v3123
    %v3408 = vunpack.c.l.b16 %v3124
    %v3409 = vunpack.c.l.b16 %v3125
    %v3410 = vunpack.c.l.b16 %v3126
    %v3411 = vunpack.c.l.b16 %v3127
    %v3412 = vunpack.c.l.b16 %v3128
    %v3413 = vunpack.c.l.b16 %v3129
    %v3414 = vunpack.c.l.b16 %v3130
    %v3415 = vunpack.c.l.b16 %v3131
    %v3416 = vunpack.c.l.b16 %v3132
    %v3417 = vunpack.c.l.b16 %v3133
    %v3418 = vunpack.c.l.b16 %v3134
    %v3419 = vunpack.c.l.b16 %v3135
    %v3420 = vunpack.c.l.b16 %v3136
    %v3421 = vunpack.c.l.b16 %v3137
    %v3422 = vunpack.c.l.b16 %v3138
    %v3423 = vunpack.c.l.b16 %v3139
    %v3424 = vunpack.c.l.b16 %v3140
    %v3425 = vunpack.c.l.b16 %v3141
    %v3426 = vunpack.c.l.b16 %v3142
    %v3427 = vunpack.c.l.b16 %v3143
    %v3428 = vunpack.c.l.b16 %v3144
    %v3429 = vunpack.c.l.b16 %v3145
    %v3430 = vunpack.c.l.b16 %v3146
    %v3431 = vunpack.c.l.b16 %v3147
    %v3432 = vunpack.c.l.b16 %v3148
    %v3433 = vunpack.c.l.b16 %v3149
    %v3434 = vunpack.c.l.b16 %v3150
    %v3435 = vunpack.c.l.b16 %v3151
    %v3436 = vunpack.c.l.b16 %v3152
    %v3437 = vunpack.c.l.b16 %v3153
    %v3438 = vunpack.c.l.b16 %v3154
    %v3439 = vunpack.c.l.b16 %v3155
    %v3440 = vunpack.c.l.b16 %v3156
    %v3441 = vunpack.c.l.b16 %v3157
    %v3442 = vunpack.c.l.b16 %v3158
    %v3443 = vunpack.c.l.b16 %v3159
    %v3444 = vunpack.c.l.b16 %v3160
    %v3445 = vunpack.c.l.b16 %v3161
    %v3446 = vunpack.c.l.b16 %v3162
    %v3447 = vunpack.c.l.b16 %v3163
    %v3448 = vunpack.c.l.b16 %v3164
    %v3449 = vunpack.c.l.b16 %v3165
    %v3450 = vunpack.c.l.b16 %v3166
    %v3451 = vunpack.c.l.b16 %v3167
    %v3452 = vunpack.c.l.b16 %v3168
    %v3453 = vunpack.c.l.b16 %v3169
    %v3454 = vunpack.c.l.b16 %v3170
    %v3455 = vunpack.c.l.b16 %v3171
    %v3456 = vunpack.c.l.b16 %v3172
    %v3457 = vunpack.c.l.b16 %v3173
    %v3458 = vunpack.c.l.b16 %v3174
    %v3459 = vunpack.c.l.b16 %v3175
    %v3460 = vunpack.c.l.b16 %v3176
    %v3461 = vunpack.c.l.b16 %v3177
    %v3462 = vunpack.c.l.b16 %v3178
    %v3463 = vunpack.c.l.b16 %v3179
    %v3464 = vunpack.c.l.b16 %v3180
    %v3465 = vunpack.c.l.b16 %v3181
    %v3466 = vunpack.c.l.b16 %v3182
    %v3467 = vunpack.c.l.b16 %v3183
    %v3468 = vunpack.c.l.b16 %v3184
    %v3469 = vunpack.c.l.b16 %v3185
    %v3470 = vunpack.c.l.b16 %v3186
    %v3471 = vunpack.c.l.b16 %v3187
    %v3472 = vunpack.c.l.b16 %v3188
    %v3473 = vunpack.c.l.b16 %v3189
    %v3474 = vunpack.c.l.b16 %v3190
    %v3475 = vunpack.c.l.b16 %v3191
    %v3476 = vunpack.c.l.b16 %v3192
    %v3477 = vunpack.c.l.b16 %v3193
    %v3478 = vunpack.c.l.b16 %v3194
    %v3479 = vunpack.c.l.b16 %v3195
    %v3480 = vunpack.c.l.b16 %v3196
    %v3481 = vunpack.c.l.b16 %v3197
    %v3482 = vunpack.c.l.b16 %v3198
    %v3483 = vunpack.c.l.b16 %v3199
    %v3484 = vunpack.c.l.b16 %v3200
    %v3485 = vunpack.c.l.b16 %v3201
    %v3486 = vunpack.c.l.b16 %v3202
    %v3487 = vunpack.c.l.b16 %v3203
    %v3488 = vunpack.c.l.b16 %v3204
    %v3489 = vunpack.c.l.b16 %v3205
    %v3490 = vunpack.c.l.b16 %v3206
    %v3491 = vunpack.c.l.b16 %v3207
    %v3492 = vunpack.c.l.b16 %v3208
    %v3493 = vunpack.c.l.b16 %v3209
    %v3494 = vunpack.c.l.b16 %v3210
    %v3495 = vunpack.c.l.b16 %v3211
    %v3496 = vunpack.c.l.b16 %v3212
    %v3497 = vunpack.c.l.b16 %v3213
    %v3498 = vunpack.c.l.b16 %v3214
    %v3499 = vunpack.c.l.b16 %v3215
    %v3500 = vunpack.c.l.b16 %v3216
    %v3501 = vunpack.c.l.b16 %v3217
    %v3502 = vunpack.c.l.b16 %v3218
    %v3503 = vunpack.c.l.b16 %v3219
    %v3504 = vunpack.c.l.b16 %v3220
    %v3505 = vunpack.c.l.b16 %v3221
    %v3506 = vunpack.c.l.b16 %v3222
    %v3507 = vunpack.c.l.b16 %v3223
    %v3508 = vunpack.c.l.b16 %v3224
    %v3509 = vunpack.c.l.b16 %v3225
    %v3510 = vunpack.c.l.b16 %v3226
    %v3511 = vunpack.c.l.b16 %v3227
    %v3512 = vunpack.c.l.b16 %v3228
    %v3513 = vunpack.c.l.b16 %v3229
    %v3514 = vunpack.c.l.b16 %v3230
    %v3515 = vunpack.c.l.b16 %v3231
    %v3516 = vunpack.c.l.b16 %v3232
    %v3517 = vunpack.c.l.b16 %v3233
    %v3518 = vunpack.c.l.b16 %v3234
    %v3519 = vunpack.c.l.b16 %v3235
    %v3520 = vunpack.c.l.b16 %v3236
    %v3521 = vunpack.c.l.b16 %v3237
    %v3522 = vunpack.c.l.b16 %v3238
    %v3523 = vunpack.c.l.b16 %v3239
    %v3524 = vunpack.c.l.b16 %v3240
    %v3525 = vunpack.c.l.b16 %v3241
    %v3526 = vunpack.c.l.b16 %v3242
    %v3527 = vunpack.c.l.b16 %v3243
    %v3528 = vunpack.c.l.b16 %v3244
    %v3529 = vpack.c.b16 %v3402, %v3401
    %v3530 = vpack.c.b16 %v3404, %v3403
    %v3531 = vpack.c.b16 %v3406, %v3405
    %v3532 = vpack.c.b16 %v3408, %v3407
    %v3533 = vpack.c.b16 %v3410, %v3409
    %v3534 = vpack.c.b16 %v3412, %v3411
    %v3535 = vpack.c.b16 %v3414, %v3413
    %v3536 = vpack.c.b16 %v3416, %v3415
    %v3537 = vpack.c.b16 %v3418, %v3417
    %v3538 = vpack.c.b16 %v3420, %v3419
    %v3539 = vpack.c.b16 %v3422, %v3421
    %v3540 = vpack.c.b16 %v3424, %v3423
    %v3541 = vpack.c.b16 %v3426, %v3425
    %v3542 = vpack.c.b16 %v3428, %v3427
    %v3543 = vpack.c.b16 %v3430, %v3429
    %v3544 = vpack.c.b16 %v3432, %v3431
    %v3545 = vpack.c.b16 %v3434, %v3433
    %v3546 = vpack.c.b16 %v3436, %v3435
    %v3547 = vpack.c.b16 %v3438, %v3437
    %v3548 = vpack.c.b16 %v3440, %v3439
    %v3549 = vpack.c.b16 %v3442, %v3441
    %v3550 = vpack.c.b16 %v3444, %v3443
    %v3551 = vpack.c.b16 %v3446, %v3445
    %v3552 = vpack.c.b16 %v3448, %v3447
    %v3553 = vpack.c.b16 %v3450, %v3449
    %v3554 = vpack.c.b16 %v3452, %v3451
    %v3555 = vpack.c.b16 %v3454, %v3453
    %v3556 = vpack.c.b16 %v3456, %v3455
    %v3557 = vpack.c.b16 %v3458, %v3457
    %v3558 = vpack.c.b16 %v3460, %v3459
    %v3559 = vpack.c.b16 %v3462, %v3461
    %v3560 = vpack.c.b16 %v3464, %v3463
    %v3561 = vpack.c.b16 %v3466, %v3465
    %v3562 = vpack.c.b16 %v3468, %v3467
    %v3563 = vpack.c.b16 %v3470, %v3469
    %v3564 = vpack.c.b16 %v3472, %v3471
    %v3565 = vpack.c.b16 %v3474, %v3473
    %v3566 = vpack.c.b16 %v3476, %v3475
    %v3567 = vpack.c.b16 %v3478, %v3477
    %v3568 = vpack.c.b16 %v3480, %v3479
    %v3569 = vpack.c.b16 %v3482, %v3481
    %v3570 = vpack.c.b16 %v3484, %v3483
    %v3571 = vpack.c.b16 %v3486, %v3485
    %v3572 = vpack.c.b16 %v3488, %v3487
    %v3573 = vpack.c.b16 %v3490, %v3489
    %v3574 = vpack.c.b16 %v3492, %v3491
    %v3575 = vpack.c.b16 %v3494, %v3493
    %v3576 = vpack.c.b16 %v3496, %v3495
    %v3577 = vpack.c.b16 %v3498, %v3497
    %v3578 = vpack.c.b16 %v3500, %v3499
    %v3579 = vpack.c.b16 %v3502, %v3501
    %v3580 = vpack.c.b16 %v3504, %v3503
    %v3581 = vpack.c.b16 %v3506, %v3505
    %v3582 = vpack.c.b16 %v3508, %v3507
    %v3583 = vpack.c.b16 %v3510, %v3509
    %v3584 = vpack.c.b16 %v3512, %v3511
    %v3585 = vpack.c.b16 %v3514, %v3513
    %v3586 = vpack.c.b16 %v3516, %v3515
    %v3587 = vpack.c.b16 %v3518, %v3517
    %v3588 = vpack.c.b16 %v3520, %v3519
    %v3589 = vpack.c.b16 %v3522, %v3521
    %v3590 = vpack.c.b16 %v3524, %v3523
    %v3591 = vpack.c.b16 %v3526, %v3525
    %v3592 = vpack.c.b16 %v3528, %v3527
    %3657 = vmatprep.subr.bf16.mxu0 0
    %3658 = vmatpush1.bf16.msra.mxu0 %v3536
    %3659 = vmatprep.subr.bf16.mxu0 0
    %3660 = vmatpush1.bf16.msra.mxu0 %v3535
    %3661 = vmatprep.subr.bf16.mxu0 0
    %3662 = vmatpush1.bf16.msra.mxu0 %v3534
    %3663 = vmatprep.subr.bf16.mxu0 0
    %3664 = vmatpush1.bf16.msra.mxu0 %v3533
    %3665 = vmatprep.subr.bf16.mxu0 0
    %3666 = vmatpush1.bf16.msra.mxu0 %v3532
    %3667 = vmatprep.subr.bf16.mxu0 0
    %3668 = vmatpush1.bf16.msra.mxu0 %v3531
    %3669 = vmatprep.subr.bf16.mxu0 0
    %3670 = vmatpush1.bf16.msra.mxu0 %v3530
    %3671 = vmatprep.subr.bf16.mxu0 0
    %3672 = vmatpush1.bf16.msra.mxu0 %v3529
    %3673 = vmatprep.subr.bf16.mxu0 0
    %3674 = vmatpush2.bf16.msra.mxu0 %v3544
    %3675 = vmatprep.subr.bf16.mxu0 0
    %3676 = vmatpush2.bf16.msra.mxu0 %v3543
    %3677 = vmatprep.subr.bf16.mxu0 0
    %3678 = vmatpush2.bf16.msra.mxu0 %v3542
    %3679 = vmatprep.subr.bf16.mxu0 0
    %3680 = vmatpush2.bf16.msra.mxu0 %v3541
    %3681 = vmatprep.subr.bf16.mxu0 0
    %3682 = vmatpush2.bf16.msra.mxu0 %v3540
    %3683 = vmatprep.subr.bf16.mxu0 0
    %3684 = vmatpush2.bf16.msra.mxu0 %v3539
    %3685 = vmatprep.subr.bf16.mxu0 0
    %3686 = vmatpush2.bf16.msra.mxu0 %v3538
    %3687 = vmatprep.subr.bf16.mxu0 0
    %3688 = vmatpush2.bf16.msra.mxu0 %v3537
    %3689 = vmatprep.mubr.bf16.mxu0 %v3258
    %3690 = vmatmul.mubr.bf16.gmra.mxu0 %v3257
    %v3691 = vpop.f32.mrf.mxu0
    %v3692 = vadd.f32 0.0, %v3691
    %v3693 = vpop.f32.mrf.mxu0
    %v3694 = vpop.f32.mrf.mxu0
    %v3695 = vpop.f32.mrf.mxu0
    %3696 = vdwg.mxu0
    %3697 = vmatprep.subr.bf16.mxu0 0
    %3698 = vmatpush1.bf16.msra.mxu0 %v3552
    %3699 = vmatprep.subr.bf16.mxu0 0
    %3700 = vmatpush1.bf16.msra.mxu0 %v3551
    %3701 = vmatprep.subr.bf16.mxu0 0
    %3702 = vmatpush1.bf16.msra.mxu0 %v3550
    %3703 = vmatprep.subr.bf16.mxu0 0
    %3704 = vmatpush1.bf16.msra.mxu0 %v3549
    %3705 = vmatprep.subr.bf16.mxu0 0
    %3706 = vmatpush1.bf16.msra.mxu0 %v3548
    %3707 = vmatprep.subr.bf16.mxu0 0
    %3708 = vmatpush1.bf16.msra.mxu0 %v3547
    %3709 = vmatprep.subr.bf16.mxu0 0
    %3710 = vmatpush1.bf16.msra.mxu0 %v3546
    %3711 = vmatprep.subr.bf16.mxu0 0
    %3712 = vmatpush1.bf16.msra.mxu0 %v3545
    %3713 = vmatprep.subr.bf16.mxu0 0
    %3714 = vmatpush2.bf16.msra.mxu0 %v3560
    %3715 = vmatprep.subr.bf16.mxu0 0
    %3716 = vmatpush2.bf16.msra.mxu0 %v3559
    %3717 = vmatprep.subr.bf16.mxu0 0
    %3718 = vmatpush2.bf16.msra.mxu0 %v3558
    %3719 = vmatprep.subr.bf16.mxu0 0
    %3720 = vmatpush2.bf16.msra.mxu0 %v3557
    %3721 = vmatprep.subr.bf16.mxu0 0
    %3722 = vmatpush2.bf16.msra.mxu0 %v3556
    %3723 = vmatprep.subr.bf16.mxu0 0
    %3724 = vmatpush2.bf16.msra.mxu0 %v3555
    %3725 = vmatprep.subr.bf16.mxu0 0
    %3726 = vmatpush2.bf16.msra.mxu0 %v3554
    %3727 = vmatprep.subr.bf16.mxu0 0
    %3728 = vmatpush2.bf16.msra.mxu0 %v3553
    %3729 = vmatprep.mubr.bf16.mxu0 %v3260
    %3730 = vmatmul.mubr.bf16.gmra.mxu0 %v3259
    %v3731 = vpop.f32.mrf.mxu0
    %v3732 = vadd.f32 %v3692, %v3731
    %v3733 = vpop.f32.mrf.mxu0
    %v3734 = vpop.f32.mrf.mxu0
    %v3735 = vpop.f32.mrf.mxu0
    %3736 = vdwg.mxu0
    %3737 = vmatprep.subr.bf16.mxu0 0
    %3738 = vmatpush1.bf16.msra.mxu0 %v3568
    %3739 = vmatprep.subr.bf16.mxu0 0
    %3740 = vmatpush1.bf16.msra.mxu0 %v3567
    %3741 = vmatprep.subr.bf16.mxu0 0
    %3742 = vmatpush1.bf16.msra.mxu0 %v3566
    %3743 = vmatprep.subr.bf16.mxu0 0
    %3744 = vmatpush1.bf16.msra.mxu0 %v3565
    %3745 = vmatprep.subr.bf16.mxu0 0
    %3746 = vmatpush1.bf16.msra.mxu0 %v3564
    %3747 = vmatprep.subr.bf16.mxu0 0
    %3748 = vmatpush1.bf16.msra.mxu0 %v3563
    %3749 = vmatprep.subr.bf16.mxu0 0
    %3750 = vmatpush1.bf16.msra.mxu0 %v3562
    %3751 = vmatprep.subr.bf16.mxu0 0
    %3752 = vmatpush1.bf16.msra.mxu0 %v3561
    %3753 = vmatprep.subr.bf16.mxu0 0
    %3754 = vmatpush2.bf16.msra.mxu0 %v3576
    %3755 = vmatprep.subr.bf16.mxu0 0
    %3756 = vmatpush2.bf16.msra.mxu0 %v3575
    %3757 = vmatprep.subr.bf16.mxu0 0
    %3758 = vmatpush2.bf16.msra.mxu0 %v3574
    %3759 = vmatprep.subr.bf16.mxu0 0
    %3760 = vmatpush2.bf16.msra.mxu0 %v3573
    %3761 = vmatprep.subr.bf16.mxu0 0
    %3762 = vmatpush2.bf16.msra.mxu0 %v3572
    %3763 = vmatprep.subr.bf16.mxu0 0
    %3764 = vmatpush2.bf16.msra.mxu0 %v3571
    %3765 = vmatprep.subr.bf16.mxu0 0
    %3766 = vmatpush2.bf16.msra.mxu0 %v3570
    %3767 = vmatprep.subr.bf16.mxu0 0
    %3768 = vmatpush2.bf16.msra.mxu0 %v3569
    %3769 = vmatprep.mubr.bf16.mxu0 %v3262
    %3770 = vmatmul.mubr.bf16.gmra.mxu0 %v3261
    %v3771 = vpop.f32.mrf.mxu0
    %v3772 = vadd.f32 %v3732, %v3771
    %v3773 = vpop.f32.mrf.mxu0
    %v3774 = vpop.f32.mrf.mxu0
    %v3775 = vpop.f32.mrf.mxu0
    %3776 = vdwg.mxu0
    %3777 = vmatprep.subr.bf16.mxu0 0
    %3778 = vmatpush1.bf16.msra.mxu0 %v3584
    %3779 = vmatprep.subr.bf16.mxu0 0
    %3780 = vmatpush1.bf16.msra.mxu0 %v3583
    %3781 = vmatprep.subr.bf16.mxu0 0
    %3782 = vmatpush1.bf16.msra.mxu0 %v3582
    %3783 = vmatprep.subr.bf16.mxu0 0
    %3784 = vmatpush1.bf16.msra.mxu0 %v3581
    %3785 = vmatprep.subr.bf16.mxu0 0
    %3786 = vmatpush1.bf16.msra.mxu0 %v3580
    %3787 = vmatprep.subr.bf16.mxu0 0
    %3788 = vmatpush1.bf16.msra.mxu0 %v3579
    %3789 = vmatprep.subr.bf16.mxu0 0
    %3790 = vmatpush1.bf16.msra.mxu0 %v3578
    %3791 = vmatprep.subr.bf16.mxu0 0
    %3792 = vmatpush1.bf16.msra.mxu0 %v3577
    %3793 = vmatprep.subr.bf16.mxu0 0
    %3794 = vmatpush2.bf16.msra.mxu0 %v3592
    %3795 = vmatprep.subr.bf16.mxu0 0
    %3796 = vmatpush2.bf16.msra.mxu0 %v3591
    %3797 = vmatprep.subr.bf16.mxu0 0
    %3798 = vmatpush2.bf16.msra.mxu0 %v3590
    %3799 = vmatprep.subr.bf16.mxu0 0
    %3800 = vmatpush2.bf16.msra.mxu0 %v3589
    %3801 = vmatprep.subr.bf16.mxu0 0
    %3802 = vmatpush2.bf16.msra.mxu0 %v3588
    %3803 = vmatprep.subr.bf16.mxu0 0
    %3804 = vmatpush2.bf16.msra.mxu0 %v3587
    %3805 = vmatprep.subr.bf16.mxu0 0
    %3806 = vmatpush2.bf16.msra.mxu0 %v3586
    %3807 = vmatprep.subr.bf16.mxu0 0
    %3808 = vmatpush2.bf16.msra.mxu0 %v3585
    %3809 = vmatprep.mubr.bf16.mxu0 %v3264
    %3810 = vmatmul.mubr.bf16.gmra.mxu0 %v3263
    %v3811 = vpop.f32.mrf.mxu0
    %v3812 = vadd.f32 %v3772, %v3811
    %v3813 = vpop.f32.mrf.mxu0
    %v3814 = vpop.f32.mrf.mxu0
    %v3815 = vpop.f32.mrf.mxu0
    %3816 = vdwg.mxu0
    %v3817 = vmax.f32 %v3812, 0.0
    %3818 = vst [vmem:[#allocation5] sm:$0xff] %v3817
    %v3819 = vpack.c.bf16 %v3817, %v3111
    %v3820 = vld [vmem:[%s5] sm:$0xf]
    %v3821 = vld [vmem:[%s5 + $0x4] sm:$0xf]
    %v3822 = vld [vmem:[%s5 + $0x8] sm:$0xf]
    %v3823 = vld [vmem:[%s5 + $0xc] sm:$0xf]
    %v3824 = vld [vmem:[%s5 + $0x10] sm:$0xf]
    %v3825 = vld [vmem:[%s5 + $0x14] sm:$0xf]
    %v3826 = vld [vmem:[%s5 + $0x18] sm:$0xf]
    %v3827 = vld [vmem:[%s5 + $0x1c] sm:$0xf]
    %v3828 = vld [vmem:[%s5 + $0x20] sm:$0xf]
    %v3829 = vld [vmem:[%s5 + $0x24] sm:$0xf]
    %v3830 = vld [vmem:[%s5 + $0x28] sm:$0xf]
    %v3831 = vld [vmem:[%s5 + $0x2c] sm:$0xf]
    %v3832 = vld [vmem:[%s5 + $0x30] sm:$0xf]
    %v3833 = vld [vmem:[%s5 + $0x34] sm:$0xf]
    %v3834 = vld [vmem:[%s5 + $0x38] sm:$0xf]
    %v3835 = vld [vmem:[%s5 + $0x3c] sm:$0xf]
    %v3852 = vunpack.c.l.b16 %v3820
    %v3853 = vunpack.c.l.b16 %v3821
    %v3854 = vunpack.c.l.b16 %v3822
    %v3855 = vunpack.c.l.b16 %v3823
    %v3856 = vunpack.c.l.b16 %v3824
    %v3857 = vunpack.c.l.b16 %v3825
    %v3858 = vunpack.c.l.b16 %v3826
    %v3859 = vunpack.c.l.b16 %v3827
    %v3860 = vunpack.c.l.b16 %v3828
    %v3861 = vunpack.c.l.b16 %v3829
    %v3862 = vunpack.c.l.b16 %v3830
    %v3863 = vunpack.c.l.b16 %v3831
    %v3864 = vunpack.c.l.b16 %v3832
    %v3865 = vunpack.c.l.b16 %v3833
    %v3866 = vunpack.c.l.b16 %v3834
    %v3867 = vunpack.c.l.b16 %v3835
    %v3868 = vpack.c.b16 %v3853, %v3852
    %v3869 = vpack.c.b16 %v3855, %v3854
    %v3870 = vpack.c.b16 %v3857, %v3856
    %v3871 = vpack.c.b16 %v3859, %v3858
    %v3872 = vpack.c.b16 %v3861, %v3860
    %v3873 = vpack.c.b16 %v3863, %v3862
    %v3874 = vpack.c.b16 %v3865, %v3864
    %v3875 = vpack.c.b16 %v3867, %v3866
    %3884 = vmatprep.subr.bf16.mxu0 0
    %3885 = vmatpush1.bf16.msra.mxu0 %v3875
    %3886 = vmatprep.subr.bf16.mxu0 0
    %3887 = vmatpush1.bf16.msra.mxu0 %v3874
    %3888 = vmatprep.subr.bf16.mxu0 0
    %3889 = vmatpush1.bf16.msra.mxu0 %v3873
    %3890 = vmatprep.subr.bf16.mxu0 0
    %3891 = vmatpush1.bf16.msra.mxu0 %v3872
    %3892 = vmatprep.subr.bf16.mxu0 0
    %3893 = vmatpush1.bf16.msra.mxu0 %v3871
    %3894 = vmatprep.subr.bf16.mxu0 0
    %3895 = vmatpush1.bf16.msra.mxu0 %v3870
    %3896 = vmatprep.subr.bf16.mxu0 0
    %3897 = vmatpush1.bf16.msra.mxu0 %v3869
    %3898 = vmatprep.subr.bf16.mxu0 0
    %3899 = vmatpush1.bf16.msra.mxu0 %v3868
    %3900 = vmatprep.subr.bf16.mxu0 0
    %3901 = vmatpush2.bf16.msra.mxu0 0
    %3902 = vmatprep.subr.bf16.mxu0 0
    %3903 = vmatpush2.bf16.msra.mxu0 0
    %3904 = vmatprep.subr.bf16.mxu0 0
    %3905 = vmatpush2.bf16.msra.mxu0 0
    %3906 = vmatprep.subr.bf16.mxu0 0
    %3907 = vmatpush2.bf16.msra.mxu0 0
    %3908 = vmatprep.subr.bf16.mxu0 0
    %3909 = vmatpush2.bf16.msra.mxu0 0
    %3910 = vmatprep.subr.bf16.mxu0 0
    %3911 = vmatpush2.bf16.msra.mxu0 0
    %3912 = vmatprep.subr.bf16.mxu0 0
    %3913 = vmatpush2.bf16.msra.mxu0 0
    %3914 = vmatprep.subr.bf16.mxu0 0
    %3915 = vmatpush2.bf16.msra.mxu0 0
    %3916 = vmatprep.mubr.bf16.mxu0 0
    %3917 = vmatmul.mubr.bf16.gmra.mxu0 %v3819
    %v3918 = vpop.f32.mrf.mxu0
    %v3919 = vadd.f32 0.0, %v3918
    %v3920 = vpop.f32.mrf.mxu0
    %v3921 = vpop.f32.mrf.mxu0
    %v3922 = vadd.f32 0.0, %v3921
    %v3923 = vpop.f32.mrf.mxu0
    %3924 = vdwg.mxu0
    %v3925 = vld [vmem:[%s6] sm:$0x1]
    %v3927 = vlaneseq
    %v3928 = vshrl.u32 %v3927, 7
    %v3929 = vsub.s32 0, %v3928
    %v3930 = vrot.slane %v3925, %v3929
    %3931 = vrot.lane.b32.xlu0 %v3930, 24
    %v3932 = vpop.permute.xlu0 %3931
    %v3934 = vadd.f32 %v3919, %v3932
    %vm3935 = vcmask 15360
    %v3936 = vsel %vm3935, %v3919, -inf
    %3937 = vmax.xlane.f32.xlu0 %v3936
    %v3938 = vpop.xlane.xlu0 %3937
    %vm3939 = vcmask 97344
    %v3940 = vsel %vm3939, %v3919, -inf
    %3941 = vmax.xlane.f32.xlu0 %v3940
    %v3942 = vpop.xlane.xlu0 %3941
    %vm3943 = vcmask 31760
    %v3944 = vsel %vm3943, %v3919, -inf
    %3945 = vmax.xlane.f32.xlu0 %v3944
    %v3946 = vpop.xlane.xlu0 %3945
    %vm3947 = vcmask 130144
    %v3948 = vsel %vm3947, %v3919, -inf
    %3949 = vmax.xlane.f32.xlu0 %v3948
    %v3950 = vpop.xlane.xlu0 %3949
    %vm3951 = vcmask 48160
    %v3952 = vsel %vm3951, %v3919, -inf
    %3953 = vmax.xlane.f32.xlu0 %v3952
    %v3954 = vpop.xlane.xlu0 %3953
    %vm3955 = vcmask 162944
    %v3956 = vsel %vm3955, %v3919, -inf
    %3957 = vmax.xlane.f32.xlu0 %v3956
    %v3958 = vpop.xlane.xlu0 %3957
    %vm3959 = vcmask 64560
    %v3960 = vsel %vm3959, %v3919, -inf
    %3961 = vmax.xlane.f32.xlu0 %v3960
    %v3962 = vpop.xlane.xlu0 %3961
    %vm3963 = vcmask 195744
    %v3964 = vsel %vm3963, %v3919, -inf
    %3965 = vmax.xlane.f32.xlu0 %v3964
    %v3966 = vpop.xlane.xlu0 %3965
    %vm3967 = vcmask 7168
    %v3968 = vsel %vm3967, %v3938, %v3946
    %v3969 = vsel %vm3935, %v3968, %v3954
    %vm3970 = vcmask 23552
    %v3971 = vsel %vm3970, %v3969, %v3962
    %vm3972 = vcmask 31744
    %v3973 = vsel %vm3972, %v3938, %v3946
    %vm3974 = vcmask 64512
    %v3975 = vsel %vm3974, %v3973, %v3954
    %vm3976 = vcmask 97280
    %v3977 = vsel %vm3976, %v3975, %v3962
    %v3978 = vsel %vm3972, %v3942, %v3950
    %v3979 = vsel %vm3974, %v3978, %v3958
    %v3980 = vsel %vm3976, %v3979, %v3966
    %v3981 = vmul.f32 %v3977, 0.2
    %vm3982 = vcmask 130048
    %v3983 = vsel %vm3982, %v3981, -inf
    %3984 = vmax.xlane.f32.xlu0 %v3983
    %v3985 = vpop.xlane.xlu0 %3984
    %v3986 = vsub.f32 %v3981, %v3985
    %v3987 = vmul.f32 %v3986, 1.442695
    %v3988 = vpow.pop %v3987
    %v3989 = vsel %vm3982, %v3988, 0.0
    %3990 = vadd.xlane.f32.xlu0 %v3989
    %v3991 = vpop.xlane.xlu0 %3990
    %v3992 = vrcp.pop %v3991
    %v3993 = vmul.f32 %v3988, %v3992
    %v3994 = vmul.f32 %v3993, 4.0
    %v3995 = vmul.f32 %v3980, 0.2
    %v3996 = vsel %vm3982, %v3995, -inf
    %3997 = vmax.xlane.f32.xlu0 %v3996
    %v3998 = vpop.xlane.xlu0 %3997
    %v3999 = vsub.f32 %v3995, %v3998
    %v4000 = vmul.f32 %v3999, 1.442695
    %v4001 = vpow.pop %v4000
    %v4002 = vsel %vm3982, %v4001, 0.0
    %4003 = vadd.xlane.f32.xlu0 %v4002
    %v4004 = vpop.xlane.xlu0 %4003
    %v4005 = vrcp.pop %v4004
    %v4006 = vmul.f32 %v4001, %v4005
    %v4007 = vmul.f32 %v4006, 4.0
    %4009 = vrot.lane.b32.xlu0 %v3994, 40
    %v4010 = vpop.permute.xlu0 %4009
    %v4012 = vmul.f32 %v3922, %v4010
    %4014 = vrot.lane.b32.xlu0 %v4007, 40
    %v4015 = vpop.permute.xlu0 %4014
    %v4017 = vmul.f32 %v3922, %v4015
    %s4018 = sld [smem:[#allocation2]]
    %v4019 = vstv %s4018
    %v4020 = vmul.f32 %v4019, %v4012
    %s4021 = ssub.f32 1.0, %s4018
    %v4022 = vstv %s4021
    %v4023 = vmul.f32 %v4022, %v4017
    %v4024 = vadd.f32 %v4020, %v4023
    %4026 = vrot.lane.b32.xlu0 %v3971, 8
    %v4027 = vpop.permute.xlu0 %4026
    %4030 = vrot.lane.b32.xlu0 %v3919, 4
    %v4031 = vpop.permute.xlu0 %4030
    %4034 = vrot.lane.b32.xlu0 %v3934, 4
    %v4035 = vpop.permute.xlu0 %4034
    %4038 = vrot.lane.b32.xlu0 %v3922, 4
    %v4039 = vpop.permute.xlu0 %4038
    %4042 = vrot.lane.b32.xlu0 %v4012, 20
    %v4043 = vpop.permute.xlu0 %4042
    %4046 = vrot.lane.b32.xlu0 %v4017, 36
    %v4047 = vpop.permute.xlu0 %4046
    %4050 = vrot.lane.b32.xlu0 %v4024, 52
    %v4051 = vpop.permute.xlu0 %4050
    %v4053 = vsel %vm3974, %v3919, %v4027
    %v4054 = vsel %vm3976, %v4053, %v4031
    %vm4055 = vcmask 228352
    %v4056 = vsel %vm4055, %v4054, %v4035
    %vm4057 = vcmask 359424
    %v4058 = vsel %vm4057, %v4056, %v4039
    %vm4059 = vcmask 490496
    %v4060 = vsel %vm4059, %v4058, %v4043
    %vm4061 = vcmask 621568
    %v4062 = vsel %vm4061, %v4060, %v4047
    %vm4063 = vcmask 752640
    %v4064 = vsel %vm4063, %v4062, %v4051
    %vm4065 = vcmask 883712
    %v4066 = vsel %vm4065, %v4064, 0.0
    %4067 = vst [vmem:[%s8] sm:$0xff] %v4066
    // Predicated region
    $region34: #{model_forward.1} parent=1 // pred_check
      _
    $region35: #{model_forward.1} parent=1 // pred_check_branch
      %4069 = sbr.rel (0) target = $region37
    $region36: #{model_forward.1} parent=1 // pred_region
      _
    $region37: #{model_forward.1} parent=1 // pred_fallthru
      _
    // Predicated region
    $region38: #{model_forward.1} parent=1 // pred_check
      _
    $region39: #{model_forward.1} parent=1 // pred_check_branch
      %4071 = sbr.rel (0) target = $region41
    $region40: #{model_forward.1} parent=1 // pred_region
      %s4073 = ssub.s32 128, 128
      %4074 = vsyncadd [#allocation4], %s4073
      %s4076 = sshll.u32 [#allocation3], 4
      %s4077 = int_to_ptr.vmem [resolvable:$true] %s4076
      %4079 = dma.vmem_to_hbm [thread:$0]  %s4077, 128, %s9, [#allocation4]
    $region41: #{model_forward.1} parent=1 // pred_fallthru
      _
    // Predicated region
    $region42: #{model_forward.1} parent=1 // pred_check
      _
    $region43: #{model_forward.1} parent=1 // pred_check_branch
      %4081 = sbr.rel (0) target = $region45
    $region44: #{model_forward.1} parent=1 // pred_region
      %s4083 = ssub.s32 128, 128
      %4084 = vsyncadd [#allocation6], %s4083
      %s4086 = sshll.u32 [#allocation5], 4
      %s4087 = int_to_ptr.vmem [resolvable:$true] %s4086
      %4089 = dma.vmem_to_hbm [thread:$0]  %s4087, 128, %s10, [#allocation6]
    $region45: #{model_forward.1} parent=1 // pred_fallthru
      _
    // Predicated region
    $region46: #{model_forward.1} parent=1 // pred_check
      _
    $region47: #{model_forward.1} parent=1 // pred_check_branch
      %4091 = sbr.rel (0) target = $region49
    $region48: #{model_forward.1} parent=1 // pred_region
      _
    $region49: #{model_forward.1} parent=1 // pred_fallthru
      _
    // Predicated region
    $region50: #{model_forward.1} parent=1 // pred_check
      _
    $region51: #{model_forward.1} parent=1 // pred_check_branch
      %4093 = sbr.rel (0) target = $region53
    $region52: #{model_forward.1} parent=1 // pred_region
      %4094 = dma.done [#allocation4], 128
    $region53: #{model_forward.1} parent=1 // pred_fallthru
      _
    // Predicated region
    $region54: #{model_forward.1} parent=1 // pred_check
      _
    $region55: #{model_forward.1} parent=1 // pred_check_branch
      %4096 = sbr.rel (0) target = $region57
    $region56: #{model_forward.1} parent=1 // pred_region
      %4097 = dma.done [#allocation6], 128
    $region57: #{model_forward.1} parent=1 // pred_fallthru
      _
    %4098 = vsyncpa [#allocation4], 1
    %4099 = vsyncpa [#allocation6], 1

</llo_original>
